<compile_context>
chip_gen: v7x
topology: tpu7x:2x2x1
jax: 0.10.0
libtpu: 0.0.40
codegen_flags: <defaults>
</compile_context>

<pallas_src>
import functools
import numpy as np
import jax
import jax.numpy as jnp
from jax import lax
from jax.experimental import pallas as pl
from jax.experimental.pallas import tpu as pltpu


def encoder_layer_kernel(x_ref, rel_ref,
                         wqkv_ref, bqkv_ref, wo_ref, bo_ref,
                         wg_ref, bg_ref, w1_ref, b1_ref, w2_ref, b2_ref,
                         g1_ref, be1_ref, g2_ref, be2_ref,
                         o_ref,
                         q_scr, k_scr, v_scr, ctx_scr,
                         *, num_heads, head_dim, e_real, eps, bt, seq):
    H, Dh, E = num_heads, head_dim, e_real
    rows = bt * seq
    Ep = x_ref.shape[-1]                      # lane-padded embedding dim
    h_idx = pl.program_id(1)                  # head axis ("arbitrary", innermost)

    # ---- head step 0: one fused QKV projection for all heads -----------------
    @pl.when(h_idx == 0)
    def _():
        x2d = x_ref[...].reshape(rows, Ep).astype(jnp.bfloat16)
        qkv = jnp.dot(x2d, wqkv_ref[...],
                      preferred_element_type=jnp.float32) + bqkv_ref[...]   # (rows, 3E)
        qkv = qkv.astype(jnp.bfloat16)
        for hh in range(H):                   # static lane slices only
            q_scr[hh] = qkv[:, hh * Dh:(hh + 1) * Dh]
            k_scr[hh] = qkv[:, E + hh * Dh:E + (hh + 1) * Dh]
            v_scr[hh] = qkv[:, 2 * E + hh * Dh:2 * E + (hh + 1) * Dh]

    # ---- per-head attention; rel streamed one head slab per grid step --------
    q_h = q_scr[h_idx].reshape(bt, seq, Dh)
    k_h = k_scr[h_idx].reshape(bt, seq, Dh)
    v_h = v_scr[h_idx].reshape(bt, seq, Dh)
    scores = jnp.einsum('bqd,bkd->bqk', q_h, k_h,
                        preferred_element_type=jnp.float32)      # (bt, S, S)
    scores = scores + rel_ref[0].astype(jnp.float32)             # bias_factor pre-folded
    m = jnp.max(scores, axis=-1, keepdims=True)
    p = jnp.exp(scores - m)
    p = p * pl.reciprocal(jnp.sum(p, axis=-1, keepdims=True), approx=True)
    ctx = jnp.einsum('bqk,bkd->bqd', p.astype(jnp.bfloat16), v_h,
                     preferred_element_type=jnp.float32)         # (bt, S, Dh)
    ctx_scr[h_idx] = ctx.reshape(rows, Dh).astype(jnp.bfloat16)

    # ---- last head: out-proj + LN1 + soft-mask + FFN + LN2, single write -----
    @pl.when(h_idx == num_heads - 1)
    def _():
        ctx_full = jnp.concatenate([ctx_scr[hh] for hh in range(H)], axis=-1)  # (rows, E)
        attn = jnp.dot(ctx_full, wo_ref[...],
                       preferred_element_type=jnp.float32) + bo_ref[...]       # (rows, Ep)
        x2d = x_ref[...].reshape(rows, Ep)

        lane = lax.broadcasted_iota(jnp.int32, (rows, Ep), 1)
        valid = lane < E                      # mask padded embedding columns
        inv_e = jnp.float32(1.0 / E)

        def layer_norm(y, g, b):              # stats over the REAL E columns
            mu = jnp.sum(y, axis=-1, keepdims=True) * inv_e
            d = jnp.where(valid, y - mu, 0.0)
            var = jnp.sum(d * d, axis=-1, keepdims=True) * inv_e
            return d * lax.rsqrt(var + eps) * g + b

        h1 = layer_norm(x2d + attn, g1_ref[...], be1_ref[...])
        gate = jax.nn.sigmoid(
            jnp.dot(h1.astype(jnp.bfloat16), wg_ref[...],
                    preferred_element_type=jnp.float32) + bg_ref[...])
        h1 = h1 * gate
        f = jnp.dot(h1.astype(jnp.bfloat16), w1_ref[...],
                    preferred_element_type=jnp.float32) + b1_ref[...]
        f = jnp.maximum(f, 0.0)
        f = jnp.dot(f.astype(jnp.bfloat16), w2_ref[...],
                    preferred_element_type=jnp.float32) + b2_ref[...]
        h2 = layer_norm(h1 + f, g2_ref[...], be2_ref[...])
        o_ref[...] = h2.reshape(bt, seq, Ep).astype(o_ref.dtype)


def _round_up(x, m):
    return ((x + m - 1) // m) * m


def _pick_batch_tile(B, S):
    """Largest batch-tile that keeps MXU rows reasonable; prefer >=2 grid steps
    (megacore) only when a step still has >=128 rows."""
    divs = [d for d in range(1, B + 1) if B % d == 0]
    fit = [d for d in divs if d * S <= 512] or [1]
    multi = [d for d in fit if B // d >= 2]
    if multi and max(multi) * S >= 128:
        return max(multi)
    return max(fit)


def domain_adapted_encoder_layer(x, rel_pos_sse_h, params, *, num_heads,
                                 bias_factor=0.1, eps=1e-5):
    """x: (B, S, E) float32, rel_pos_sse_h: (S, S, H) float32."""
    B, S, E = x.shape
    H = num_heads
    Dh = E // H
    scale = 1.0 / float(np.sqrt(Dh))
    Ep = max(_round_up(E, 128), 128)          # lane-dense embedding dim
    FF = params['w1'].shape[1]
    FFp = max(_round_up(FF, 128), 128)        # lane-dense FFN dim
    Bt = _pick_batch_tile(B, S)
    rows = Bt * S

    bf16, f32 = jnp.bfloat16, jnp.float32

    def pad2(w, r, c):
        return jnp.pad(w, ((0, r - w.shape[0]), (0, c - w.shape[1])))

    # rel bias: (S,S,H) -> (H,S,S), bias_factor folded in, bf16 (halves DMA+VMEM).
    rel = (bias_factor * jnp.transpose(rel_pos_sse_h, (2, 0, 1))).astype(bf16)

    # Fused QKV weights, softmax scale folded into Q, input rows padded to Ep.
    wqkv = jnp.concatenate([params['wq'] * scale, params['wk'], params['wv']], axis=1)
    wqkv = pad2(wqkv, Ep, 3 * E).astype(bf16)
    bqkv = jnp.concatenate([params['bq'] * scale, params['bk'], params['bv']],
                           axis=1).astype(f32)

    def padb(b, c):
        return pad2(b.astype(f32), 1, c)

    weights = [
        wqkv, bqkv,
        pad2(params['wo'], E, Ep).astype(bf16), padb(params['bo'], Ep),
        pad2(params['wg'], Ep, Ep).astype(bf16), padb(params['bg'], Ep),
        pad2(params['w1'], Ep, FFp).astype(bf16), padb(params['b1'], FFp),
        pad2(params['w2'], FFp, Ep).astype(bf16), padb(params['b2'], Ep),
        padb(params['g1'], Ep), padb(params['be1'], Ep),
        padb(params['g2'], Ep), padb(params['be2'], Ep),
    ]

    x_p = jnp.pad(x, ((0, 0), (0, 0), (0, Ep - E))).astype(f32)

    kernel = functools.partial(encoder_layer_kernel,
                               num_heads=H, head_dim=Dh, e_real=E,
                               eps=eps, bt=Bt, seq=S)

    def nbytes(shape, dtype):
        return int(np.prod(shape)) * np.dtype(dtype).itemsize

    def const_spec(shape, single_buffer):
        n = len(shape)
        idx = lambda b, h, _n=n: (0,) * _n
        if single_buffer:
            try:
                # Constant index map => never re-DMA'd; one VMEM copy is enough.
                return pl.BlockSpec(shape, idx, pipeline_mode=pl.Buffered(1))
            except Exception:
                pass
        return pl.BlockSpec(shape, idx)

    def build(single_buffer):
        in_specs = ([pl.BlockSpec((Bt, S, Ep), lambda b, h: (b, 0, 0)),
                     pl.BlockSpec((1, S, S), lambda b, h: (h, 0, 0))]   # rel per head
                    + [const_spec(w.shape, single_buffer) for w in weights])
        out_specs = pl.BlockSpec((Bt, S, Ep), lambda b, h: (b, 0, 0))
        scratch = [pltpu.VMEM((H, rows, Dh), bf16) for _ in range(4)]   # q,k,v,ctx

        # VMEM budget from actual block/scratch/temp sizes (don't request all of
        # v7x's 64 MiB; raise the cap toward ~96 MiB on v5e/v6e for very large S).
        wmul = 1 if single_buffer else 2
        needed = (2 * 2 * nbytes((Bt, S, Ep), f32)                  # x + out, 2-buffered
                  + 2 * nbytes((1, S, S), bf16)                     # rel, 2-buffered
                  + wmul * sum(nbytes(w.shape, w.dtype) for w in weights)
                  + 4 * nbytes((H, rows, Dh), bf16)                 # scratch
                  + 6 * nbytes((rows, max(Ep, FFp, 3 * E)), f32)    # dense temporaries
                  + 4 * nbytes((Bt, S, S), f32))                    # score/softmax temps
        MiB = 1024 * 1024
        vmem_limit = int(min(64 * MiB, max(32 * MiB, 2 * needed)))

        return pl.pallas_call(
            kernel,
            out_shape=jax.ShapeDtypeStruct((B, S, Ep), f32),
            grid=(B // Bt, H),
            in_specs=in_specs,
            out_specs=out_specs,
            scratch_shapes=scratch,
            compiler_params=pltpu.CompilerParams(
                dimension_semantics=("parallel", "arbitrary"),
                vmem_limit_bytes=vmem_limit),
        )

    try:
        out = build(single_buffer=True)(x_p, rel, *weights)
    except Exception:
        # TODO(synk): pl.Buffered(1) single-buffering not supported on this jax
        # version; fall back to default double-buffered constant weights.
        out = build(single_buffer=False)(x_p, rel, *weights)
    return out[:, :, :E]


# ---------------------------- pure-JAX reference -----------------------------
def reference_forward(x, rel_pos_sse_h, params, *, num_heads,
                      bias_factor=0.1, eps=1e-5):
    B, S, E = x.shape
    H = num_heads
    Dh = E // H

    def ln(y, g, b):
        mu = jnp.mean(y, axis=-1, keepdims=True)
        var = jnp.mean((y - mu) ** 2, axis=-1, keepdims=True)
        return (y - mu) / jnp.sqrt(var + eps) * g + b

    q = x @ params['wq'] + params['bq']
    k = x @ params['wk'] + params['bk']
    v = x @ params['wv'] + params['bv']
    q = q.reshape(B, S, H, Dh).transpose(0, 2, 1, 3)
    k = k.reshape(B, S, H, Dh).transpose(0, 2, 1, 3)
    v = v.reshape(B, S, H, Dh).transpose(0, 2, 1, 3)
    scores = jnp.einsum('bhsd,bhtd->bhst', q, k) / np.sqrt(Dh)
    scores = scores + bias_factor * jnp.transpose(rel_pos_sse_h, (2, 0, 1))[None]
    w = jax.nn.softmax(scores, axis=-1)
    attn = jnp.einsum('bhst,bhtd->bhsd', w, v).transpose(0, 2, 1, 3).reshape(B, S, E)
    attn = attn @ params['wo'] + params['bo']
    h1 = ln(x + attn, params['g1'], params['be1'])
    h1 = h1 * jax.nn.sigmoid(h1 @ params['wg'] + params['bg'])
    f = jnp.maximum(h1 @ params['w1'] + params['b1'], 0.0) @ params['w2'] + params['b2']
    return ln(h1 + f, params['g2'], params['be2'])


if __name__ == "__main__":
    B, S, E, H, FF, MAX_LEN = 2, 8, 32, 4, 64, 16

    key = jax.random.PRNGKey(0)
    keys = jax.random.split(key, 16)

    def lin(kw, din, dout, scale=0.1):
        return scale * jax.random.normal(kw, (din, dout), jnp.float32)

    params = {
        'wq': lin(keys[0], E, E),  'bq': 0.01 * jax.random.normal(keys[1], (1, E), jnp.float32),
        'wk': lin(keys[2], E, E),  'bk': 0.01 * jax.random.normal(keys[3], (1, E), jnp.float32),
        'wv': lin(keys[4], E, E),  'bv': 0.01 * jax.random.normal(keys[5], (1, E), jnp.float32),
        'wo': lin(keys[6], E, E),  'bo': 0.01 * jax.random.normal(keys[7], (1, E), jnp.float32),
        'wg': lin(keys[8], E, E),  'bg': 0.01 * jax.random.normal(keys[9], (1, E), jnp.float32),
        'w1': lin(keys[10], E, FF), 'b1': 0.01 * jax.random.normal(keys[11], (1, FF), jnp.float32),
        'w2': lin(keys[12], FF, E), 'b2': 0.01 * jax.random.normal(keys[13], (1, E), jnp.float32),
        'g1': jnp.ones((1, E), jnp.float32),  'be1': jnp.zeros((1, E), jnp.float32),
        'g2': jnp.ones((1, E), jnp.float32),  'be2': jnp.zeros((1, E), jnp.float32),
    }
    # relative position embedding parameter (max_len, max_len, H), sliced to seq_len
    rel_full = jax.random.normal(keys[14], (MAX_LEN, MAX_LEN, H), jnp.float32)
    rel_pos = rel_full[:S, :S, :]

    x = jax.random.normal(keys[15], (B, S, E), jnp.float32)

    out = domain_adapted_encoder_layer(x, rel_pos, params, num_heads=H)
    out = jax.block_until_ready(out)

    ref = reference_forward(x, rel_pos, params, num_heads=H)
    # bf16 MXU matmuls (f32 accumulation) + bf16 rel + approx reciprocal ->
    # intentionally looser tolerance than a pure-f32 path.
    np.testing.assert_allclose(np.asarray(out), np.asarray(ref),
                               rtol=3e-2, atol=3e-2)
    print("KERNEL_OK")
</pallas_src>

<mosaic_0001>
module attributes {stable_mosaic.version = 11 : i64} {
  func.func @encoder_layer_kernel(%arg0: i32, %arg1: i32, %arg2: memref<2x8x128xf32, #tpu.memory_space<vmem>>, %arg3: memref<1x8x8xbf16, #tpu.memory_space<vmem>>, %arg4: memref<128x96xbf16, #tpu.memory_space<vmem>>, %arg5: memref<1x96xf32, #tpu.memory_space<vmem>>, %arg6: memref<32x128xbf16, #tpu.memory_space<vmem>>, %arg7: memref<1x128xf32, #tpu.memory_space<vmem>>, %arg8: memref<128x128xbf16, #tpu.memory_space<vmem>>, %arg9: memref<1x128xf32, #tpu.memory_space<vmem>>, %arg10: memref<128x128xbf16, #tpu.memory_space<vmem>>, %arg11: memref<1x128xf32, #tpu.memory_space<vmem>>, %arg12: memref<128x128xbf16, #tpu.memory_space<vmem>>, %arg13: memref<1x128xf32, #tpu.memory_space<vmem>>, %arg14: memref<1x128xf32, #tpu.memory_space<vmem>>, %arg15: memref<1x128xf32, #tpu.memory_space<vmem>>, %arg16: memref<1x128xf32, #tpu.memory_space<vmem>>, %arg17: memref<1x128xf32, #tpu.memory_space<vmem>>, %arg18: memref<2x8x128xf32, #tpu.memory_space<vmem>>, %arg19: memref<4x16x8xbf16, #tpu.memory_space<vmem>>, %arg20: memref<4x16x8xbf16, #tpu.memory_space<vmem>>, %arg21: memref<4x16x8xbf16, #tpu.memory_space<vmem>>, %arg22: memref<4x16x8xbf16, #tpu.memory_space<vmem>>) attributes {dimension_semantics = [#tpu.dimension_semantics<parallel>, #tpu.dimension_semantics<arbitrary>], iteration_bounds = array<i64: 1, 4>, scalar_prefetch = 0 : i64, scratch_operands = 4 : i64, tpu.core_type = #tpu.core_type<tc>, window_params = [{transform_indices = @transform_0, window_bounds = array<i64: 2, 8, 128>}, {transform_indices = @transform_1, window_bounds = array<i64: 1, 8, 8>}, {pipeline_mode = #tpu.pipeline_mode<synchronous>, transform_indices = @transform_2, window_bounds = array<i64: 128, 96>}, {pipeline_mode = #tpu.pipeline_mode<synchronous>, transform_indices = @transform_3, window_bounds = array<i64: 1, 96>}, {pipeline_mode = #tpu.pipeline_mode<synchronous>, transform_indices = @transform_4, window_bounds = array<i64: 32, 128>}, {pipeline_mode = #tpu.pipeline_mode<synchronous>, transform_indices = @transform_5, window_bounds = array<i64: 1, 128>}, {pipeline_mode = #tpu.pipeline_mode<synchronous>, transform_indices = @transform_6, window_bounds = array<i64: 128, 128>}, {pipeline_mode = #tpu.pipeline_mode<synchronous>, transform_indices = @transform_7, window_bounds = array<i64: 1, 128>}, {pipeline_mode = #tpu.pipeline_mode<synchronous>, transform_indices = @transform_8, window_bounds = array<i64: 128, 128>}, {pipeline_mode = #tpu.pipeline_mode<synchronous>, transform_indices = @transform_9, window_bounds = array<i64: 1, 128>}, {pipeline_mode = #tpu.pipeline_mode<synchronous>, transform_indices = @transform_10, window_bounds = array<i64: 128, 128>}, {pipeline_mode = #tpu.pipeline_mode<synchronous>, transform_indices = @transform_11, window_bounds = array<i64: 1, 128>}, {pipeline_mode = #tpu.pipeline_mode<synchronous>, transform_indices = @transform_12, window_bounds = array<i64: 1, 128>}, {pipeline_mode = #tpu.pipeline_mode<synchronous>, transform_indices = @transform_13, window_bounds = array<i64: 1, 128>}, {pipeline_mode = #tpu.pipeline_mode<synchronous>, transform_indices = @transform_14, window_bounds = array<i64: 1, 128>}, {pipeline_mode = #tpu.pipeline_mode<synchronous>, transform_indices = @transform_15, window_bounds = array<i64: 1, 128>}, {transform_indices = @transform_16, window_bounds = array<i64: 2, 8, 128>}]} {
    %c0_i32 = arith.constant 0 : i32
    %0 = arith.cmpi eq, %arg1, %c0_i32 : i32
    %1 = arith.extui %0 : i1 to i32
    %c0_i32_0 = arith.constant 0 : i32
    %2 = arith.cmpi ne, %1, %c0_i32_0 : i32
    scf.if %2 {
      %c0_15 = arith.constant 0 : index
      %c0_16 = arith.constant 0 : index
      %c0_17 = arith.constant 0 : index
      %43 = vector.load %arg2[%c0_15, %c0_16, %c0_17] : memref<2x8x128xf32, #tpu.memory_space<vmem>>, vector<2x8x128xf32>
      %44 = vector.shape_cast %43 : vector<2x8x128xf32> to vector<16x128xf32>
      %45 = arith.truncf %44 : vector<16x128xf32> to vector<16x128xbf16>
      %c0_18 = arith.constant 0 : index
      %c0_19 = arith.constant 0 : index
      %46 = vector.load %arg4[%c0_18, %c0_19] : memref<128x96xbf16, #tpu.memory_space<vmem>>, vector<128x96xbf16>
      %cst_20 = arith.constant dense<0.000000e+00> : vector<16x96xf32>
      %47 = tpu.matmul %45, %46, %cst_20 {dimension_numbers = #tpu.dot_dimension_numbers<[1], [0], [0], [1], [0, 0, 1, 1], [], []>} : vector<16x128xbf16>, vector<128x96xbf16>, vector<16x96xf32> -> vector<16x96xf32>
      %c0_21 = arith.constant 0 : index
      %c0_22 = arith.constant 0 : index
      %48 = vector.load %arg5[%c0_21, %c0_22] : memref<1x96xf32, #tpu.memory_space<vmem>>, vector<1x96xf32>
      %49 = vector.broadcast %48 : vector<1x96xf32> to vector<16x96xf32>
      %50 = arith.addf %47, %49 : vector<16x96xf32>
      %51 = arith.truncf %50 : vector<16x96xf32> to vector<16x96xbf16>
      %52 = vector.extract_strided_slice %51 {offsets = [0, 0], sizes = [16, 8], strides = [1, 1]} : vector<16x96xbf16> to vector<16x8xbf16>
      %c0_23 = arith.constant 0 : index
      %c0_24 = arith.constant 0 : index
      %c0_25 = arith.constant 0 : index
      %53 = vector.load %arg19[%c0_23, %c0_24, %c0_25] : memref<4x16x8xbf16, #tpu.memory_space<vmem>>, vector<1x16x8xbf16>
      %54 = vector.shape_cast %53 : vector<1x16x8xbf16> to vector<16x8xbf16>
      %55 = vector.shape_cast %52 : vector<16x8xbf16> to vector<1x16x8xbf16>
      tpu.vector_store %arg19[%c0_23, %c0_24, %c0_25], %55 {strides = array<i32>} : memref<4x16x8xbf16, #tpu.memory_space<vmem>>, vector<1x16x8xbf16>,
      %56 = vector.extract_strided_slice %51 {offsets = [0, 32], sizes = [16, 8], strides = [1, 1]} : vector<16x96xbf16> to vector<16x8xbf16>
      %c0_26 = arith.constant 0 : index
      %c0_27 = arith.constant 0 : index
      %c0_28 = arith.constant 0 : index
      %57 = vector.load %arg20[%c0_26, %c0_27, %c0_28] : memref<4x16x8xbf16, #tpu.memory_space<vmem>>, vector<1x16x8xbf16>
      %58 = vector.shape_cast %57 : vector<1x16x8xbf16> to vector<16x8xbf16>
      %59 = vector.shape_cast %56 : vector<16x8xbf16> to vector<1x16x8xbf16>
      tpu.vector_store %arg20[%c0_26, %c0_27, %c0_28], %59 {strides = array<i32>} : memref<4x16x8xbf16, #tpu.memory_space<vmem>>, vector<1x16x8xbf16>,
      %60 = vector.extract_strided_slice %51 {offsets = [0, 64], sizes = [16, 8], strides = [1, 1]} : vector<16x96xbf16> to vector<16x8xbf16>
      %c0_29 = arith.constant 0 : index
      %c0_30 = arith.constant 0 : index
      %c0_31 = arith.constant 0 : index
      %61 = vector.load %arg21[%c0_29, %c0_30, %c0_31] : memref<4x16x8xbf16, #tpu.memory_space<vmem>>, vector<1x16x8xbf16>
      %62 = vector.shape_cast %61 : vector<1x16x8xbf16> to vector<16x8xbf16>
      %63 = vector.shape_cast %60 : vector<16x8xbf16> to vector<1x16x8xbf16>
      tpu.vector_store %arg21[%c0_29, %c0_30, %c0_31], %63 {strides = array<i32>} : memref<4x16x8xbf16, #tpu.memory_space<vmem>>, vector<1x16x8xbf16>,
      %64 = vector.extract_strided_slice %51 {offsets = [0, 8], sizes = [16, 8], strides = [1, 1]} : vector<16x96xbf16> to vector<16x8xbf16>
      %c1 = arith.constant 1 : index
      %c0_32 = arith.constant 0 : index
      %c0_33 = arith.constant 0 : index
      %65 = vector.load %arg19[%c1, %c0_32, %c0_33] : memref<4x16x8xbf16, #tpu.memory_space<vmem>>, vector<1x16x8xbf16>
      %66 = vector.shape_cast %65 : vector<1x16x8xbf16> to vector<16x8xbf16>
      %67 = vector.shape_cast %64 : vector<16x8xbf16> to vector<1x16x8xbf16>
      tpu.vector_store %arg19[%c1, %c0_32, %c0_33], %67 {strides = array<i32>} : memref<4x16x8xbf16, #tpu.memory_space<vmem>>, vector<1x16x8xbf16>,
      %68 = vector.extract_strided_slice %51 {offsets = [0, 40], sizes = [16, 8], strides = [1, 1]} : vector<16x96xbf16> to vector<16x8xbf16>
      %c1_34 = arith.constant 1 : index
      %c0_35 = arith.constant 0 : index
      %c0_36 = arith.constant 0 : index
      %69 = vector.load %arg20[%c1_34, %c0_35, %c0_36] : memref<4x16x8xbf16, #tpu.memory_space<vmem>>, vector<1x16x8xbf16>
      %70 = vector.shape_cast %69 : vector<1x16x8xbf16> to vector<16x8xbf16>
      %71 = vector.shape_cast %68 : vector<16x8xbf16> to vector<1x16x8xbf16>
      tpu.vector_store %arg20[%c1_34, %c0_35, %c0_36], %71 {strides = array<i32>} : memref<4x16x8xbf16, #tpu.memory_space<vmem>>, vector<1x16x8xbf16>,
      %72 = vector.extract_strided_slice %51 {offsets = [0, 72], sizes = [16, 8], strides = [1, 1]} : vector<16x96xbf16> to vector<16x8xbf16>
      %c1_37 = arith.constant 1 : index
      %c0_38 = arith.constant 0 : index
      %c0_39 = arith.constant 0 : index
      %73 = vector.load %arg21[%c1_37, %c0_38, %c0_39] : memref<4x16x8xbf16, #tpu.memory_space<vmem>>, vector<1x16x8xbf16>
      %74 = vector.shape_cast %73 : vector<1x16x8xbf16> to vector<16x8xbf16>
      %75 = vector.shape_cast %72 : vector<16x8xbf16> to vector<1x16x8xbf16>
      tpu.vector_store %arg21[%c1_37, %c0_38, %c0_39], %75 {strides = array<i32>} : memref<4x16x8xbf16, #tpu.memory_space<vmem>>, vector<1x16x8xbf16>,
      %76 = vector.extract_strided_slice %51 {offsets = [0, 16], sizes = [16, 8], strides = [1, 1]} : vector<16x96xbf16> to vector<16x8xbf16>
      %c2 = arith.constant 2 : index
      %c0_40 = arith.constant 0 : index
      %c0_41 = arith.constant 0 : index
      %77 = vector.load %arg19[%c2, %c0_40, %c0_41] : memref<4x16x8xbf16, #tpu.memory_space<vmem>>, vector<1x16x8xbf16>
      %78 = vector.shape_cast %77 : vector<1x16x8xbf16> to vector<16x8xbf16>
      %79 = vector.shape_cast %76 : vector<16x8xbf16> to vector<1x16x8xbf16>
      tpu.vector_store %arg19[%c2, %c0_40, %c0_41], %79 {strides = array<i32>} : memref<4x16x8xbf16, #tpu.memory_space<vmem>>, vector<1x16x8xbf16>,
      %80 = vector.extract_strided_slice %51 {offsets = [0, 48], sizes = [16, 8], strides = [1, 1]} : vector<16x96xbf16> to vector<16x8xbf16>
      %c2_42 = arith.constant 2 : index
      %c0_43 = arith.constant 0 : index
      %c0_44 = arith.constant 0 : index
      %81 = vector.load %arg20[%c2_42, %c0_43, %c0_44] : memref<4x16x8xbf16, #tpu.memory_space<vmem>>, vector<1x16x8xbf16>
      %82 = vector.shape_cast %81 : vector<1x16x8xbf16> to vector<16x8xbf16>
      %83 = vector.shape_cast %80 : vector<16x8xbf16> to vector<1x16x8xbf16>
      tpu.vector_store %arg20[%c2_42, %c0_43, %c0_44], %83 {strides = array<i32>} : memref<4x16x8xbf16, #tpu.memory_space<vmem>>, vector<1x16x8xbf16>,
      %84 = vector.extract_strided_slice %51 {offsets = [0, 80], sizes = [16, 8], strides = [1, 1]} : vector<16x96xbf16> to vector<16x8xbf16>
      %c2_45 = arith.constant 2 : index
      %c0_46 = arith.constant 0 : index
      %c0_47 = arith.constant 0 : index
      %85 = vector.load %arg21[%c2_45, %c0_46, %c0_47] : memref<4x16x8xbf16, #tpu.memory_space<vmem>>, vector<1x16x8xbf16>
      %86 = vector.shape_cast %85 : vector<1x16x8xbf16> to vector<16x8xbf16>
      %87 = vector.shape_cast %84 : vector<16x8xbf16> to vector<1x16x8xbf16>
      tpu.vector_store %arg21[%c2_45, %c0_46, %c0_47], %87 {strides = array<i32>} : memref<4x16x8xbf16, #tpu.memory_space<vmem>>, vector<1x16x8xbf16>,
      %88 = vector.extract_strided_slice %51 {offsets = [0, 24], sizes = [16, 8], strides = [1, 1]} : vector<16x96xbf16> to vector<16x8xbf16>
      %c3 = arith.constant 3 : index
      %c0_48 = arith.constant 0 : index
      %c0_49 = arith.constant 0 : index
      %89 = vector.load %arg19[%c3, %c0_48, %c0_49] : memref<4x16x8xbf16, #tpu.memory_space<vmem>>, vector<1x16x8xbf16>
      %90 = vector.shape_cast %89 : vector<1x16x8xbf16> to vector<16x8xbf16>
      %91 = vector.shape_cast %88 : vector<16x8xbf16> to vector<1x16x8xbf16>
      tpu.vector_store %arg19[%c3, %c0_48, %c0_49], %91 {strides = array<i32>} : memref<4x16x8xbf16, #tpu.memory_space<vmem>>, vector<1x16x8xbf16>,
      %92 = vector.extract_strided_slice %51 {offsets = [0, 56], sizes = [16, 8], strides = [1, 1]} : vector<16x96xbf16> to vector<16x8xbf16>
      %c3_50 = arith.constant 3 : index
      %c0_51 = arith.constant 0 : index
      %c0_52 = arith.constant 0 : index
      %93 = vector.load %arg20[%c3_50, %c0_51, %c0_52] : memref<4x16x8xbf16, #tpu.memory_space<vmem>>, vector<1x16x8xbf16>
      %94 = vector.shape_cast %93 : vector<1x16x8xbf16> to vector<16x8xbf16>
      %95 = vector.shape_cast %92 : vector<16x8xbf16> to vector<1x16x8xbf16>
      tpu.vector_store %arg20[%c3_50, %c0_51, %c0_52], %95 {strides = array<i32>} : memref<4x16x8xbf16, #tpu.memory_space<vmem>>, vector<1x16x8xbf16>,
      %96 = vector.extract_strided_slice %51 {offsets = [0, 88], sizes = [16, 8], strides = [1, 1]} : vector<16x96xbf16> to vector<16x8xbf16>
      %c3_53 = arith.constant 3 : index
      %c0_54 = arith.constant 0 : index
      %c0_55 = arith.constant 0 : index
      %97 = vector.load %arg21[%c3_53, %c0_54, %c0_55] : memref<4x16x8xbf16, #tpu.memory_space<vmem>>, vector<1x16x8xbf16>
      %98 = vector.shape_cast %97 : vector<1x16x8xbf16> to vector<16x8xbf16>
      %99 = vector.shape_cast %96 : vector<16x8xbf16> to vector<1x16x8xbf16>
      tpu.vector_store %arg21[%c3_53, %c0_54, %c0_55], %99 {strides = array<i32>} : memref<4x16x8xbf16, #tpu.memory_space<vmem>>, vector<1x16x8xbf16>,
    } else {
    }
    %3 = arith.index_cast %arg1 : i32 to index
    %c0 = arith.constant 0 : index
    %c0_1 = arith.constant 0 : index
    %4 = vector.load %arg19[%3, %c0, %c0_1] : memref<4x16x8xbf16, #tpu.memory_space<vmem>>, vector<1x16x8xbf16>
    %5 = vector.shape_cast %4 : vector<1x16x8xbf16> to vector<16x8xbf16>
    %6 = vector.shape_cast %5 : vector<16x8xbf16> to vector<2x8x8xbf16>
    %7 = arith.index_cast %arg1 : i32 to index
    %c0_2 = arith.constant 0 : index
    %c0_3 = arith.constant 0 : index
    %8 = vector.load %arg20[%7, %c0_2, %c0_3] : memref<4x16x8xbf16, #tpu.memory_space<vmem>>, vector<1x16x8xbf16>
    %9 = vector.shape_cast %8 : vector<1x16x8xbf16> to vector<16x8xbf16>
    %10 = vector.shape_cast %9 : vector<16x8xbf16> to vector<2x8x8xbf16>
    %11 = arith.index_cast %arg1 : i32 to index
    %c0_4 = arith.constant 0 : index
    %c0_5 = arith.constant 0 : index
    %12 = vector.load %arg21[%11, %c0_4, %c0_5] : memref<4x16x8xbf16, #tpu.memory_space<vmem>>, vector<1x16x8xbf16>
    %13 = vector.shape_cast %12 : vector<1x16x8xbf16> to vector<16x8xbf16>
    %14 = vector.shape_cast %13 : vector<16x8xbf16> to vector<2x8x8xbf16>
    "tpu.trace_start"() <{level = 10 : i32, message = "bqd,bkd->bqk"}> : () -> ()
    %cst = arith.constant dense<0.000000e+00> : vector<2x8x8xf32>
    %15 = tpu.matmul %6, %10, %cst {dimension_numbers = #tpu.dot_dimension_numbers<[2], [2], [1], [1], [0, 0, 0, 1, 1, 1], [0], [0]>} : vector<2x8x8xbf16>, vector<2x8x8xbf16>, vector<2x8x8xf32> -> vector<2x8x8xf32>
    "tpu.trace_stop"() : () -> ()
    %c0_6 = arith.constant 0 : index
    %c0_7 = arith.constant 0 : index
    %c0_8 = arith.constant 0 : index
    %16 = vector.load %arg3[%c0_6, %c0_7, %c0_8] : memref<1x8x8xbf16, #tpu.memory_space<vmem>>, vector<1x8x8xbf16>
    %17 = vector.shape_cast %16 : vector<1x8x8xbf16> to vector<8x8xbf16>
    %18 = arith.extf %17 : vector<8x8xbf16> to vector<8x8xf32>
    %19 = vector.shape_cast %18 : vector<8x8xf32> to vector<1x8x8xf32>
    %20 = vector.broadcast %19 : vector<1x8x8xf32> to vector<2x8x8xf32>
    %21 = arith.addf %15, %20 : vector<2x8x8xf32>
    %cst_9 = arith.constant dense<0xFF800000> : vector<2x8xf32>
    %22 = vector.multi_reduction <maximumf>, %21, %cst_9 [2] : vector<2x8x8xf32> to vector<2x8xf32>
    %23 = vector.shape_cast %22 : vector<2x8xf32> to vector<2x8x1xf32>
    %24 = vector.broadcast %23 : vector<2x8x1xf32> to vector<2x8x8xf32>
    %25 = arith.subf %21, %24 : vector<2x8x8xf32>
    %26 = math.exp %25 : vector<2x8x8xf32>
    %cst_10 = arith.constant dense<0.000000e+00> : vector<2x8xf32>
    %27 = vector.multi_reduction <add>, %26, %cst_10 [2] : vector<2x8x8xf32> to vector<2x8xf32>
    %28 = vector.shape_cast %27 : vector<2x8xf32> to vector<2x8x1xf32>
    %29 = tpu.reciprocal %28 {approx = true} : vector<2x8x1xf32> -> vector<2x8x1xf32>
    %30 = vector.broadcast %29 : vector<2x8x1xf32> to vector<2x8x8xf32>
    %31 = arith.mulf %26, %30 : vector<2x8x8xf32>
    %32 = arith.truncf %31 : vector<2x8x8xf32> to vector<2x8x8xbf16>
    "tpu.trace_start"() <{level = 10 : i32, message = "bqk,bkd->bqd"}> : () -> ()
    %cst_11 = arith.constant dense<0.000000e+00> : vector<2x8x8xf32>
    %33 = tpu.matmul %32, %14, %cst_11 {dimension_numbers = #tpu.dot_dimension_numbers<[2], [1], [1], [2], [0, 0, 0, 1, 1, 2], [0], [0]>} : vector<2x8x8xbf16>, vector<2x8x8xbf16>, vector<2x8x8xf32> -> vector<2x8x8xf32>
    "tpu.trace_stop"() : () -> ()
    %34 = vector.shape_cast %33 : vector<2x8x8xf32> to vector<16x8xf32>
    %35 = arith.truncf %34 : vector<16x8xf32> to vector<16x8xbf16>
    %36 = arith.index_cast %arg1 : i32 to index
    %c0_12 = arith.constant 0 : index
    %c0_13 = arith.constant 0 : index
    %37 = vector.load %arg22[%36, %c0_12, %c0_13] : memref<4x16x8xbf16, #tpu.memory_space<vmem>>, vector<1x16x8xbf16>
    %38 = vector.shape_cast %37 : vector<1x16x8xbf16> to vector<16x8xbf16>
    %39 = vector.shape_cast %35 : vector<16x8xbf16> to vector<1x16x8xbf16>
    tpu.vector_store %arg22[%36, %c0_12, %c0_13], %39 {strides = array<i32>} : memref<4x16x8xbf16, #tpu.memory_space<vmem>>, vector<1x16x8xbf16>,
    %c3_i32 = arith.constant 3 : i32
    %40 = arith.cmpi eq, %arg1, %c3_i32 : i32
    %41 = arith.extui %40 : i1 to i32
    %c0_i32_14 = arith.constant 0 : i32
    %42 = arith.cmpi ne, %41, %c0_i32_14 : i32
    scf.if %42 {
      %c0_15 = arith.constant 0 : index
      %c0_16 = arith.constant 0 : index
      %c0_17 = arith.constant 0 : index
      %43 = vector.load %arg22[%c0_15, %c0_16, %c0_17] : memref<4x16x8xbf16, #tpu.memory_space<vmem>>, vector<1x16x8xbf16>
      %44 = vector.shape_cast %43 : vector<1x16x8xbf16> to vector<16x8xbf16>
      %c1 = arith.constant 1 : index
      %c0_18 = arith.constant 0 : index
      %c0_19 = arith.constant 0 : index
      %45 = vector.load %arg22[%c1, %c0_18, %c0_19] : memref<4x16x8xbf16, #tpu.memory_space<vmem>>, vector<1x16x8xbf16>
      %46 = vector.shape_cast %45 : vector<1x16x8xbf16> to vector<16x8xbf16>
      %c2 = arith.constant 2 : index
      %c0_20 = arith.constant 0 : index
      %c0_21 = arith.constant 0 : index
      %47 = vector.load %arg22[%c2, %c0_20, %c0_21] : memref<4x16x8xbf16, #tpu.memory_space<vmem>>, vector<1x16x8xbf16>
      %48 = vector.shape_cast %47 : vector<1x16x8xbf16> to vector<16x8xbf16>
      %c3 = arith.constant 3 : index
      %c0_22 = arith.constant 0 : index
      %c0_23 = arith.constant 0 : index
      %49 = vector.load %arg22[%c3, %c0_22, %c0_23] : memref<4x16x8xbf16, #tpu.memory_space<vmem>>, vector<1x16x8xbf16>
      %50 = vector.shape_cast %49 : vector<1x16x8xbf16> to vector<16x8xbf16>
      %51 = tpu.concatenate %44, %46, %48, %50 in 1 : vector<16x8xbf16>, vector<16x8xbf16>, vector<16x8xbf16>, vector<16x8xbf16> -> vector<16x32xbf16>
      %c0_24 = arith.constant 0 : index
      %c0_25 = arith.constant 0 : index
      %52 = vector.load %arg6[%c0_24, %c0_25] : memref<32x128xbf16, #tpu.memory_space<vmem>>, vector<32x128xbf16>
      %cst_26 = arith.constant dense<0.000000e+00> : vector<16x128xf32>
      %53 = tpu.matmul %51, %52, %cst_26 {dimension_numbers = #tpu.dot_dimension_numbers<[1], [0], [0], [1], [0, 0, 1, 1], [], []>} : vector<16x32xbf16>, vector<32x128xbf16>, vector<16x128xf32> -> vector<16x128xf32>
      %c0_27 = arith.constant 0 : index
      %c0_28 = arith.constant 0 : index
      %54 = vector.load %arg7[%c0_27, %c0_28] : memref<1x128xf32, #tpu.memory_space<vmem>>, vector<1x128xf32>
      %55 = vector.broadcast %54 : vector<1x128xf32> to vector<16x128xf32>
      %56 = arith.addf %53, %55 : vector<16x128xf32>
      %c0_29 = arith.constant 0 : index
      %c0_30 = arith.constant 0 : index
      %c0_31 = arith.constant 0 : index
      %57 = vector.load %arg2[%c0_29, %c0_30, %c0_31] : memref<2x8x128xf32, #tpu.memory_space<vmem>>, vector<2x8x128xf32>
      %58 = vector.shape_cast %57 : vector<2x8x128xf32> to vector<16x128xf32>
      %59 = tpu.iota {dimensions = array<i32: 1>} : vector<16x128xi32>
      %c32_i32 = arith.constant 32 : i32
      %60 = vector.broadcast %c32_i32 : i32 to vector<16x128xi32>
      %61 = arith.cmpi slt, %59, %60 : vector<16x128xi32>
      %62 = arith.addf %58, %56 : vector<16x128xf32>
      %c0_32 = arith.constant 0 : index
      %c0_33 = arith.constant 0 : index
      %63 = vector.load %arg14[%c0_32, %c0_33] : memref<1x128xf32, #tpu.memory_space<vmem>>, vector<1x128xf32>
      %c0_34 = arith.constant 0 : index
      %c0_35 = arith.constant 0 : index
      %64 = vector.load %arg15[%c0_34, %c0_35] : memref<1x128xf32, #tpu.memory_space<vmem>>, vector<1x128xf32>
      %cst_36 = arith.constant dense<0.000000e+00> : vector<16xf32>
      %65 = vector.multi_reduction <add>, %62, %cst_36 [1] : vector<16x128xf32> to vector<16xf32>
      %66 = vector.shape_cast %65 : vector<16xf32> to vector<16x1xf32>
      %cst_37 = arith.constant 3.125000e-02 : f32
      %67 = vector.broadcast %cst_37 : f32 to vector<16x1xf32>
      %68 = arith.mulf %66, %67 : vector<16x1xf32>
      %69 = vector.broadcast %68 : vector<16x1xf32> to vector<16x128xf32>
      %70 = arith.subf %62, %69 : vector<16x128xf32>
      %cst_38 = arith.constant 0.000000e+00 : f32
      %71 = vector.broadcast %cst_38 : f32 to vector<16x128xf32>
      %72 = arith.select %61, %70, %71 : vector<16x128xi1>, vector<16x128xf32>
      %73 = arith.mulf %72, %72 : vector<16x128xf32>
      %cst_39 = arith.constant dense<0.000000e+00> : vector<16xf32>
      %74 = vector.multi_reduction <add>, %73, %cst_39 [1] : vector<16x128xf32> to vector<16xf32>
      %75 = vector.shape_cast %74 : vector<16xf32> to vector<16x1xf32>
      %cst_40 = arith.constant 3.125000e-02 : f32
      %76 = vector.broadcast %cst_40 : f32 to vector<16x1xf32>
      %77 = arith.mulf %75, %76 : vector<16x1xf32>
      %cst_41 = arith.constant 9.99999974E-6 : f32
      %78 = vector.broadcast %cst_41 : f32 to vector<16x1xf32>
      %79 = arith.addf %77, %78 : vector<16x1xf32>
      %80 = math.rsqrt %79 : vector<16x1xf32>
      %81 = vector.broadcast %80 : vector<16x1xf32> to vector<16x128xf32>
      %82 = arith.mulf %72, %81 : vector<16x128xf32>
      %83 = vector.broadcast %63 : vector<1x128xf32> to vector<16x128xf32>
      %84 = arith.mulf %82, %83 : vector<16x128xf32>
      %85 = vector.broadcast %64 : vector<1x128xf32> to vector<16x128xf32>
      %86 = arith.addf %84, %85 : vector<16x128xf32>
      %87 = arith.truncf %86 : vector<16x128xf32> to vector<16x128xbf16>
      %c0_42 = arith.constant 0 : index
      %c0_43 = arith.constant 0 : index
      %88 = vector.load %arg8[%c0_42, %c0_43] : memref<128x128xbf16, #tpu.memory_space<vmem>>, vector<128x128xbf16>
      %cst_44 = arith.constant dense<0.000000e+00> : vector<16x128xf32>
      %89 = tpu.matmul %87, %88, %cst_44 {dimension_numbers = #tpu.dot_dimension_numbers<[1], [0], [0], [1], [0, 0, 1, 1], [], []>} : vector<16x128xbf16>, vector<128x128xbf16>, vector<16x128xf32> -> vector<16x128xf32>
      %c0_45 = arith.constant 0 : index
      %c0_46 = arith.constant 0 : index
      %90 = vector.load %arg9[%c0_45, %c0_46] : memref<1x128xf32, #tpu.memory_space<vmem>>, vector<1x128xf32>
      %91 = vector.broadcast %90 : vector<1x128xf32> to vector<16x128xf32>
      %92 = arith.addf %89, %91 : vector<16x128xf32>
      %93 = arith.negf %92 : vector<16x128xf32>
      %94 = math.exp %93 : vector<16x128xf32>
      %cst_47 = arith.constant 1.000000e+00 : f32
      %95 = vector.broadcast %cst_47 : f32 to vector<16x128xf32>
      %96 = arith.addf %95, %94 : vector<16x128xf32>
      %97 = arith.divf %95, %96 : vector<16x128xf32>
      %98 = arith.mulf %86, %97 : vector<16x128xf32>
      %99 = arith.truncf %98 : vector<16x128xf32> to vector<16x128xbf16>
      %c0_48 = arith.constant 0 : index
      %c0_49 = arith.constant 0 : index
      %100 = vector.load %arg10[%c0_48, %c0_49] : memref<128x128xbf16, #tpu.memory_space<vmem>>, vector<128x128xbf16>
      %cst_50 = arith.constant dense<0.000000e+00> : vector<16x128xf32>
      %101 = tpu.matmul %99, %100, %cst_50 {dimension_numbers = #tpu.dot_dimension_numbers<[1], [0], [0], [1], [0, 0, 1, 1], [], []>} : vector<16x128xbf16>, vector<128x128xbf16>, vector<16x128xf32> -> vector<16x128xf32>
      %c0_51 = arith.constant 0 : index
      %c0_52 = arith.constant 0 : index
      %102 = vector.load %arg11[%c0_51, %c0_52] : memref<1x128xf32, #tpu.memory_space<vmem>>, vector<1x128xf32>
      %103 = vector.broadcast %102 : vector<1x128xf32> to vector<16x128xf32>
      %104 = arith.addf %101, %103 : vector<16x128xf32>
      %cst_53 = arith.constant 0.000000e+00 : f32
      %105 = vector.broadcast %cst_53 : f32 to vector<16x128xf32>
      %106 = arith.maximumf %104, %105 : vector<16x128xf32>
      %107 = arith.truncf %106 : vector<16x128xf32> to vector<16x128xbf16>
      %c0_54 = arith.constant 0 : index
      %c0_55 = arith.constant 0 : index
      %108 = vector.load %arg12[%c0_54, %c0_55] : memref<128x128xbf16, #tpu.memory_space<vmem>>, vector<128x128xbf16>
      %cst_56 = arith.constant dense<0.000000e+00> : vector<16x128xf32>
      %109 = tpu.matmul %107, %108, %cst_56 {dimension_numbers = #tpu.dot_dimension_numbers<[1], [0], [0], [1], [0, 0, 1, 1], [], []>} : vector<16x128xbf16>, vector<128x128xbf16>, vector<16x128xf32> -> vector<16x128xf32>
      %c0_57 = arith.constant 0 : index
      %c0_58 = arith.constant 0 : index
      %110 = vector.load %arg13[%c0_57, %c0_58] : memref<1x128xf32, #tpu.memory_space<vmem>>, vector<1x128xf32>
      %111 = vector.broadcast %110 : vector<1x128xf32> to vector<16x128xf32>
      %112 = arith.addf %109, %111 : vector<16x128xf32>
      %113 = arith.addf %98, %112 : vector<16x128xf32>
      %c0_59 = arith.constant 0 : index
      %c0_60 = arith.constant 0 : index
      %114 = vector.load %arg16[%c0_59, %c0_60] : memref<1x128xf32, #tpu.memory_space<vmem>>, vector<1x128xf32>
      %c0_61 = arith.constant 0 : index
      %c0_62 = arith.constant 0 : index
      %115 = vector.load %arg17[%c0_61, %c0_62] : memref<1x128xf32, #tpu.memory_space<vmem>>, vector<1x128xf32>
      %cst_63 = arith.constant dense<0.000000e+00> : vector<16xf32>
      %116 = vector.multi_reduction <add>, %113, %cst_63 [1] : vector<16x128xf32> to vector<16xf32>
      %117 = vector.shape_cast %116 : vector<16xf32> to vector<16x1xf32>
      %cst_64 = arith.constant 3.125000e-02 : f32
      %118 = vector.broadcast %cst_64 : f32 to vector<16x1xf32>
      %119 = arith.mulf %117, %118 : vector<16x1xf32>
      %120 = vector.broadcast %119 : vector<16x1xf32> to vector<16x128xf32>
      %121 = arith.subf %113, %120 : vector<16x128xf32>
      %cst_65 = arith.constant 0.000000e+00 : f32
      %122 = vector.broadcast %cst_65 : f32 to vector<16x128xf32>
      %123 = arith.select %61, %121, %122 : vector<16x128xi1>, vector<16x128xf32>
      %124 = arith.mulf %123, %123 : vector<16x128xf32>
      %cst_66 = arith.constant dense<0.000000e+00> : vector<16xf32>
      %125 = vector.multi_reduction <add>, %124, %cst_66 [1] : vector<16x128xf32> to vector<16xf32>
      %126 = vector.shape_cast %125 : vector<16xf32> to vector<16x1xf32>
      %cst_67 = arith.constant 3.125000e-02 : f32
      %127 = vector.broadcast %cst_67 : f32 to vector<16x1xf32>
      %128 = arith.mulf %126, %127 : vector<16x1xf32>
      %cst_68 = arith.constant 9.99999974E-6 : f32
      %129 = vector.broadcast %cst_68 : f32 to vector<16x1xf32>
      %130 = arith.addf %128, %129 : vector<16x1xf32>
      %131 = math.rsqrt %130 : vector<16x1xf32>
      %132 = vector.broadcast %131 : vector<16x1xf32> to vector<16x128xf32>
      %133 = arith.mulf %123, %132 : vector<16x128xf32>
      %134 = vector.broadcast %114 : vector<1x128xf32> to vector<16x128xf32>
      %135 = arith.mulf %133, %134 : vector<16x128xf32>
      %136 = vector.broadcast %115 : vector<1x128xf32> to vector<16x128xf32>
      %137 = arith.addf %135, %136 : vector<16x128xf32>
      %138 = vector.shape_cast %137 : vector<16x128xf32> to vector<2x8x128xf32>
      %c0_69 = arith.constant 0 : index
      %c0_70 = arith.constant 0 : index
      %c0_71 = arith.constant 0 : index
      %139 = vector.load %arg18[%c0_69, %c0_70, %c0_71] : memref<2x8x128xf32, #tpu.memory_space<vmem>>, vector<2x8x128xf32>
      tpu.vector_store %arg18[%c0_69, %c0_70, %c0_71], %138 {strides = array<i32>} : memref<2x8x128xf32, #tpu.memory_space<vmem>>, vector<2x8x128xf32>,
    } else {
    }
    return
  }
  func.func @transform_0(%arg0: i32, %arg1: i32) -> (i32, i32, i32) {
    %c0_i32 = arith.constant 0 : i32
    %c0_i32_0 = arith.constant 0 : i32
    %c0_i32_1 = arith.constant 0 : i32
    return %arg0, %c0_i32, %c0_i32_0 : i32, i32, i32
  }
  func.func @transform_1(%arg0: i32, %arg1: i32) -> (i32, i32, i32) {
    %c0_i32 = arith.constant 0 : i32
    %c0_i32_0 = arith.constant 0 : i32
    %c0_i32_1 = arith.constant 0 : i32
    return %arg1, %c0_i32, %c0_i32_0 : i32, i32, i32
  }
  func.func @transform_2(%arg0: i32, %arg1: i32) -> (i32, i32) {
    %c0_i32 = arith.constant 0 : i32
    %c0_i32_0 = arith.constant 0 : i32
    %c0_i32_1 = arith.constant 0 : i32
    return %c0_i32, %c0_i32_0 : i32, i32
  }
  func.func @transform_3(%arg0: i32, %arg1: i32) -> (i32, i32) {
    %c0_i32 = arith.constant 0 : i32
    %c0_i32_0 = arith.constant 0 : i32
    %c0_i32_1 = arith.constant 0 : i32
    return %c0_i32, %c0_i32_0 : i32, i32
  }
  func.func @transform_4(%arg0: i32, %arg1: i32) -> (i32, i32) {
    %c0_i32 = arith.constant 0 : i32
    %c0_i32_0 = arith.constant 0 : i32
    %c0_i32_1 = arith.constant 0 : i32
    return %c0_i32, %c0_i32_0 : i32, i32
  }
  func.func @transform_5(%arg0: i32, %arg1: i32) -> (i32, i32) {
    %c0_i32 = arith.constant 0 : i32
    %c0_i32_0 = arith.constant 0 : i32
    %c0_i32_1 = arith.constant 0 : i32
    return %c0_i32, %c0_i32_0 : i32, i32
  }
  func.func @transform_6(%arg0: i32, %arg1: i32) -> (i32, i32) {
    %c0_i32 = arith.constant 0 : i32
    %c0_i32_0 = arith.constant 0 : i32
    %c0_i32_1 = arith.constant 0 : i32
    return %c0_i32, %c0_i32_0 : i32, i32
  }
  func.func @transform_7(%arg0: i32, %arg1: i32) -> (i32, i32) {
    %c0_i32 = arith.constant 0 : i32
    %c0_i32_0 = arith.constant 0 : i32
    %c0_i32_1 = arith.constant 0 : i32
    return %c0_i32, %c0_i32_0 : i32, i32
  }
  func.func @transform_8(%arg0: i32, %arg1: i32) -> (i32, i32) {
    %c0_i32 = arith.constant 0 : i32
    %c0_i32_0 = arith.constant 0 : i32
    %c0_i32_1 = arith.constant 0 : i32
    return %c0_i32, %c0_i32_0 : i32, i32
  }
  func.func @transform_9(%arg0: i32, %arg1: i32) -> (i32, i32) {
    %c0_i32 = arith.constant 0 : i32
    %c0_i32_0 = arith.constant 0 : i32
    %c0_i32_1 = arith.constant 0 : i32
    return %c0_i32, %c0_i32_0 : i32, i32
  }
  func.func @transform_10(%arg0: i32, %arg1: i32) -> (i32, i32) {
    %c0_i32 = arith.constant 0 : i32
    %c0_i32_0 = arith.constant 0 : i32
    %c0_i32_1 = arith.constant 0 : i32
    return %c0_i32, %c0_i32_0 : i32, i32
  }
  func.func @transform_11(%arg0: i32, %arg1: i32) -> (i32, i32) {
    %c0_i32 = arith.constant 0 : i32
    %c0_i32_0 = arith.constant 0 : i32
    %c0_i32_1 = arith.constant 0 : i32
    return %c0_i32, %c0_i32_0 : i32, i32
  }
  func.func @transform_12(%arg0: i32, %arg1: i32) -> (i32, i32) {
    %c0_i32 = arith.constant 0 : i32
    %c0_i32_0 = arith.constant 0 : i32
    %c0_i32_1 = arith.constant 0 : i32
    return %c0_i32, %c0_i32_0 : i32, i32
  }
  func.func @transform_13(%arg0: i32, %arg1: i32) -> (i32, i32) {
    %c0_i32 = arith.constant 0 : i32
    %c0_i32_0 = arith.constant 0 : i32
    %c0_i32_1 = arith.constant 0 : i32
    return %c0_i32, %c0_i32_0 : i32, i32
  }
  func.func @transform_14(%arg0: i32, %arg1: i32) -> (i32, i32) {
    %c0_i32 = arith.constant 0 : i32
    %c0_i32_0 = arith.constant 0 : i32
    %c0_i32_1 = arith.constant 0 : i32
    return %c0_i32, %c0_i32_0 : i32, i32
  }
  func.func @transform_15(%arg0: i32, %arg1: i32) -> (i32, i32) {
    %c0_i32 = arith.constant 0 : i32
    %c0_i32_0 = arith.constant 0 : i32
    %c0_i32_1 = arith.constant 0 : i32
    return %c0_i32, %c0_i32_0 : i32, i32
  }
  func.func @transform_16(%arg0: i32, %arg1: i32) -> (i32, i32, i32) {
    %c0_i32 = arith.constant 0 : i32
    %c0_i32_0 = arith.constant 0 : i32
    %c0_i32_1 = arith.constant 0 : i32
    return %arg0, %c0_i32, %c0_i32_0 : i32, i32, i32
  }
}

module attributes {stable_mosaic.version = 11 : i64} {
  func.func @encoder_layer_kernel(%arg0: i32, %arg1: i32, %arg2: memref<2x8x128xf32, #tpu.memory_space<vmem>>, %arg3: memref<1x8x8xbf16, #tpu.memory_space<vmem>>, %arg4: memref<128x96xbf16, #tpu.memory_space<vmem>>, %arg5: memref<1x96xf32, #tpu.memory_space<vmem>>, %arg6: memref<32x128xbf16, #tpu.memory_space<vmem>>, %arg7: memref<1x128xf32, #tpu.memory_space<vmem>>, %arg8: memref<128x128xbf16, #tpu.memory_space<vmem>>, %arg9: memref<1x128xf32, #tpu.memory_space<vmem>>, %arg10: memref<128x128xbf16, #tpu.memory_space<vmem>>, %arg11: memref<1x128xf32, #tpu.memory_space<vmem>>, %arg12: memref<128x128xbf16, #tpu.memory_space<vmem>>, %arg13: memref<1x128xf32, #tpu.memory_space<vmem>>, %arg14: memref<1x128xf32, #tpu.memory_space<vmem>>, %arg15: memref<1x128xf32, #tpu.memory_space<vmem>>, %arg16: memref<1x128xf32, #tpu.memory_space<vmem>>, %arg17: memref<1x128xf32, #tpu.memory_space<vmem>>, %arg18: memref<2x8x128xf32, #tpu.memory_space<vmem>>, %arg19: memref<4x16x8xbf16, #tpu.memory_space<vmem>>, %arg20: memref<4x16x8xbf16, #tpu.memory_space<vmem>>, %arg21: memref<4x16x8xbf16, #tpu.memory_space<vmem>>, %arg22: memref<4x16x8xbf16, #tpu.memory_space<vmem>>) attributes {dimension_semantics = [#tpu.dimension_semantics<parallel>, #tpu.dimension_semantics<arbitrary>], iteration_bounds = array<i64: 1, 4>, scalar_prefetch = 0 : i64, scratch_operands = 4 : i64, tpu.core_type = #tpu.core_type<tc>, window_params = [{transform_indices = @transform_0, window_bounds = array<i64: 2, 8, 128>}, {transform_indices = @transform_1, window_bounds = array<i64: 1, 8, 8>}, {pipeline_mode = #tpu.pipeline_mode<synchronous>, transform_indices = @transform_2, window_bounds = array<i64: 128, 96>}, {pipeline_mode = #tpu.pipeline_mode<synchronous>, transform_indices = @transform_3, window_bounds = array<i64: 1, 96>}, {pipeline_mode = #tpu.pipeline_mode<synchronous>, transform_indices = @transform_4, window_bounds = array<i64: 32, 128>}, {pipeline_mode = #tpu.pipeline_mode<synchronous>, transform_indices = @transform_5, window_bounds = array<i64: 1, 128>}, {pipeline_mode = #tpu.pipeline_mode<synchronous>, transform_indices = @transform_6, window_bounds = array<i64: 128, 128>}, {pipeline_mode = #tpu.pipeline_mode<synchronous>, transform_indices = @transform_7, window_bounds = array<i64: 1, 128>}, {pipeline_mode = #tpu.pipeline_mode<synchronous>, transform_indices = @transform_8, window_bounds = array<i64: 128, 128>}, {pipeline_mode = #tpu.pipeline_mode<synchronous>, transform_indices = @transform_9, window_bounds = array<i64: 1, 128>}, {pipeline_mode = #tpu.pipeline_mode<synchronous>, transform_indices = @transform_10, window_bounds = array<i64: 128, 128>}, {pipeline_mode = #tpu.pipeline_mode<synchronous>, transform_indices = @transform_11, window_bounds = array<i64: 1, 128>}, {pipeline_mode = #tpu.pipeline_mode<synchronous>, transform_indices = @transform_12, window_bounds = array<i64: 1, 128>}, {pipeline_mode = #tpu.pipeline_mode<synchronous>, transform_indices = @transform_13, window_bounds = array<i64: 1, 128>}, {pipeline_mode = #tpu.pipeline_mode<synchronous>, transform_indices = @transform_14, window_bounds = array<i64: 1, 128>}, {pipeline_mode = #tpu.pipeline_mode<synchronous>, transform_indices = @transform_15, window_bounds = array<i64: 1, 128>}, {transform_indices = @transform_16, window_bounds = array<i64: 2, 8, 128>}]} {
    %c0_i32 = arith.constant 0 : i32
    %0 = arith.cmpi eq, %arg1, %c0_i32 : i32
    %1 = arith.extui %0 : i1 to i32
    %c0_i32_0 = arith.constant 0 : i32
    %2 = arith.cmpi ne, %1, %c0_i32_0 : i32
    scf.if %2 {
      %c0_15 = arith.constant 0 : index
      %c0_16 = arith.constant 0 : index
      %c0_17 = arith.constant 0 : index
      %43 = vector.load %arg2[%c0_15, %c0_16, %c0_17] : memref<2x8x128xf32, #tpu.memory_space<vmem>>, vector<2x8x128xf32>
      %44 = vector.shape_cast %43 : vector<2x8x128xf32> to vector<16x128xf32>
      %45 = arith.truncf %44 : vector<16x128xf32> to vector<16x128xbf16>
      %c0_18 = arith.constant 0 : index
      %c0_19 = arith.constant 0 : index
      %46 = vector.load %arg4[%c0_18, %c0_19] : memref<128x96xbf16, #tpu.memory_space<vmem>>, vector<128x96xbf16>
      %cst_20 = arith.constant dense<0.000000e+00> : vector<16x96xf32>
      %47 = tpu.matmul %45, %46, %cst_20 {dimension_numbers = #tpu.dot_dimension_numbers<[1], [0], [0], [1], [0, 0, 1, 1], [], []>} : vector<16x128xbf16>, vector<128x96xbf16>, vector<16x96xf32> -> vector<16x96xf32>
      %c0_21 = arith.constant 0 : index
      %c0_22 = arith.constant 0 : index
      %48 = vector.load %arg5[%c0_21, %c0_22] : memref<1x96xf32, #tpu.memory_space<vmem>>, vector<1x96xf32>
      %49 = vector.broadcast %48 : vector<1x96xf32> to vector<16x96xf32>
      %50 = arith.addf %47, %49 : vector<16x96xf32>
      %51 = arith.truncf %50 : vector<16x96xf32> to vector<16x96xbf16>
      %52 = vector.extract_strided_slice %51 {offsets = [0, 0], sizes = [16, 8], strides = [1, 1]} : vector<16x96xbf16> to vector<16x8xbf16>
      %c0_23 = arith.constant 0 : index
      %c0_24 = arith.constant 0 : index
      %c0_25 = arith.constant 0 : index
      %53 = vector.load %arg19[%c0_23, %c0_24, %c0_25] : memref<4x16x8xbf16, #tpu.memory_space<vmem>>, vector<1x16x8xbf16>
      %54 = vector.shape_cast %53 : vector<1x16x8xbf16> to vector<16x8xbf16>
      %55 = vector.shape_cast %52 : vector<16x8xbf16> to vector<1x16x8xbf16>
      tpu.vector_store %arg19[%c0_23, %c0_24, %c0_25], %55 {strides = array<i32>} : memref<4x16x8xbf16, #tpu.memory_space<vmem>>, vector<1x16x8xbf16>,
      %56 = vector.extract_strided_slice %51 {offsets = [0, 32], sizes = [16, 8], strides = [1, 1]} : vector<16x96xbf16> to vector<16x8xbf16>
      %c0_26 = arith.constant 0 : index
      %c0_27 = arith.constant 0 : index
      %c0_28 = arith.constant 0 : index
      %57 = vector.load %arg20[%c0_26, %c0_27, %c0_28] : memref<4x16x8xbf16, #tpu.memory_space<vmem>>, vector<1x16x8xbf16>
      %58 = vector.shape_cast %57 : vector<1x16x8xbf16> to vector<16x8xbf16>
      %59 = vector.shape_cast %56 : vector<16x8xbf16> to vector<1x16x8xbf16>
      tpu.vector_store %arg20[%c0_26, %c0_27, %c0_28], %59 {strides = array<i32>} : memref<4x16x8xbf16, #tpu.memory_space<vmem>>, vector<1x16x8xbf16>,
      %60 = vector.extract_strided_slice %51 {offsets = [0, 64], sizes = [16, 8], strides = [1, 1]} : vector<16x96xbf16> to vector<16x8xbf16>
      %c0_29 = arith.constant 0 : index
      %c0_30 = arith.constant 0 : index
      %c0_31 = arith.constant 0 : index
      %61 = vector.load %arg21[%c0_29, %c0_30, %c0_31] : memref<4x16x8xbf16, #tpu.memory_space<vmem>>, vector<1x16x8xbf16>
      %62 = vector.shape_cast %61 : vector<1x16x8xbf16> to vector<16x8xbf16>
      %63 = vector.shape_cast %60 : vector<16x8xbf16> to vector<1x16x8xbf16>
      tpu.vector_store %arg21[%c0_29, %c0_30, %c0_31], %63 {strides = array<i32>} : memref<4x16x8xbf16, #tpu.memory_space<vmem>>, vector<1x16x8xbf16>,
      %64 = vector.extract_strided_slice %51 {offsets = [0, 8], sizes = [16, 8], strides = [1, 1]} : vector<16x96xbf16> to vector<16x8xbf16>
      %c1 = arith.constant 1 : index
      %c0_32 = arith.constant 0 : index
      %c0_33 = arith.constant 0 : index
      %65 = vector.load %arg19[%c1, %c0_32, %c0_33] : memref<4x16x8xbf16, #tpu.memory_space<vmem>>, vector<1x16x8xbf16>
      %66 = vector.shape_cast %65 : vector<1x16x8xbf16> to vector<16x8xbf16>
      %67 = vector.shape_cast %64 : vector<16x8xbf16> to vector<1x16x8xbf16>
      tpu.vector_store %arg19[%c1, %c0_32, %c0_33], %67 {strides = array<i32>} : memref<4x16x8xbf16, #tpu.memory_space<vmem>>, vector<1x16x8xbf16>,
      %68 = vector.extract_strided_slice %51 {offsets = [0, 40], sizes = [16, 8], strides = [1, 1]} : vector<16x96xbf16> to vector<16x8xbf16>
      %c1_34 = arith.constant 1 : index
      %c0_35 = arith.constant 0 : index
      %c0_36 = arith.constant 0 : index
      %69 = vector.load %arg20[%c1_34, %c0_35, %c0_36] : memref<4x16x8xbf16, #tpu.memory_space<vmem>>, vector<1x16x8xbf16>
      %70 = vector.shape_cast %69 : vector<1x16x8xbf16> to vector<16x8xbf16>
      %71 = vector.shape_cast %68 : vector<16x8xbf16> to vector<1x16x8xbf16>
      tpu.vector_store %arg20[%c1_34, %c0_35, %c0_36], %71 {strides = array<i32>} : memref<4x16x8xbf16, #tpu.memory_space<vmem>>, vector<1x16x8xbf16>,
      %72 = vector.extract_strided_slice %51 {offsets = [0, 72], sizes = [16, 8], strides = [1, 1]} : vector<16x96xbf16> to vector<16x8xbf16>
      %c1_37 = arith.constant 1 : index
      %c0_38 = arith.constant 0 : index
      %c0_39 = arith.constant 0 : index
      %73 = vector.load %arg21[%c1_37, %c0_38, %c0_39] : memref<4x16x8xbf16, #tpu.memory_space<vmem>>, vector<1x16x8xbf16>
      %74 = vector.shape_cast %73 : vector<1x16x8xbf16> to vector<16x8xbf16>
      %75 = vector.shape_cast %72 : vector<16x8xbf16> to vector<1x16x8xbf16>
      tpu.vector_store %arg21[%c1_37, %c0_38, %c0_39], %75 {strides = array<i32>} : memref<4x16x8xbf16, #tpu.memory_space<vmem>>, vector<1x16x8xbf16>,
      %76 = vector.extract_strided_slice %51 {offsets = [0, 16], sizes = [16, 8], strides = [1, 1]} : vector<16x96xbf16> to vector<16x8xbf16>
      %c2 = arith.constant 2 : index
      %c0_40 = arith.constant 0 : index
      %c0_41 = arith.constant 0 : index
      %77 = vector.load %arg19[%c2, %c0_40, %c0_41] : memref<4x16x8xbf16, #tpu.memory_space<vmem>>, vector<1x16x8xbf16>
      %78 = vector.shape_cast %77 : vector<1x16x8xbf16> to vector<16x8xbf16>
      %79 = vector.shape_cast %76 : vector<16x8xbf16> to vector<1x16x8xbf16>
      tpu.vector_store %arg19[%c2, %c0_40, %c0_41], %79 {strides = array<i32>} : memref<4x16x8xbf16, #tpu.memory_space<vmem>>, vector<1x16x8xbf16>,
      %80 = vector.extract_strided_slice %51 {offsets = [0, 48], sizes = [16, 8], strides = [1, 1]} : vector<16x96xbf16> to vector<16x8xbf16>
      %c2_42 = arith.constant 2 : index
      %c0_43 = arith.constant 0 : index
      %c0_44 = arith.constant 0 : index
      %81 = vector.load %arg20[%c2_42, %c0_43, %c0_44] : memref<4x16x8xbf16, #tpu.memory_space<vmem>>, vector<1x16x8xbf16>
      %82 = vector.shape_cast %81 : vector<1x16x8xbf16> to vector<16x8xbf16>
      %83 = vector.shape_cast %80 : vector<16x8xbf16> to vector<1x16x8xbf16>
      tpu.vector_store %arg20[%c2_42, %c0_43, %c0_44], %83 {strides = array<i32>} : memref<4x16x8xbf16, #tpu.memory_space<vmem>>, vector<1x16x8xbf16>,
      %84 = vector.extract_strided_slice %51 {offsets = [0, 80], sizes = [16, 8], strides = [1, 1]} : vector<16x96xbf16> to vector<16x8xbf16>
      %c2_45 = arith.constant 2 : index
      %c0_46 = arith.constant 0 : index
      %c0_47 = arith.constant 0 : index
      %85 = vector.load %arg21[%c2_45, %c0_46, %c0_47] : memref<4x16x8xbf16, #tpu.memory_space<vmem>>, vector<1x16x8xbf16>
      %86 = vector.shape_cast %85 : vector<1x16x8xbf16> to vector<16x8xbf16>
      %87 = vector.shape_cast %84 : vector<16x8xbf16> to vector<1x16x8xbf16>
      tpu.vector_store %arg21[%c2_45, %c0_46, %c0_47], %87 {strides = array<i32>} : memref<4x16x8xbf16, #tpu.memory_space<vmem>>, vector<1x16x8xbf16>,
      %88 = vector.extract_strided_slice %51 {offsets = [0, 24], sizes = [16, 8], strides = [1, 1]} : vector<16x96xbf16> to vector<16x8xbf16>
      %c3 = arith.constant 3 : index
      %c0_48 = arith.constant 0 : index
      %c0_49 = arith.constant 0 : index
      %89 = vector.load %arg19[%c3, %c0_48, %c0_49] : memref<4x16x8xbf16, #tpu.memory_space<vmem>>, vector<1x16x8xbf16>
      %90 = vector.shape_cast %89 : vector<1x16x8xbf16> to vector<16x8xbf16>
      %91 = vector.shape_cast %88 : vector<16x8xbf16> to vector<1x16x8xbf16>
      tpu.vector_store %arg19[%c3, %c0_48, %c0_49], %91 {strides = array<i32>} : memref<4x16x8xbf16, #tpu.memory_space<vmem>>, vector<1x16x8xbf16>,
      %92 = vector.extract_strided_slice %51 {offsets = [0, 56], sizes = [16, 8], strides = [1, 1]} : vector<16x96xbf16> to vector<16x8xbf16>
      %c3_50 = arith.constant 3 : index
      %c0_51 = arith.constant 0 : index
      %c0_52 = arith.constant 0 : index
      %93 = vector.load %arg20[%c3_50, %c0_51, %c0_52] : memref<4x16x8xbf16, #tpu.memory_space<vmem>>, vector<1x16x8xbf16>
      %94 = vector.shape_cast %93 : vector<1x16x8xbf16> to vector<16x8xbf16>
      %95 = vector.shape_cast %92 : vector<16x8xbf16> to vector<1x16x8xbf16>
      tpu.vector_store %arg20[%c3_50, %c0_51, %c0_52], %95 {strides = array<i32>} : memref<4x16x8xbf16, #tpu.memory_space<vmem>>, vector<1x16x8xbf16>,
      %96 = vector.extract_strided_slice %51 {offsets = [0, 88], sizes = [16, 8], strides = [1, 1]} : vector<16x96xbf16> to vector<16x8xbf16>
      %c3_53 = arith.constant 3 : index
      %c0_54 = arith.constant 0 : index
      %c0_55 = arith.constant 0 : index
      %97 = vector.load %arg21[%c3_53, %c0_54, %c0_55] : memref<4x16x8xbf16, #tpu.memory_space<vmem>>, vector<1x16x8xbf16>
      %98 = vector.shape_cast %97 : vector<1x16x8xbf16> to vector<16x8xbf16>
      %99 = vector.shape_cast %96 : vector<16x8xbf16> to vector<1x16x8xbf16>
      tpu.vector_store %arg21[%c3_53, %c0_54, %c0_55], %99 {strides = array<i32>} : memref<4x16x8xbf16, #tpu.memory_space<vmem>>, vector<1x16x8xbf16>,
    } else {
    }
    %3 = arith.index_cast %arg1 : i32 to index
    %c0 = arith.constant 0 : index
    %c0_1 = arith.constant 0 : index
    %4 = vector.load %arg19[%3, %c0, %c0_1] : memref<4x16x8xbf16, #tpu.memory_space<vmem>>, vector<1x16x8xbf16>
    %5 = vector.shape_cast %4 : vector<1x16x8xbf16> to vector<16x8xbf16>
    %6 = vector.shape_cast %5 : vector<16x8xbf16> to vector<2x8x8xbf16>
    %7 = arith.index_cast %arg1 : i32 to index
    %c0_2 = arith.constant 0 : index
    %c0_3 = arith.constant 0 : index
    %8 = vector.load %arg20[%7, %c0_2, %c0_3] : memref<4x16x8xbf16, #tpu.memory_space<vmem>>, vector<1x16x8xbf16>
    %9 = vector.shape_cast %8 : vector<1x16x8xbf16> to vector<16x8xbf16>
    %10 = vector.shape_cast %9 : vector<16x8xbf16> to vector<2x8x8xbf16>
    %11 = arith.index_cast %arg1 : i32 to index
    %c0_4 = arith.constant 0 : index
    %c0_5 = arith.constant 0 : index
    %12 = vector.load %arg21[%11, %c0_4, %c0_5] : memref<4x16x8xbf16, #tpu.memory_space<vmem>>, vector<1x16x8xbf16>
    %13 = vector.shape_cast %12 : vector<1x16x8xbf16> to vector<16x8xbf16>
    %14 = vector.shape_cast %13 : vector<16x8xbf16> to vector<2x8x8xbf16>
    "tpu.trace_start"() <{level = 10 : i32, message = "bqd,bkd->bqk"}> : () -> ()
    %cst = arith.constant dense<0.000000e+00> : vector<2x8x8xf32>
    %15 = tpu.matmul %6, %10, %cst {dimension_numbers = #tpu.dot_dimension_numbers<[2], [2], [1], [1], [0, 0, 0, 1, 1, 1], [0], [0]>} : vector<2x8x8xbf16>, vector<2x8x8xbf16>, vector<2x8x8xf32> -> vector<2x8x8xf32>
    "tpu.trace_stop"() : () -> ()
    %c0_6 = arith.constant 0 : index
    %c0_7 = arith.constant 0 : index
    %c0_8 = arith.constant 0 : index
    %16 = vector.load %arg3[%c0_6, %c0_7, %c0_8] : memref<1x8x8xbf16, #tpu.memory_space<vmem>>, vector<1x8x8xbf16>
    %17 = vector.shape_cast %16 : vector<1x8x8xbf16> to vector<8x8xbf16>
    %18 = arith.extf %17 : vector<8x8xbf16> to vector<8x8xf32>
    %19 = vector.shape_cast %18 : vector<8x8xf32> to vector<1x8x8xf32>
    %20 = vector.broadcast %19 : vector<1x8x8xf32> to vector<2x8x8xf32>
    %21 = arith.addf %15, %20 : vector<2x8x8xf32>
    %cst_9 = arith.constant dense<0xFF800000> : vector<2x8xf32>
    %22 = vector.multi_reduction <maximumf>, %21, %cst_9 [2] : vector<2x8x8xf32> to vector<2x8xf32>
    %23 = vector.shape_cast %22 : vector<2x8xf32> to vector<2x8x1xf32>
    %24 = vector.broadcast %23 : vector<2x8x1xf32> to vector<2x8x8xf32>
    %25 = arith.subf %21, %24 : vector<2x8x8xf32>
    %26 = math.exp %25 : vector<2x8x8xf32>
    %cst_10 = arith.constant dense<0.000000e+00> : vector<2x8xf32>
    %27 = vector.multi_reduction <add>, %26, %cst_10 [2] : vector<2x8x8xf32> to vector<2x8xf32>
    %28 = vector.shape_cast %27 : vector<2x8xf32> to vector<2x8x1xf32>
    %29 = tpu.reciprocal %28 {approx = true} : vector<2x8x1xf32> -> vector<2x8x1xf32>
    %30 = vector.broadcast %29 : vector<2x8x1xf32> to vector<2x8x8xf32>
    %31 = arith.mulf %26, %30 : vector<2x8x8xf32>
    %32 = arith.truncf %31 : vector<2x8x8xf32> to vector<2x8x8xbf16>
    "tpu.trace_start"() <{level = 10 : i32, message = "bqk,bkd->bqd"}> : () -> ()
    %cst_11 = arith.constant dense<0.000000e+00> : vector<2x8x8xf32>
    %33 = tpu.matmul %32, %14, %cst_11 {dimension_numbers = #tpu.dot_dimension_numbers<[2], [1], [1], [2], [0, 0, 0, 1, 1, 2], [0], [0]>} : vector<2x8x8xbf16>, vector<2x8x8xbf16>, vector<2x8x8xf32> -> vector<2x8x8xf32>
    "tpu.trace_stop"() : () -> ()
    %34 = vector.shape_cast %33 : vector<2x8x8xf32> to vector<16x8xf32>
    %35 = arith.truncf %34 : vector<16x8xf32> to vector<16x8xbf16>
    %36 = arith.index_cast %arg1 : i32 to index
    %c0_12 = arith.constant 0 : index
    %c0_13 = arith.constant 0 : index
    %37 = vector.load %arg22[%36, %c0_12, %c0_13] : memref<4x16x8xbf16, #tpu.memory_space<vmem>>, vector<1x16x8xbf16>
    %38 = vector.shape_cast %37 : vector<1x16x8xbf16> to vector<16x8xbf16>
    %39 = vector.shape_cast %35 : vector<16x8xbf16> to vector<1x16x8xbf16>
    tpu.vector_store %arg22[%36, %c0_12, %c0_13], %39 {strides = array<i32>} : memref<4x16x8xbf16, #tpu.memory_space<vmem>>, vector<1x16x8xbf16>,
    %c3_i32 = arith.constant 3 : i32
    %40 = arith.cmpi eq, %arg1, %c3_i32 : i32
    %41 = arith.extui %40 : i1 to i32
    %c0_i32_14 = arith.constant 0 : i32
    %42 = arith.cmpi ne, %41, %c0_i32_14 : i32
    scf.if %42 {
      %c0_15 = arith.constant 0 : index
      %c0_16 = arith.constant 0 : index
      %c0_17 = arith.constant 0 : index
      %43 = vector.load %arg22[%c0_15, %c0_16, %c0_17] : memref<4x16x8xbf16, #tpu.memory_space<vmem>>, vector<1x16x8xbf16>
      %44 = vector.shape_cast %43 : vector<1x16x8xbf16> to vector<16x8xbf16>
      %c1 = arith.constant 1 : index
      %c0_18 = arith.constant 0 : index
      %c0_19 = arith.constant 0 : index
      %45 = vector.load %arg22[%c1, %c0_18, %c0_19] : memref<4x16x8xbf16, #tpu.memory_space<vmem>>, vector<1x16x8xbf16>
      %46 = vector.shape_cast %45 : vector<1x16x8xbf16> to vector<16x8xbf16>
      %c2 = arith.constant 2 : index
      %c0_20 = arith.constant 0 : index
      %c0_21 = arith.constant 0 : index
      %47 = vector.load %arg22[%c2, %c0_20, %c0_21] : memref<4x16x8xbf16, #tpu.memory_space<vmem>>, vector<1x16x8xbf16>
      %48 = vector.shape_cast %47 : vector<1x16x8xbf16> to vector<16x8xbf16>
      %c3 = arith.constant 3 : index
      %c0_22 = arith.constant 0 : index
      %c0_23 = arith.constant 0 : index
      %49 = vector.load %arg22[%c3, %c0_22, %c0_23] : memref<4x16x8xbf16, #tpu.memory_space<vmem>>, vector<1x16x8xbf16>
      %50 = vector.shape_cast %49 : vector<1x16x8xbf16> to vector<16x8xbf16>
      %51 = tpu.concatenate %44, %46, %48, %50 in 1 : vector<16x8xbf16>, vector<16x8xbf16>, vector<16x8xbf16>, vector<16x8xbf16> -> vector<16x32xbf16>
      %c0_24 = arith.constant 0 : index
      %c0_25 = arith.constant 0 : index
      %52 = vector.load %arg6[%c0_24, %c0_25] : memref<32x128xbf16, #tpu.memory_space<vmem>>, vector<32x128xbf16>
      %cst_26 = arith.constant dense<0.000000e+00> : vector<16x128xf32>
      %53 = tpu.matmul %51, %52, %cst_26 {dimension_numbers = #tpu.dot_dimension_numbers<[1], [0], [0], [1], [0, 0, 1, 1], [], []>} : vector<16x32xbf16>, vector<32x128xbf16>, vector<16x128xf32> -> vector<16x128xf32>
      %c0_27 = arith.constant 0 : index
      %c0_28 = arith.constant 0 : index
      %54 = vector.load %arg7[%c0_27, %c0_28] : memref<1x128xf32, #tpu.memory_space<vmem>>, vector<1x128xf32>
      %55 = vector.broadcast %54 : vector<1x128xf32> to vector<16x128xf32>
      %56 = arith.addf %53, %55 : vector<16x128xf32>
      %c0_29 = arith.constant 0 : index
      %c0_30 = arith.constant 0 : index
      %c0_31 = arith.constant 0 : index
      %57 = vector.load %arg2[%c0_29, %c0_30, %c0_31] : memref<2x8x128xf32, #tpu.memory_space<vmem>>, vector<2x8x128xf32>
      %58 = vector.shape_cast %57 : vector<2x8x128xf32> to vector<16x128xf32>
      %59 = tpu.iota {dimensions = array<i32: 1>} : vector<16x128xi32>
      %c32_i32 = arith.constant 32 : i32
      %60 = vector.broadcast %c32_i32 : i32 to vector<16x128xi32>
      %61 = arith.cmpi slt, %59, %60 : vector<16x128xi32>
      %62 = arith.addf %58, %56 : vector<16x128xf32>
      %c0_32 = arith.constant 0 : index
      %c0_33 = arith.constant 0 : index
      %63 = vector.load %arg14[%c0_32, %c0_33] : memref<1x128xf32, #tpu.memory_space<vmem>>, vector<1x128xf32>
      %c0_34 = arith.constant 0 : index
      %c0_35 = arith.constant 0 : index
      %64 = vector.load %arg15[%c0_34, %c0_35] : memref<1x128xf32, #tpu.memory_space<vmem>>, vector<1x128xf32>
      %cst_36 = arith.constant dense<0.000000e+00> : vector<16xf32>
      %65 = vector.multi_reduction <add>, %62, %cst_36 [1] : vector<16x128xf32> to vector<16xf32>
      %66 = vector.shape_cast %65 : vector<16xf32> to vector<16x1xf32>
      %cst_37 = arith.constant 3.125000e-02 : f32
      %67 = vector.broadcast %cst_37 : f32 to vector<16x1xf32>
      %68 = arith.mulf %66, %67 : vector<16x1xf32>
      %69 = vector.broadcast %68 : vector<16x1xf32> to vector<16x128xf32>
      %70 = arith.subf %62, %69 : vector<16x128xf32>
      %cst_38 = arith.constant 0.000000e+00 : f32
      %71 = vector.broadcast %cst_38 : f32 to vector<16x128xf32>
      %72 = arith.select %61, %70, %71 : vector<16x128xi1>, vector<16x128xf32>
      %73 = arith.mulf %72, %72 : vector<16x128xf32>
      %cst_39 = arith.constant dense<0.000000e+00> : vector<16xf32>
      %74 = vector.multi_reduction <add>, %73, %cst_39 [1] : vector<16x128xf32> to vector<16xf32>
      %75 = vector.shape_cast %74 : vector<16xf32> to vector<16x1xf32>
      %cst_40 = arith.constant 3.125000e-02 : f32
      %76 = vector.broadcast %cst_40 : f32 to vector<16x1xf32>
      %77 = arith.mulf %75, %76 : vector<16x1xf32>
      %cst_41 = arith.constant 9.99999974E-6 : f32
      %78 = vector.broadcast %cst_41 : f32 to vector<16x1xf32>
      %79 = arith.addf %77, %78 : vector<16x1xf32>
      %80 = math.rsqrt %79 : vector<16x1xf32>
      %81 = vector.broadcast %80 : vector<16x1xf32> to vector<16x128xf32>
      %82 = arith.mulf %72, %81 : vector<16x128xf32>
      %83 = vector.broadcast %63 : vector<1x128xf32> to vector<16x128xf32>
      %84 = arith.mulf %82, %83 : vector<16x128xf32>
      %85 = vector.broadcast %64 : vector<1x128xf32> to vector<16x128xf32>
      %86 = arith.addf %84, %85 : vector<16x128xf32>
      %87 = arith.truncf %86 : vector<16x128xf32> to vector<16x128xbf16>
      %c0_42 = arith.constant 0 : index
      %c0_43 = arith.constant 0 : index
      %88 = vector.load %arg8[%c0_42, %c0_43] : memref<128x128xbf16, #tpu.memory_space<vmem>>, vector<128x128xbf16>
      %cst_44 = arith.constant dense<0.000000e+00> : vector<16x128xf32>
      %89 = tpu.matmul %87, %88, %cst_44 {dimension_numbers = #tpu.dot_dimension_numbers<[1], [0], [0], [1], [0, 0, 1, 1], [], []>} : vector<16x128xbf16>, vector<128x128xbf16>, vector<16x128xf32> -> vector<16x128xf32>
      %c0_45 = arith.constant 0 : index
      %c0_46 = arith.constant 0 : index
      %90 = vector.load %arg9[%c0_45, %c0_46] : memref<1x128xf32, #tpu.memory_space<vmem>>, vector<1x128xf32>
      %91 = vector.broadcast %90 : vector<1x128xf32> to vector<16x128xf32>
      %92 = arith.addf %89, %91 : vector<16x128xf32>
      %93 = arith.negf %92 : vector<16x128xf32>
      %94 = math.exp %93 : vector<16x128xf32>
      %cst_47 = arith.constant 1.000000e+00 : f32
      %95 = vector.broadcast %cst_47 : f32 to vector<16x128xf32>
      %96 = arith.addf %95, %94 : vector<16x128xf32>
      %97 = arith.divf %95, %96 : vector<16x128xf32>
      %98 = arith.mulf %86, %97 : vector<16x128xf32>
      %99 = arith.truncf %98 : vector<16x128xf32> to vector<16x128xbf16>
      %c0_48 = arith.constant 0 : index
      %c0_49 = arith.constant 0 : index
      %100 = vector.load %arg10[%c0_48, %c0_49] : memref<128x128xbf16, #tpu.memory_space<vmem>>, vector<128x128xbf16>
      %cst_50 = arith.constant dense<0.000000e+00> : vector<16x128xf32>
      %101 = tpu.matmul %99, %100, %cst_50 {dimension_numbers = #tpu.dot_dimension_numbers<[1], [0], [0], [1], [0, 0, 1, 1], [], []>} : vector<16x128xbf16>, vector<128x128xbf16>, vector<16x128xf32> -> vector<16x128xf32>
      %c0_51 = arith.constant 0 : index
      %c0_52 = arith.constant 0 : index
      %102 = vector.load %arg11[%c0_51, %c0_52] : memref<1x128xf32, #tpu.memory_space<vmem>>, vector<1x128xf32>
      %103 = vector.broadcast %102 : vector<1x128xf32> to vector<16x128xf32>
      %104 = arith.addf %101, %103 : vector<16x128xf32>
      %cst_53 = arith.constant 0.000000e+00 : f32
      %105 = vector.broadcast %cst_53 : f32 to vector<16x128xf32>
      %106 = arith.maximumf %104, %105 : vector<16x128xf32>
      %107 = arith.truncf %106 : vector<16x128xf32> to vector<16x128xbf16>
      %c0_54 = arith.constant 0 : index
      %c0_55 = arith.constant 0 : index
      %108 = vector.load %arg12[%c0_54, %c0_55] : memref<128x128xbf16, #tpu.memory_space<vmem>>, vector<128x128xbf16>
      %cst_56 = arith.constant dense<0.000000e+00> : vector<16x128xf32>
      %109 = tpu.matmul %107, %108, %cst_56 {dimension_numbers = #tpu.dot_dimension_numbers<[1], [0], [0], [1], [0, 0, 1, 1], [], []>} : vector<16x128xbf16>, vector<128x128xbf16>, vector<16x128xf32> -> vector<16x128xf32>
      %c0_57 = arith.constant 0 : index
      %c0_58 = arith.constant 0 : index
      %110 = vector.load %arg13[%c0_57, %c0_58] : memref<1x128xf32, #tpu.memory_space<vmem>>, vector<1x128xf32>
      %111 = vector.broadcast %110 : vector<1x128xf32> to vector<16x128xf32>
      %112 = arith.addf %109, %111 : vector<16x128xf32>
      %113 = arith.addf %98, %112 : vector<16x128xf32>
      %c0_59 = arith.constant 0 : index
      %c0_60 = arith.constant 0 : index
      %114 = vector.load %arg16[%c0_59, %c0_60] : memref<1x128xf32, #tpu.memory_space<vmem>>, vector<1x128xf32>
      %c0_61 = arith.constant 0 : index
      %c0_62 = arith.constant 0 : index
      %115 = vector.load %arg17[%c0_61, %c0_62] : memref<1x128xf32, #tpu.memory_space<vmem>>, vector<1x128xf32>
      %cst_63 = arith.constant dense<0.000000e+00> : vector<16xf32>
      %116 = vector.multi_reduction <add>, %113, %cst_63 [1] : vector<16x128xf32> to vector<16xf32>
      %117 = vector.shape_cast %116 : vector<16xf32> to vector<16x1xf32>
      %cst_64 = arith.constant 3.125000e-02 : f32
      %118 = vector.broadcast %cst_64 : f32 to vector<16x1xf32>
      %119 = arith.mulf %117, %118 : vector<16x1xf32>
      %120 = vector.broadcast %119 : vector<16x1xf32> to vector<16x128xf32>
      %121 = arith.subf %113, %120 : vector<16x128xf32>
      %cst_65 = arith.constant 0.000000e+00 : f32
      %122 = vector.broadcast %cst_65 : f32 to vector<16x128xf32>
      %123 = arith.select %61, %121, %122 : vector<16x128xi1>, vector<16x128xf32>
      %124 = arith.mulf %123, %123 : vector<16x128xf32>
      %cst_66 = arith.constant dense<0.000000e+00> : vector<16xf32>
      %125 = vector.multi_reduction <add>, %124, %cst_66 [1] : vector<16x128xf32> to vector<16xf32>
      %126 = vector.shape_cast %125 : vector<16xf32> to vector<16x1xf32>
      %cst_67 = arith.constant 3.125000e-02 : f32
      %127 = vector.broadcast %cst_67 : f32 to vector<16x1xf32>
      %128 = arith.mulf %126, %127 : vector<16x1xf32>
      %cst_68 = arith.constant 9.99999974E-6 : f32
      %129 = vector.broadcast %cst_68 : f32 to vector<16x1xf32>
      %130 = arith.addf %128, %129 : vector<16x1xf32>
      %131 = math.rsqrt %130 : vector<16x1xf32>
      %132 = vector.broadcast %131 : vector<16x1xf32> to vector<16x128xf32>
      %133 = arith.mulf %123, %132 : vector<16x128xf32>
      %134 = vector.broadcast %114 : vector<1x128xf32> to vector<16x128xf32>
      %135 = arith.mulf %133, %134 : vector<16x128xf32>
      %136 = vector.broadcast %115 : vector<1x128xf32> to vector<16x128xf32>
      %137 = arith.addf %135, %136 : vector<16x128xf32>
      %138 = vector.shape_cast %137 : vector<16x128xf32> to vector<2x8x128xf32>
      %c0_69 = arith.constant 0 : index
      %c0_70 = arith.constant 0 : index
      %c0_71 = arith.constant 0 : index
      %139 = vector.load %arg18[%c0_69, %c0_70, %c0_71] : memref<2x8x128xf32, #tpu.memory_space<vmem>>, vector<2x8x128xf32>
      tpu.vector_store %arg18[%c0_69, %c0_70, %c0_71], %138 {strides = array<i32>} : memref<2x8x128xf32, #tpu.memory_space<vmem>>, vector<2x8x128xf32>,
    } else {
    }
    return
  }
  func.func @transform_0(%arg0: i32, %arg1: i32) -> (i32, i32, i32) {
    %c0_i32 = arith.constant 0 : i32
    %c0_i32_0 = arith.constant 0 : i32
    %c0_i32_1 = arith.constant 0 : i32
    return %arg0, %c0_i32, %c0_i32_0 : i32, i32, i32
  }
  func.func @transform_1(%arg0: i32, %arg1: i32) -> (i32, i32, i32) {
    %c0_i32 = arith.constant 0 : i32
    %c0_i32_0 = arith.constant 0 : i32
    %c0_i32_1 = arith.constant 0 : i32
    return %arg1, %c0_i32, %c0_i32_0 : i32, i32, i32
  }
  func.func @transform_2(%arg0: i32, %arg1: i32) -> (i32, i32) {
    %c0_i32 = arith.constant 0 : i32
    %c0_i32_0 = arith.constant 0 : i32
    %c0_i32_1 = arith.constant 0 : i32
    return %c0_i32, %c0_i32_0 : i32, i32
  }
  func.func @transform_3(%arg0: i32, %arg1: i32) -> (i32, i32) {
    %c0_i32 = arith.constant 0 : i32
    %c0_i32_0 = arith.constant 0 : i32
    %c0_i32_1 = arith.constant 0 : i32
    return %c0_i32, %c0_i32_0 : i32, i32
  }
  func.func @transform_4(%arg0: i32, %arg1: i32) -> (i32, i32) {
    %c0_i32 = arith.constant 0 : i32
    %c0_i32_0 = arith.constant 0 : i32
    %c0_i32_1 = arith.constant 0 : i32
    return %c0_i32, %c0_i32_0 : i32, i32
  }
  func.func @transform_5(%arg0: i32, %arg1: i32) -> (i32, i32) {
    %c0_i32 = arith.constant 0 : i32
    %c0_i32_0 = arith.constant 0 : i32
    %c0_i32_1 = arith.constant 0 : i32
    return %c0_i32, %c0_i32_0 : i32, i32
  }
  func.func @transform_6(%arg0: i32, %arg1: i32) -> (i32, i32) {
    %c0_i32 = arith.constant 0 : i32
    %c0_i32_0 = arith.constant 0 : i32
    %c0_i32_1 = arith.constant 0 : i32
    return %c0_i32, %c0_i32_0 : i32, i32
  }
  func.func @transform_7(%arg0: i32, %arg1: i32) -> (i32, i32) {
    %c0_i32 = arith.constant 0 : i32
    %c0_i32_0 = arith.constant 0 : i32
    %c0_i32_1 = arith.constant 0 : i32
    return %c0_i32, %c0_i32_0 : i32, i32
  }
  func.func @transform_8(%arg0: i32, %arg1: i32) -> (i32, i32) {
    %c0_i32 = arith.constant 0 : i32
    %c0_i32_0 = arith.constant 0 : i32
    %c0_i32_1 = arith.constant 0 : i32
    return %c0_i32, %c0_i32_0 : i32, i32
  }
  func.func @transform_9(%arg0: i32, %arg1: i32) -> (i32, i32) {
    %c0_i32 = arith.constant 0 : i32
    %c0_i32_0 = arith.constant 0 : i32
    %c0_i32_1 = arith.constant 0 : i32
    return %c0_i32, %c0_i32_0 : i32, i32
  }
  func.func @transform_10(%arg0: i32, %arg1: i32) -> (i32, i32) {
    %c0_i32 = arith.constant 0 : i32
    %c0_i32_0 = arith.constant 0 : i32
    %c0_i32_1 = arith.constant 0 : i32
    return %c0_i32, %c0_i32_0 : i32, i32
  }
  func.func @transform_11(%arg0: i32, %arg1: i32) -> (i32, i32) {
    %c0_i32 = arith.constant 0 : i32
    %c0_i32_0 = arith.constant 0 : i32
    %c0_i32_1 = arith.constant 0 : i32
    return %c0_i32, %c0_i32_0 : i32, i32
  }
  func.func @transform_12(%arg0: i32, %arg1: i32) -> (i32, i32) {
    %c0_i32 = arith.constant 0 : i32
    %c0_i32_0 = arith.constant 0 : i32
    %c0_i32_1 = arith.constant 0 : i32
    return %c0_i32, %c0_i32_0 : i32, i32
  }
  func.func @transform_13(%arg0: i32, %arg1: i32) -> (i32, i32) {
    %c0_i32 = arith.constant 0 : i32
    %c0_i32_0 = arith.constant 0 : i32
    %c0_i32_1 = arith.constant 0 : i32
    return %c0_i32, %c0_i32_0 : i32, i32
  }
  func.func @transform_14(%arg0: i32, %arg1: i32) -> (i32, i32) {
    %c0_i32 = arith.constant 0 : i32
    %c0_i32_0 = arith.constant 0 : i32
    %c0_i32_1 = arith.constant 0 : i32
    return %c0_i32, %c0_i32_0 : i32, i32
  }
  func.func @transform_15(%arg0: i32, %arg1: i32) -> (i32, i32) {
    %c0_i32 = arith.constant 0 : i32
    %c0_i32_0 = arith.constant 0 : i32
    %c0_i32_1 = arith.constant 0 : i32
    return %c0_i32, %c0_i32_0 : i32, i32
  }
  func.func @transform_16(%arg0: i32, %arg1: i32) -> (i32, i32, i32) {
    %c0_i32 = arith.constant 0 : i32
    %c0_i32_0 = arith.constant 0 : i32
    %c0_i32_1 = arith.constant 0 : i32
    return %arg0, %c0_i32, %c0_i32_0 : i32, i32, i32
  }
}

</mosaic_0001>

<llo_original>
// kernel: tpu_custom_call.1
$region0: #{tpu_custom_call.1}
  #allocation0 [shape = 'u32[]', space=smem, size = 0x4, offset = 0x4, fixed_abs, tag = 'smem constant byte address 0x4 - core index']
  #allocation1 [shape = 'u32[144,128]{1,0:T(1,128)}', space=vmem, size = 0x12000, scoped, tag = 'internal scratch']
  #allocation2 [shape = 'bf16[4,16,8]{2,1,0:T(16,128)(2,1)}', space=vmem, size = 0x4000, scoped, tag = 'scratch operand']
  #allocation3 [shape = 'bf16[4,16,8]{2,1,0:T(16,128)(2,1)}', space=vmem, size = 0x4000, scoped, tag = 'scratch operand']
  #allocation4 [shape = 'bf16[4,16,8]{2,1,0:T(16,128)(2,1)}', space=vmem, size = 0x4000, scoped, tag = 'scratch operand']
  #allocation5 [shape = 'bf16[4,16,8]{2,1,0:T(16,128)(2,1)}', space=vmem, size = 0x4000, scoped, tag = 'scratch operand']
  %s0 = inlined_call_operand.hbm [shape: f32[2,8,128], index: 0, kind: input, shape index: {}]
  %s1 = inlined_call_operand.hbm [shape: bf16[4,8,8], index: 1, kind: input, shape index: {}]
  %s2 = inlined_call_operand.vmem [shape: bf16[128,96], index: 2, kind: input, shape index: {}]
  %s3 = inlined_call_operand.vmem [shape: f32[1,96], index: 3, kind: input, shape index: {}]
  %s4 = inlined_call_operand.hbm [shape: bf16[32,128], index: 4, kind: input, shape index: {}]
  %s5 = inlined_call_operand.vmem [shape: f32[1,128], index: 5, kind: input, shape index: {}]
  %s6 = inlined_call_operand.vmem [shape: bf16[128,128], index: 6, kind: input, shape index: {}]
  %s7 = inlined_call_operand.vmem [shape: f32[1,128], index: 7, kind: input, shape index: {}]
  %s8 = inlined_call_operand.vmem [shape: bf16[128,128], index: 8, kind: input, shape index: {}]
  %s9 = inlined_call_operand.vmem [shape: f32[1,128], index: 9, kind: input, shape index: {}]
  %s10 = inlined_call_operand.hbm [shape: bf16[128,128], index: 10, kind: input, shape index: {}]
  %s11 = inlined_call_operand.vmem [shape: f32[1,128], index: 11, kind: input, shape index: {}]
  %s12 = inlined_call_operand.vmem [shape: f32[1,128], index: 12, kind: input, shape index: {}]
  %s13 = inlined_call_operand.vmem [shape: f32[1,128], index: 13, kind: input, shape index: {}]
  %s14 = inlined_call_operand.vmem [shape: f32[1,128], index: 14, kind: input, shape index: {}]
  %s15 = inlined_call_operand.vmem [shape: f32[1,128], index: 15, kind: input, shape index: {}]
  %s16 = inlined_call_operand.hbm [shape: f32[2,8,128], index: 16, kind: output, shape index: {}]
  %s17 = sld [smem:[#allocation0]]
  $region121: #{tpu_custom_call.1} parent=0
    _
  %s19 = ssub.s32 1, %s17
  %s20 = scalar_select 0, %s19, %s17
  $region1: #{tpu_custom_call.1} parent=0
    #allocation6 [shape = 'u8[8192]{0}', space=vmem, size = 0x2000, scoped, tag = 'input window, operand 0, single buffered']
    #allocation7 [shape = 's32[2]{0}', space=sflag, size = 0x8, scoped, tag = 'scoped memory for tpu_custom_call.1']
    #allocation8 [shape = 's32[2]{0}', space=sflag, size = 0x8, scoped, tag = 'scoped memory for tpu_custom_call.1']
    #allocation9 [shape = 'u8[4096]{0}', space=vmem, size = 0x1000, scoped, tag = 'input window, operand 1']
    #allocation10 [shape = 's32[2]{0}', space=sflag, size = 0x8, scoped, tag = 'scoped memory for tpu_custom_call.1']
    #allocation11 [shape = 'u8[8192]{0}', space=vmem, size = 0x2000, scoped, tag = 'input window, operand 4, single buffered']
    #allocation12 [shape = 'u8[32768]{0}', space=vmem, size = 0x8000, scoped, tag = 'input window, operand 10, single buffered']
    #allocation13 [shape = 's32[1]{0}', space=sflag, size = 0x4, scoped, tag = 'scoped memory for tpu_custom_call.1']
    #allocation14 [shape = 'u8[8192]{0}', space=vmem, size = 0x2000, scoped, tag = 'output window, operand 0, single buffered']
    %21 = vsyncpa [#allocation7], 0
    %22 = vsyncpa [#allocation10], 0
    %s23 = scalar_lea.sflag [#allocation10], 1
    %24 = vsyncpa %s23, 0
    %25 = vsyncpa [#allocation13], 0
    %26 = vsyncpa [#allocation8], 0
    loop: start=0, step=1, limit=6
    $region2: #{tpu_custom_call.1} parent=1 // loop_pre_header
      _
    $region3: #{tpu_custom_call.1} parent=1 // loop_header
      %s28 = sphi 0, %s32
      %p29 = scmp.ge.s32.totalorder %s28, 6
      %s35 = sphi 0, %s47
      %s36 = sphi 0, %s43
      %s37 = sphi 0, %s35
      %s38 = sphi 0, %s36
      %s39 = sphi 0, %s37
      %s40 = sphi 0, %s38
      %s50 = sphi 0, %s52
      %s53 = sphi 0, %s50
      %s54 = sphi 0, %s53
      %s70 = sphi 0, %s54
      %s76 = sphi 0, %s78
      %s79 = sphi 0, %s76
      %s80 = sphi 0, %s79
      %s96 = sphi 0, %s80
      %s100 = sphi 0, %s100
      %s102 = sphi 0, %s100
      %s103 = sphi 0, %s102
      %s117 = sphi 0, %s103
      %s121 = sphi 0, %s121
      %s123 = sphi 0, %s121
      %s124 = sphi 0, %s123
      %s138 = sphi 0, %s124
      %s142 = sphi 0, %s142
      %s144 = sphi 0, %s142
      %s145 = sphi 0, %s144
      %s159 = sphi 0, %s145
      %s163 = sphi 0, %s163
      %s165 = sphi 0, %s163
      %s166 = sphi 0, %s165
      %s180 = sphi 0, %s166
      %s184 = sphi 0, %s184
      %s186 = sphi 0, %s184
      %s187 = sphi 0, %s186
      %s201 = sphi 0, %s187
      %s205 = sphi 0, %s205
      %s207 = sphi 0, %s205
      %s208 = sphi 0, %s207
      %s222 = sphi 0, %s208
      %s226 = sphi 0, %s226
      %s228 = sphi 0, %s226
      %s229 = sphi 0, %s228
      %s243 = sphi 0, %s229
      %s247 = sphi 0, %s247
      %s249 = sphi 0, %s247
      %s250 = sphi 0, %s249
      %s264 = sphi 0, %s250
      %s268 = sphi 0, %s268
      %s270 = sphi 0, %s268
      %s271 = sphi 0, %s270
      %s285 = sphi 0, %s271
      %s289 = sphi 0, %s289
      %s291 = sphi 0, %s289
      %s292 = sphi 0, %s291
      %s306 = sphi 0, %s292
      %s310 = sphi 0, %s310
      %s312 = sphi 0, %s310
      %s313 = sphi 0, %s312
      %s327 = sphi 0, %s313
      %s331 = sphi 0, %s331
      %s333 = sphi 0, %s331
      %s334 = sphi 0, %s333
      %s348 = sphi 0, %s334
      %s352 = sphi 0, %s352
      %s354 = sphi 0, %s352
      %s355 = sphi 0, %s354
      %s369 = sphi 0, %s355
      %s373 = sphi 0, %s373
      %s375 = sphi 0, %s373
      %s376 = sphi 0, %s375
      %s390 = sphi 0, %s376
      %s396 = sphi 0, %s398
      %s399 = sphi 0, %s396
      %s400 = sphi 0, %s399
      %s416 = sphi 0, %s400
    $region4: #{tpu_custom_call.1} parent=1 // loop_header_branch
      %31 = sbr.rel (%p29) target = $region8
    $region5: #{tpu_custom_call.1} parent=1 // loop_body
      %s33 = ssub.s32 %s28, 1
      %s34 = ssub.s32 %s28, 2
      %s41 = sadd.s32 1, %s36
      %p42 = scmp.ge.s32.totalorder %s41, 4
      %s43 = scalar_select %p42, 0, %s41
      %s44 = sadd.s32 1, %s35
      %s45 = scalar_select %p42, %s44, %s35
      %p46 = scmp.ge.s32.totalorder %s45, 1
      %s47 = scalar_select %p46, 0, %s45
      %s48 = ssub.s32 %s35, %s47
      %p49 = scmp.eq.s32.totalorder %s48, 0
      %s51 = sadd.s32 %s50, 1
      %s52 = scalar_select %p49, %s50, %s51
      %p55 = pneg %p49
      %p56 = scmp.eq.s32.totalorder %s28, 3
      %p57 = por %p55, %p56
      %p58 = scmp.ne.s32.totalorder %s50, %s53
      %p59 = scmp.eq.s32.totalorder %s28, 0
      %p60 = por %p58, %p59
      %p61 = scmp.ne.s32.totalorder %s50, %s53
      %p62 = scmp.eq.s32.totalorder %s33, 3
      %p63 = por %p61, %p62
      %p64 = scmp.ne.s32.totalorder %s53, %s54
      %p65 = scmp.eq.s32.totalorder %s33, 0
      %p66 = por %p64, %p65
      %p67 = scmp.ne.s32.totalorder %s53, %s54
      %p68 = scmp.eq.s32.totalorder %s34, 3
      %p69 = por %p67, %p68
      %p71 = scmp.ne.s32.totalorder %s54, %s70
      %p72 = scmp.eq.s32.totalorder %s34, 0
      %p73 = por %p71, %p72
      %s74 = ssub.s32 %s36, %s43
      %p75 = scmp.eq.s32.totalorder %s74, 0
      %s77 = sadd.s32 %s76, 1
      %s78 = scalar_select %p75, %s76, %s77
      %p81 = pneg %p75
      %p82 = scmp.eq.s32.totalorder %s28, 3
      %p83 = por %p81, %p82
      %p84 = scmp.ne.s32.totalorder %s76, %s79
      %p85 = scmp.eq.s32.totalorder %s28, 0
      %p86 = por %p84, %p85
      %p87 = scmp.ne.s32.totalorder %s76, %s79
      %p88 = scmp.eq.s32.totalorder %s33, 3
      %p89 = por %p87, %p88
      %p90 = scmp.ne.s32.totalorder %s79, %s80
      %p91 = scmp.eq.s32.totalorder %s33, 0
      %p92 = por %p90, %p91
      %p93 = scmp.ne.s32.totalorder %s79, %s80
      %p94 = scmp.eq.s32.totalorder %s34, 3
      %p95 = por %p93, %p94
      %p97 = scmp.ne.s32.totalorder %s80, %s96
      %p98 = scmp.eq.s32.totalorder %s34, 0
      %p99 = por %p97, %p98
      %s101 = sadd.s32 %s100, 1
      %p104 = scmp.eq.s32.totalorder %s28, 3
      %p105 = scmp.ne.s32.totalorder %s100, %s102
      %p106 = scmp.eq.s32.totalorder %s28, 0
      %p107 = por %p105, %p106
      %p108 = scmp.ne.s32.totalorder %s100, %s102
      %p109 = scmp.eq.s32.totalorder %s33, 3
      %p110 = por %p108, %p109
      %p111 = scmp.ne.s32.totalorder %s102, %s103
      %p112 = scmp.eq.s32.totalorder %s33, 0
      %p113 = por %p111, %p112
      %p114 = scmp.ne.s32.totalorder %s102, %s103
      %p115 = scmp.eq.s32.totalorder %s34, 3
      %p116 = por %p114, %p115
      %p118 = scmp.ne.s32.totalorder %s103, %s117
      %p119 = scmp.eq.s32.totalorder %s34, 0
      %p120 = por %p118, %p119
      %s122 = sadd.s32 %s121, 1
      %p125 = scmp.eq.s32.totalorder %s28, 3
      %p126 = scmp.ne.s32.totalorder %s121, %s123
      %p127 = scmp.eq.s32.totalorder %s28, 0
      %p128 = por %p126, %p127
      %p129 = scmp.ne.s32.totalorder %s121, %s123
      %p130 = scmp.eq.s32.totalorder %s33, 3
      %p131 = por %p129, %p130
      %p132 = scmp.ne.s32.totalorder %s123, %s124
      %p133 = scmp.eq.s32.totalorder %s33, 0
      %p134 = por %p132, %p133
      %p135 = scmp.ne.s32.totalorder %s123, %s124
      %p136 = scmp.eq.s32.totalorder %s34, 3
      %p137 = por %p135, %p136
      %p139 = scmp.ne.s32.totalorder %s124, %s138
      %p140 = scmp.eq.s32.totalorder %s34, 0
      %p141 = por %p139, %p140
      %s143 = sadd.s32 %s142, 1
      %p146 = scmp.eq.s32.totalorder %s28, 3
      %p147 = scmp.ne.s32.totalorder %s142, %s144
      %p148 = scmp.eq.s32.totalorder %s28, 0
      %p149 = por %p147, %p148
      %p150 = scmp.ne.s32.totalorder %s142, %s144
      %p151 = scmp.eq.s32.totalorder %s33, 3
      %p152 = por %p150, %p151
      %p153 = scmp.ne.s32.totalorder %s144, %s145
      %p154 = scmp.eq.s32.totalorder %s33, 0
      %p155 = por %p153, %p154
      %p156 = scmp.ne.s32.totalorder %s144, %s145
      %p157 = scmp.eq.s32.totalorder %s34, 3
      %p158 = por %p156, %p157
      %p160 = scmp.ne.s32.totalorder %s145, %s159
      %p161 = scmp.eq.s32.totalorder %s34, 0
      %p162 = por %p160, %p161
      %s164 = sadd.s32 %s163, 1
      %p167 = scmp.eq.s32.totalorder %s28, 3
      %p168 = scmp.ne.s32.totalorder %s163, %s165
      %p169 = scmp.eq.s32.totalorder %s28, 0
      %p170 = por %p168, %p169
      %p171 = scmp.ne.s32.totalorder %s163, %s165
      %p172 = scmp.eq.s32.totalorder %s33, 3
      %p173 = por %p171, %p172
      %p174 = scmp.ne.s32.totalorder %s165, %s166
      %p175 = scmp.eq.s32.totalorder %s33, 0
      %p176 = por %p174, %p175
      %p177 = scmp.ne.s32.totalorder %s165, %s166
      %p178 = scmp.eq.s32.totalorder %s34, 3
      %p179 = por %p177, %p178
      %p181 = scmp.ne.s32.totalorder %s166, %s180
      %p182 = scmp.eq.s32.totalorder %s34, 0
      %p183 = por %p181, %p182
      %s185 = sadd.s32 %s184, 1
      %p188 = scmp.eq.s32.totalorder %s28, 3
      %p189 = scmp.ne.s32.totalorder %s184, %s186
      %p190 = scmp.eq.s32.totalorder %s28, 0
      %p191 = por %p189, %p190
      %p192 = scmp.ne.s32.totalorder %s184, %s186
      %p193 = scmp.eq.s32.totalorder %s33, 3
      %p194 = por %p192, %p193
      %p195 = scmp.ne.s32.totalorder %s186, %s187
      %p196 = scmp.eq.s32.totalorder %s33, 0
      %p197 = por %p195, %p196
      %p198 = scmp.ne.s32.totalorder %s186, %s187
      %p199 = scmp.eq.s32.totalorder %s34, 3
      %p200 = por %p198, %p199
      %p202 = scmp.ne.s32.totalorder %s187, %s201
      %p203 = scmp.eq.s32.totalorder %s34, 0
      %p204 = por %p202, %p203
      %s206 = sadd.s32 %s205, 1
      %p209 = scmp.eq.s32.totalorder %s28, 3
      %p210 = scmp.ne.s32.totalorder %s205, %s207
      %p211 = scmp.eq.s32.totalorder %s28, 0
      %p212 = por %p210, %p211
      %p213 = scmp.ne.s32.totalorder %s205, %s207
      %p214 = scmp.eq.s32.totalorder %s33, 3
      %p215 = por %p213, %p214
      %p216 = scmp.ne.s32.totalorder %s207, %s208
      %p217 = scmp.eq.s32.totalorder %s33, 0
      %p218 = por %p216, %p217
      %p219 = scmp.ne.s32.totalorder %s207, %s208
      %p220 = scmp.eq.s32.totalorder %s34, 3
      %p221 = por %p219, %p220
      %p223 = scmp.ne.s32.totalorder %s208, %s222
      %p224 = scmp.eq.s32.totalorder %s34, 0
      %p225 = por %p223, %p224
      %s227 = sadd.s32 %s226, 1
      %p230 = scmp.eq.s32.totalorder %s28, 3
      %p231 = scmp.ne.s32.totalorder %s226, %s228
      %p232 = scmp.eq.s32.totalorder %s28, 0
      %p233 = por %p231, %p232
      %p234 = scmp.ne.s32.totalorder %s226, %s228
      %p235 = scmp.eq.s32.totalorder %s33, 3
      %p236 = por %p234, %p235
      %p237 = scmp.ne.s32.totalorder %s228, %s229
      %p238 = scmp.eq.s32.totalorder %s33, 0
      %p239 = por %p237, %p238
      %p240 = scmp.ne.s32.totalorder %s228, %s229
      %p241 = scmp.eq.s32.totalorder %s34, 3
      %p242 = por %p240, %p241
      %p244 = scmp.ne.s32.totalorder %s229, %s243
      %p245 = scmp.eq.s32.totalorder %s34, 0
      %p246 = por %p244, %p245
      %s248 = sadd.s32 %s247, 1
      %p251 = scmp.eq.s32.totalorder %s28, 3
      %p252 = scmp.ne.s32.totalorder %s247, %s249
      %p253 = scmp.eq.s32.totalorder %s28, 0
      %p254 = por %p252, %p253
      %p255 = scmp.ne.s32.totalorder %s247, %s249
      %p256 = scmp.eq.s32.totalorder %s33, 3
      %p257 = por %p255, %p256
      %p258 = scmp.ne.s32.totalorder %s249, %s250
      %p259 = scmp.eq.s32.totalorder %s33, 0
      %p260 = por %p258, %p259
      %p261 = scmp.ne.s32.totalorder %s249, %s250
      %p262 = scmp.eq.s32.totalorder %s34, 3
      %p263 = por %p261, %p262
      %p265 = scmp.ne.s32.totalorder %s250, %s264
      %p266 = scmp.eq.s32.totalorder %s34, 0
      %p267 = por %p265, %p266
      %s269 = sadd.s32 %s268, 1
      %p272 = scmp.eq.s32.totalorder %s28, 3
      %p273 = scmp.ne.s32.totalorder %s268, %s270
      %p274 = scmp.eq.s32.totalorder %s28, 0
      %p275 = por %p273, %p274
      %p276 = scmp.ne.s32.totalorder %s268, %s270
      %p277 = scmp.eq.s32.totalorder %s33, 3
      %p278 = por %p276, %p277
      %p279 = scmp.ne.s32.totalorder %s270, %s271
      %p280 = scmp.eq.s32.totalorder %s33, 0
      %p281 = por %p279, %p280
      %p282 = scmp.ne.s32.totalorder %s270, %s271
      %p283 = scmp.eq.s32.totalorder %s34, 3
      %p284 = por %p282, %p283
      %p286 = scmp.ne.s32.totalorder %s271, %s285
      %p287 = scmp.eq.s32.totalorder %s34, 0
      %p288 = por %p286, %p287
      %s290 = sadd.s32 %s289, 1
      %p293 = scmp.eq.s32.totalorder %s28, 3
      %p294 = scmp.ne.s32.totalorder %s289, %s291
      %p295 = scmp.eq.s32.totalorder %s28, 0
      %p296 = por %p294, %p295
      %p297 = scmp.ne.s32.totalorder %s289, %s291
      %p298 = scmp.eq.s32.totalorder %s33, 3
      %p299 = por %p297, %p298
      %p300 = scmp.ne.s32.totalorder %s291, %s292
      %p301 = scmp.eq.s32.totalorder %s33, 0
      %p302 = por %p300, %p301
      %p303 = scmp.ne.s32.totalorder %s291, %s292
      %p304 = scmp.eq.s32.totalorder %s34, 3
      %p305 = por %p303, %p304
      %p307 = scmp.ne.s32.totalorder %s292, %s306
      %p308 = scmp.eq.s32.totalorder %s34, 0
      %p309 = por %p307, %p308
      %s311 = sadd.s32 %s310, 1
      %p314 = scmp.eq.s32.totalorder %s28, 3
      %p315 = scmp.ne.s32.totalorder %s310, %s312
      %p316 = scmp.eq.s32.totalorder %s28, 0
      %p317 = por %p315, %p316
      %p318 = scmp.ne.s32.totalorder %s310, %s312
      %p319 = scmp.eq.s32.totalorder %s33, 3
      %p320 = por %p318, %p319
      %p321 = scmp.ne.s32.totalorder %s312, %s313
      %p322 = scmp.eq.s32.totalorder %s33, 0
      %p323 = por %p321, %p322
      %p324 = scmp.ne.s32.totalorder %s312, %s313
      %p325 = scmp.eq.s32.totalorder %s34, 3
      %p326 = por %p324, %p325
      %p328 = scmp.ne.s32.totalorder %s313, %s327
      %p329 = scmp.eq.s32.totalorder %s34, 0
      %p330 = por %p328, %p329
      %s332 = sadd.s32 %s331, 1
      %p335 = scmp.eq.s32.totalorder %s28, 3
      %p336 = scmp.ne.s32.totalorder %s331, %s333
      %p337 = scmp.eq.s32.totalorder %s28, 0
      %p338 = por %p336, %p337
      %p339 = scmp.ne.s32.totalorder %s331, %s333
      %p340 = scmp.eq.s32.totalorder %s33, 3
      %p341 = por %p339, %p340
      %p342 = scmp.ne.s32.totalorder %s333, %s334
      %p343 = scmp.eq.s32.totalorder %s33, 0
      %p344 = por %p342, %p343
      %p345 = scmp.ne.s32.totalorder %s333, %s334
      %p346 = scmp.eq.s32.totalorder %s34, 3
      %p347 = por %p345, %p346
      %p349 = scmp.ne.s32.totalorder %s334, %s348
      %p350 = scmp.eq.s32.totalorder %s34, 0
      %p351 = por %p349, %p350
      %s353 = sadd.s32 %s352, 1
      %p356 = scmp.eq.s32.totalorder %s28, 3
      %p357 = scmp.ne.s32.totalorder %s352, %s354
      %p358 = scmp.eq.s32.totalorder %s28, 0
      %p359 = por %p357, %p358
      %p360 = scmp.ne.s32.totalorder %s352, %s354
      %p361 = scmp.eq.s32.totalorder %s33, 3
      %p362 = por %p360, %p361
      %p363 = scmp.ne.s32.totalorder %s354, %s355
      %p364 = scmp.eq.s32.totalorder %s33, 0
      %p365 = por %p363, %p364
      %p366 = scmp.ne.s32.totalorder %s354, %s355
      %p367 = scmp.eq.s32.totalorder %s34, 3
      %p368 = por %p366, %p367
      %p370 = scmp.ne.s32.totalorder %s355, %s369
      %p371 = scmp.eq.s32.totalorder %s34, 0
      %p372 = por %p370, %p371
      %s374 = sadd.s32 %s373, 1
      %p377 = scmp.eq.s32.totalorder %s28, 3
      %p378 = scmp.ne.s32.totalorder %s373, %s375
      %p379 = scmp.eq.s32.totalorder %s28, 0
      %p380 = por %p378, %p379
      %p381 = scmp.ne.s32.totalorder %s373, %s375
      %p382 = scmp.eq.s32.totalorder %s33, 3
      %p383 = por %p381, %p382
      %p384 = scmp.ne.s32.totalorder %s375, %s376
      %p385 = scmp.eq.s32.totalorder %s33, 0
      %p386 = por %p384, %p385
      %p387 = scmp.ne.s32.totalorder %s375, %s376
      %p388 = scmp.eq.s32.totalorder %s34, 3
      %p389 = por %p387, %p388
      %p391 = scmp.ne.s32.totalorder %s376, %s390
      %p392 = scmp.eq.s32.totalorder %s34, 0
      %p393 = por %p391, %p392
      %s394 = ssub.s32 %s35, %s47
      %p395 = scmp.eq.s32.totalorder %s394, 0
      %s397 = sadd.s32 %s396, 1
      %s398 = scalar_select %p395, %s396, %s397
      %p401 = pneg %p395
      %p402 = scmp.eq.s32.totalorder %s28, 3
      %p403 = por %p401, %p402
      %p404 = scmp.ne.s32.totalorder %s396, %s399
      %p405 = scmp.eq.s32.totalorder %s28, 0
      %p406 = por %p404, %p405
      %p407 = scmp.ne.s32.totalorder %s396, %s399
      %p408 = scmp.eq.s32.totalorder %s33, 3
      %p409 = por %p407, %p408
      %p410 = scmp.ne.s32.totalorder %s399, %s400
      %p411 = scmp.eq.s32.totalorder %s33, 0
      %p412 = por %p410, %p411
      %p413 = scmp.ne.s32.totalorder %s399, %s400
      %p414 = scmp.eq.s32.totalorder %s34, 3
      %p415 = por %p413, %p414
      %p417 = scmp.ne.s32.totalorder %s400, %s416
      %p418 = scmp.eq.s32.totalorder %s34, 0
      %p419 = por %p417, %p418
      %p420 = scmp.le.s32.totalorder 1, %s28
      %p421 = scmp.lt.s32.totalorder %s28, 5
      %p422 = pnand %p420, %p421
      %p423 = pneg %p422
      // Predicated region
      $region9: #{tpu_custom_call.1} parent=5 // pred_check
        _
      $region10: #{tpu_custom_call.1} parent=5 // pred_check_branch
        %425 = sbr.rel (%p422) target = $region12
      $region11: #{tpu_custom_call.1} parent=5 // pred_region
        %s426 = ssub.s32 %s28, 1
        // Predicated region
        $region13: #{tpu_custom_call.1} parent=11 // pred_check
          %p427 = pneg %p66
        $region14: #{tpu_custom_call.1} parent=11 // pred_check_branch
          %429 = sbr.rel (%p427) target = $region16
        $region15: #{tpu_custom_call.1} parent=11 // pred_region
          %s430 = smul.u32 2, %s37
          %s432 = ssub.s32 256, 256
          %433 = vsyncadd [#allocation7], %s432
          %s434 = smul.addr %s430, 128
          %s435 = scalar_lea.hbm %s0, %s434
          %s436 = sshll.u32 [#allocation6], 4
          %s437 = int_to_ptr.vmem [resolvable:$true] %s436
          %442 = dma.hbm_to_vmem [thread:$0]  %s435, 256, %s437, [#allocation7], 128, 128, 8
        $region16: #{tpu_custom_call.1} parent=11 // pred_fallthru
          _
        // Predicated region
        $region17: #{tpu_custom_call.1} parent=11 // pred_check
          %p443 = pneg %p113
        $region18: #{tpu_custom_call.1} parent=11 // pred_check_branch
          %445 = sbr.rel (%p443) target = $region20
        $region19: #{tpu_custom_call.1} parent=11 // pred_region
          _
        $region20: #{tpu_custom_call.1} parent=11 // pred_fallthru
          _
        // Predicated region
        $region21: #{tpu_custom_call.1} parent=11 // pred_check
          %p446 = pneg %p134
        $region22: #{tpu_custom_call.1} parent=11 // pred_check_branch
          %448 = sbr.rel (%p446) target = $region24
        $region23: #{tpu_custom_call.1} parent=11 // pred_region
          _
        $region24: #{tpu_custom_call.1} parent=11 // pred_fallthru
          _
        // Predicated region
        $region25: #{tpu_custom_call.1} parent=11 // pred_check
          %p449 = pneg %p155
        $region26: #{tpu_custom_call.1} parent=11 // pred_check_branch
          %451 = sbr.rel (%p449) target = $region28
        $region27: #{tpu_custom_call.1} parent=11 // pred_region
          %s453 = ssub.s32 256, 256
          %454 = vsyncadd [#allocation10], %s453
          %s455 = sshll.u32 [#allocation11], 4
          %s456 = int_to_ptr.vmem [resolvable:$true] %s455
          %461 = dma.hbm_to_vmem [thread:$0]  %s4, 256, %s456, [#allocation10], 64, 64, 4
        $region28: #{tpu_custom_call.1} parent=11 // pred_fallthru
          _
        // Predicated region
        $region29: #{tpu_custom_call.1} parent=11 // pred_check
          %p462 = pneg %p176
        $region30: #{tpu_custom_call.1} parent=11 // pred_check_branch
          %464 = sbr.rel (%p462) target = $region32
        $region31: #{tpu_custom_call.1} parent=11 // pred_region
          _
        $region32: #{tpu_custom_call.1} parent=11 // pred_fallthru
          _
        // Predicated region
        $region33: #{tpu_custom_call.1} parent=11 // pred_check
          %p465 = pneg %p197
        $region34: #{tpu_custom_call.1} parent=11 // pred_check_branch
          %467 = sbr.rel (%p465) target = $region36
        $region35: #{tpu_custom_call.1} parent=11 // pred_region
          _
        $region36: #{tpu_custom_call.1} parent=11 // pred_fallthru
          _
        // Predicated region
        $region37: #{tpu_custom_call.1} parent=11 // pred_check
          %p468 = pneg %p218
        $region38: #{tpu_custom_call.1} parent=11 // pred_check_branch
          %470 = sbr.rel (%p468) target = $region40
        $region39: #{tpu_custom_call.1} parent=11 // pred_region
          _
        $region40: #{tpu_custom_call.1} parent=11 // pred_fallthru
          _
        // Predicated region
        $region41: #{tpu_custom_call.1} parent=11 // pred_check
          %p471 = pneg %p239
        $region42: #{tpu_custom_call.1} parent=11 // pred_check_branch
          %473 = sbr.rel (%p471) target = $region44
        $region43: #{tpu_custom_call.1} parent=11 // pred_region
          _
        $region44: #{tpu_custom_call.1} parent=11 // pred_fallthru
          _
        // Predicated region
        $region45: #{tpu_custom_call.1} parent=11 // pred_check
          %p474 = pneg %p260
        $region46: #{tpu_custom_call.1} parent=11 // pred_check_branch
          %476 = sbr.rel (%p474) target = $region48
        $region47: #{tpu_custom_call.1} parent=11 // pred_region
          _
        $region48: #{tpu_custom_call.1} parent=11 // pred_fallthru
          _
        // Predicated region
        $region49: #{tpu_custom_call.1} parent=11 // pred_check
          %p477 = pneg %p281
        $region50: #{tpu_custom_call.1} parent=11 // pred_check_branch
          %479 = sbr.rel (%p477) target = $region52
        $region51: #{tpu_custom_call.1} parent=11 // pred_region
          %s481 = ssub.s32 1024, 1024
          %482 = vsyncadd [#allocation13], %s481
          %s483 = sshll.u32 [#allocation12], 4
          %s484 = int_to_ptr.vmem [resolvable:$true] %s483
          %489 = dma.hbm_to_vmem [thread:$0]  %s10, 1024, %s484, [#allocation13], 64, 64, 4
        $region52: #{tpu_custom_call.1} parent=11 // pred_fallthru
          _
        // Predicated region
        $region53: #{tpu_custom_call.1} parent=11 // pred_check
          %p490 = pneg %p302
        $region54: #{tpu_custom_call.1} parent=11 // pred_check_branch
          %492 = sbr.rel (%p490) target = $region56
        $region55: #{tpu_custom_call.1} parent=11 // pred_region
          _
        $region56: #{tpu_custom_call.1} parent=11 // pred_fallthru
          _
        // Predicated region
        $region57: #{tpu_custom_call.1} parent=11 // pred_check
          %p493 = pneg %p323
        $region58: #{tpu_custom_call.1} parent=11 // pred_check_branch
          %495 = sbr.rel (%p493) target = $region60
        $region59: #{tpu_custom_call.1} parent=11 // pred_region
          _
        $region60: #{tpu_custom_call.1} parent=11 // pred_fallthru
          _
        // Predicated region
        $region61: #{tpu_custom_call.1} parent=11 // pred_check
          %p496 = pneg %p344
        $region62: #{tpu_custom_call.1} parent=11 // pred_check_branch
          %498 = sbr.rel (%p496) target = $region64
        $region63: #{tpu_custom_call.1} parent=11 // pred_region
          _
        $region64: #{tpu_custom_call.1} parent=11 // pred_fallthru
          _
        // Predicated region
        $region65: #{tpu_custom_call.1} parent=11 // pred_check
          %p499 = pneg %p365
        $region66: #{tpu_custom_call.1} parent=11 // pred_check_branch
          %501 = sbr.rel (%p499) target = $region68
        $region67: #{tpu_custom_call.1} parent=11 // pred_region
          _
        $region68: #{tpu_custom_call.1} parent=11 // pred_fallthru
          _
        // Predicated region
        $region69: #{tpu_custom_call.1} parent=11 // pred_check
          %p502 = pneg %p386
        $region70: #{tpu_custom_call.1} parent=11 // pred_check_branch
          %504 = sbr.rel (%p502) target = $region72
        $region71: #{tpu_custom_call.1} parent=11 // pred_region
          _
        $region72: #{tpu_custom_call.1} parent=11 // pred_fallthru
          _
      $region12: #{tpu_custom_call.1} parent=5 // pred_fallthru
        _
      %p505 = scmp.lt.s32.totalorder %s28, 4
      // Predicated region
      $region73: #{tpu_custom_call.1} parent=5 // pred_check
        %p506 = pneg %p505
      $region74: #{tpu_custom_call.1} parent=5 // pred_check_branch
        %508 = sbr.rel (%p506) target = $region76
      $region75: #{tpu_custom_call.1} parent=5 // pred_region
        // Predicated region
        $region77: #{tpu_custom_call.1} parent=75 // pred_check
          %p509 = pneg %p86
        $region78: #{tpu_custom_call.1} parent=75 // pred_check_branch
          %511 = sbr.rel (%p509) target = $region80
        $region79: #{tpu_custom_call.1} parent=75 // pred_region
          %s512 = sand.u32 %s28, 1
          %s513 = scalar_lea.sflag [#allocation10], %s512
          %s514 = sand.u32 %s76, 1
          %s515 = smul.addr %s514, 4
          %s516 = scalar_lea.vmem [#allocation9], %s515
          %s518 = ssub.s32 64, 64
          %519 = vsyncadd %s513, %s518
          %s520 = smul.addr %s36, 64
          %s521 = scalar_lea.hbm %s1, %s520
          %s523 = sshll.u32 %s516, 4
          %s524 = int_to_ptr.vmem [resolvable:$true] %s523
          %526 = dma.hbm_to_vmem [thread:$0]  %s521, 64, %s524, %s513
        $region80: #{tpu_custom_call.1} parent=75 // pred_fallthru
          _
      $region76: #{tpu_custom_call.1} parent=5 // pred_fallthru
        _
      %p527 = scmp.le.s32.totalorder 1, %s28
      %p528 = scmp.lt.s32.totalorder %s28, 5
      %p529 = pnand %p527, %p528
      %p530 = pneg %p529
      // Predicated region
      $region81: #{tpu_custom_call.1} parent=5 // pred_check
        _
      $region82: #{tpu_custom_call.1} parent=5 // pred_check_branch
        %532 = sbr.rel (%p529) target = $region84
      $region83: #{tpu_custom_call.1} parent=5 // pred_region
        %s533 = ssub.s32 %s28, 1
        // Predicated region
        $region85: #{tpu_custom_call.1} parent=83 // pred_check
          %p534 = pneg %p66
        $region86: #{tpu_custom_call.1} parent=83 // pred_check_branch
          %536 = sbr.rel (%p534) target = $region88
        $region87: #{tpu_custom_call.1} parent=83 // pred_region
          %537 = dma.done [#allocation7], 256
        $region88: #{tpu_custom_call.1} parent=83 // pred_fallthru
          _
        %s538 = sand.u32 %s33, 1
        %s539 = scalar_lea.sflag [#allocation10], %s538
        %s540 = sand.u32 %s79, 1
        %s541 = smul.addr %s540, 4
        %s542 = scalar_lea.vmem [#allocation9], %s541
        // Predicated region
        $region89: #{tpu_custom_call.1} parent=83 // pred_check
          %p543 = pneg %p92
        $region90: #{tpu_custom_call.1} parent=83 // pred_check_branch
          %545 = sbr.rel (%p543) target = $region92
        $region91: #{tpu_custom_call.1} parent=83 // pred_region
          %546 = dma.done %s539, 64
        $region92: #{tpu_custom_call.1} parent=83 // pred_fallthru
          _
        // Predicated region
        $region93: #{tpu_custom_call.1} parent=83 // pred_check
          %p547 = pneg %p155
        $region94: #{tpu_custom_call.1} parent=83 // pred_check_branch
          %549 = sbr.rel (%p547) target = $region96
        $region95: #{tpu_custom_call.1} parent=83 // pred_region
          %550 = dma.done [#allocation10], 256
        $region96: #{tpu_custom_call.1} parent=83 // pred_fallthru
          _
        // Predicated region
        $region97: #{tpu_custom_call.1} parent=83 // pred_check
          %p551 = pneg %p281
        $region98: #{tpu_custom_call.1} parent=83 // pred_check_branch
          %553 = sbr.rel (%p551) target = $region100
        $region99: #{tpu_custom_call.1} parent=83 // pred_region
          %554 = dma.done [#allocation13], 1024
        $region100: #{tpu_custom_call.1} parent=83 // pred_fallthru
          _
        %p555 = pneg %p66
        %p556 = pneg %p63
        %s557 = sand.u32 %s33, 1
        %s558 = scalar_lea.sflag [#allocation10], %s557
        %s559 = sand.u32 %s79, 1
        %s560 = smul.addr %s559, 4
        %s561 = scalar_lea.vmem [#allocation9], %s560
        %p562 = pneg %p92
        %p563 = pneg %p89
        %p564 = pneg %p113
        %p565 = pneg %p110
        %p566 = pneg %p134
        %p567 = pneg %p131
        %p568 = pneg %p155
        %p569 = pneg %p152
        %p570 = pneg %p176
        %p571 = pneg %p173
        %p572 = pneg %p197
        %p573 = pneg %p194
        %p574 = pneg %p218
        %p575 = pneg %p215
        %p576 = pneg %p239
        %p577 = pneg %p236
        %p578 = pneg %p260
        %p579 = pneg %p257
        %p580 = pneg %p281
        %p581 = pneg %p278
        %p582 = pneg %p302
        %p583 = pneg %p299
        %p584 = pneg %p323
        %p585 = pneg %p320
        %p586 = pneg %p344
        %p587 = pneg %p341
        %p588 = pneg %p365
        %p589 = pneg %p362
        %p590 = pneg %p386
        %p591 = pneg %p383
        %p592 = pneg %p412
        %p593 = pneg %p409
        %s594 = smul.u32 2, %s37
        %s595 = smul.u32 2, %s37
        %p597 = scmp.eq.s32.totalorder %s38, 0
        // Predicated region
        $region101: #{tpu_custom_call.1} parent=83 // pred_check
          %p598 = pneg %p597
        $region102: #{tpu_custom_call.1} parent=83 // pred_check_branch
          %600 = sbr.rel (%p598) target = $region104
        $region103: #{tpu_custom_call.1} parent=83 // pred_region
          %v601 = vld [vmem:[#allocation6] sm:$0xff]
          %v602 = vld [vmem:[#allocation6 + $0x8] sm:$0xff]
          %v603 = vpack.c.bf16 %v602, %v601
          %v604 = vld [vmem:[%s2] sm:$0xf]
          %v605 = vld [vmem:[%s2 + $0x4] sm:$0xf]
          %v606 = vld [vmem:[%s2 + $0x8] sm:$0xf]
          %v607 = vld [vmem:[%s2 + $0xc] sm:$0xf]
          %v608 = vld [vmem:[%s2 + $0x10] sm:$0xf]
          %v609 = vld [vmem:[%s2 + $0x14] sm:$0xf]
          %v610 = vld [vmem:[%s2 + $0x18] sm:$0xf]
          %v611 = vld [vmem:[%s2 + $0x1c] sm:$0xf]
          %v612 = vld [vmem:[%s2 + $0x20] sm:$0xf]
          %v613 = vld [vmem:[%s2 + $0x24] sm:$0xf]
          %v614 = vld [vmem:[%s2 + $0x28] sm:$0xf]
          %v615 = vld [vmem:[%s2 + $0x2c] sm:$0xf]
          %v616 = vld [vmem:[%s2 + $0x30] sm:$0xf]
          %v617 = vld [vmem:[%s2 + $0x34] sm:$0xf]
          %v618 = vld [vmem:[%s2 + $0x38] sm:$0xf]
          %v619 = vld [vmem:[%s2 + $0x3c] sm:$0xf]
          %v620 = vld [vmem:[%s3] sm:$0x1]
          %v622 = vlaneseq
          %v623 = vshrl.u32 %v622, 7
          %v624 = vsub.s32 0, %v623
          %v625 = vrot.slane %v620, %v624
          %v643 = vunpack.c.l.b16 %v604
          %v644 = vunpack.c.l.b16 %v605
          %v645 = vunpack.c.l.b16 %v606
          %v646 = vunpack.c.l.b16 %v607
          %v647 = vunpack.c.l.b16 %v608
          %v648 = vunpack.c.l.b16 %v609
          %v649 = vunpack.c.l.b16 %v610
          %v650 = vunpack.c.l.b16 %v611
          %v651 = vunpack.c.l.b16 %v612
          %v652 = vunpack.c.l.b16 %v613
          %v653 = vunpack.c.l.b16 %v614
          %v654 = vunpack.c.l.b16 %v615
          %v655 = vunpack.c.l.b16 %v616
          %v656 = vunpack.c.l.b16 %v617
          %v657 = vunpack.c.l.b16 %v618
          %v658 = vunpack.c.l.b16 %v619
          %v659 = vpack.c.b16 %v644, %v643
          %v660 = vpack.c.b16 %v646, %v645
          %v661 = vpack.c.b16 %v648, %v647
          %v662 = vpack.c.b16 %v650, %v649
          %v663 = vpack.c.b16 %v652, %v651
          %v664 = vpack.c.b16 %v654, %v653
          %v665 = vpack.c.b16 %v656, %v655
          %v666 = vpack.c.b16 %v658, %v657
          %675 = vmatprep.subr.bf16.mxu0 0
          %676 = vmatpush1.bf16.msra.mxu0 %v659
          %677 = vmatprep.subr.bf16.mxu0 0
          %678 = vmatpush1.bf16.msra.mxu0 %v660
          %679 = vmatprep.subr.bf16.mxu0 0
          %680 = vmatpush1.bf16.msra.mxu0 %v661
          %681 = vmatprep.subr.bf16.mxu0 0
          %682 = vmatpush1.bf16.msra.mxu0 %v662
          %683 = vmatprep.subr.bf16.mxu0 0
          %684 = vmatpush1.bf16.msra.mxu0 %v663
          %685 = vmatprep.subr.bf16.mxu0 0
          %686 = vmatpush1.bf16.msra.mxu0 %v664
          %687 = vmatprep.subr.bf16.mxu0 0
          %688 = vmatpush1.bf16.msra.mxu0 %v665
          %689 = vmatprep.subr.bf16.mxu0 0
          %690 = vmatpush1.bf16.msra.mxu0 %v666
          %691 = vmatprep.subr.bf16.mxu0 0
          %692 = vmatpush1.bf16.msra.mxu0 0
          %693 = vmatprep.subr.bf16.mxu0 0
          %694 = vmatpush1.bf16.msra.mxu0 0
          %695 = vmatprep.subr.bf16.mxu0 0
          %696 = vmatpush1.bf16.msra.mxu0 0
          %697 = vmatprep.subr.bf16.mxu0 0
          %698 = vmatpush1.bf16.msra.mxu0 0
          %699 = vmatprep.subr.bf16.mxu0 0
          %700 = vmatpush1.bf16.msra.mxu0 0
          %701 = vmatprep.subr.bf16.mxu0 0
          %702 = vmatpush1.bf16.msra.mxu0 0
          %703 = vmatprep.subr.bf16.mxu0 0
          %704 = vmatpush1.bf16.msra.mxu0 0
          %705 = vmatprep.subr.bf16.mxu0 0
          %706 = vmatpush1.bf16.msra.mxu0 0
          %707 = vmatprep.mubr.bf16.mxu0 0
          %708 = vmatmul.mubr.bf16.gmra.mrb[0].mxu0 %v603
          %v709 = vpop.f32.mrb[0].mxu0
          %v710 = vadd.f32 %v625, %v709
          %v711 = vpop.f32.mrb[0].mxu0
          %v712 = vpop.f32.mrb[0].mxu0
          %v713 = vadd.f32 %v625, %v712
          %v714 = vpop.f32.mrb[0].mxu0
          %715 = vdwg.mxu0
          %v716 = vpack.c.bf16 %v713, %v710
          %vm717 = vcmask 64512
          %718 = vst.msk [vmem:[#allocation2] sm:$0xff] %vm717, %v716
          %720 = vrot.lane.b32.xlu0 %v716, 96
          %v721 = vpop.permute.xlu0 %720
          %723 = vst.msk [vmem:[#allocation3] sm:$0xff] %vm717, %v721
          %724 = vrot.lane.b32.xlu0 %v716, 64
          %v725 = vpop.permute.xlu0 %724
          %727 = vst.msk [vmem:[#allocation4] sm:$0xff] %vm717, %v725
          %728 = vrot.lane.b32.xlu0 %v716, 120
          %v729 = vpop.permute.xlu0 %728
          %s731 = scalar_lea.vmem [#allocation2], 8
          %732 = vst.msk [vmem:[%s731] sm:$0xff] %vm717, %v729
          %733 = vrot.lane.b32.xlu0 %v716, 88
          %v734 = vpop.permute.xlu0 %733
          %s736 = scalar_lea.vmem [#allocation3], 8
          %737 = vst.msk [vmem:[%s736] sm:$0xff] %vm717, %v734
          %738 = vrot.lane.b32.xlu0 %v716, 56
          %v739 = vpop.permute.xlu0 %738
          %s741 = scalar_lea.vmem [#allocation4], 8
          %742 = vst.msk [vmem:[%s741] sm:$0xff] %vm717, %v739
          %743 = vrot.lane.b32.xlu0 %v716, 112
          %v744 = vpop.permute.xlu0 %743
          %s746 = scalar_lea.vmem [#allocation2], 16
          %747 = vst.msk [vmem:[%s746] sm:$0xff] %vm717, %v744
          %748 = vrot.lane.b32.xlu0 %v716, 80
          %v749 = vpop.permute.xlu0 %748
          %s751 = scalar_lea.vmem [#allocation3], 16
          %752 = vst.msk [vmem:[%s751] sm:$0xff] %vm717, %v749
          %753 = vrot.lane.b32.xlu0 %v716, 48
          %v754 = vpop.permute.xlu0 %753
          %s756 = scalar_lea.vmem [#allocation4], 16
          %757 = vst.msk [vmem:[%s756] sm:$0xff] %vm717, %v754
          %758 = vrot.lane.b32.xlu0 %v716, 104
          %v759 = vpop.permute.xlu0 %758
          %s761 = scalar_lea.vmem [#allocation2], 24
          %762 = vst.msk [vmem:[%s761] sm:$0xff] %vm717, %v759
          %763 = vrot.lane.b32.xlu0 %v716, 72
          %v764 = vpop.permute.xlu0 %763
          %s766 = scalar_lea.vmem [#allocation3], 24
          %767 = vst.msk [vmem:[%s766] sm:$0xff] %vm717, %v764
          %768 = vrot.lane.b32.xlu0 %v716, 40
          %v769 = vpop.permute.xlu0 %768
          %s771 = scalar_lea.vmem [#allocation4], 24
          %772 = vst.msk [vmem:[%s771] sm:$0xff] %vm717, %v769
        $region104: #{tpu_custom_call.1} parent=83 // pred_fallthru
          _
        %s773 = smul.addr %s38, 8
        %s774 = scalar_lea.vmem [#allocation2], %s773
        %v775 = vld [vmem:[%s774] sm:$0xff]
        %v777 = vunpack.c.l.b16 %v775
        %v778 = vunpack.c.h.b16 %v775
        %v779 = vpack.c.b16 %v777, %v777
        %v780 = vpack.c.b16 %v778, %v778
        %s781 = smul.addr %s38, 8
        %s782 = scalar_lea.vmem [#allocation3], %s781
        %v783 = vld [vmem:[%s782] sm:$0xff]
        %v785 = vunpack.c.l.b16 %v783
        %v786 = vunpack.c.h.b16 %v783
        %v787 = vpack.c.b16 %v785, %v785
        %v788 = vpack.c.b16 %v786, %v786
        %s789 = smul.addr %s38, 8
        %s790 = scalar_lea.vmem [#allocation4], %s789
        %v791 = vld [vmem:[%s790] sm:$0xff]
        %v793 = vunpack.c.l.b16 %v791
        %v794 = vunpack.c.h.b16 %v791
        %v795 = vpack.c.b16 %v793, %v793
        %v796 = vpack.c.b16 %v794, %v794
        %v797 = vld [vmem:[%s542] sm:$0xf]
        %v798 = vunpack.c.l.bf16 %v797
        %vm799 = vcmask 64512
        %v801 = vsel %vm799, %v779, 0
        %v804 = vsel %vm799, %v787, 0
        %806 = vmatprep.subr.bf16.mxu0 0
        %807 = vmatpush1.bf16.xpose.msra.mxu0 %v804
        %808 = vmatprep.subr.bf16.mxu0 0
        %809 = vmatpush1.bf16.xpose.msra.mxu0 0
        %810 = vmatprep.subr.bf16.mxu0 0
        %811 = vmatpush1.bf16.xpose.msra.mxu0 0
        %812 = vmatprep.subr.bf16.mxu0 0
        %813 = vmatpush1.bf16.xpose.msra.mxu0 0
        %814 = vmatprep.subr.bf16.mxu0 0
        %815 = vmatpush1.bf16.xpose.msra.mxu0 0
        %816 = vmatprep.subr.bf16.mxu0 0
        %817 = vmatpush1.bf16.xpose.msra.mxu0 0
        %818 = vmatprep.subr.bf16.mxu0 0
        %819 = vmatpush1.bf16.xpose.msra.mxu0 0
        %820 = vmatprep.subr.bf16.mxu0 0
        %821 = vmatpush1.bf16.xpose.msra.mxu0 0
        %822 = vmatprep.subr.bf16.mxu0 0
        %823 = vmatpush1.bf16.xpose.msra.mxu0 0
        %824 = vmatprep.subr.bf16.mxu0 0
        %825 = vmatpush1.bf16.xpose.msra.mxu0 0
        %826 = vmatprep.subr.bf16.mxu0 0
        %827 = vmatpush1.bf16.xpose.msra.mxu0 0
        %828 = vmatprep.subr.bf16.mxu0 0
        %829 = vmatpush1.bf16.xpose.msra.mxu0 0
        %830 = vmatprep.subr.bf16.mxu0 0
        %831 = vmatpush1.bf16.xpose.msra.mxu0 0
        %832 = vmatprep.subr.bf16.mxu0 0
        %833 = vmatpush1.bf16.xpose.msra.mxu0 0
        %834 = vmatprep.subr.bf16.mxu0 0
        %835 = vmatpush1.bf16.xpose.msra.mxu0 0
        %836 = vmatprep.subr.bf16.mxu0 0
        %837 = vmatpush1.bf16.xpose.msra.mxu0 0
        %838 = vmatprep.mubr.bf16.mxu0 0
        %839 = vmatmul.mubr.bf16.gmra.mrb[0].mxu0 %v801
        %v840 = vpop.f32.mrb[0].mxu0
        %v841 = vadd.f32 %v798, %v840
        %v842 = vpop.f32.mrb[0].mxu0
        %v843 = vpop.f32.mrb[0].mxu0
        %v844 = vpop.f32.mrb[0].mxu0
        %845 = vdwg.mxu0
        %v847 = vsel %vm799, %v780, 0
        %v850 = vsel %vm799, %v788, 0
        %852 = vmatprep.subr.bf16.mxu0 0
        %853 = vmatpush1.bf16.xpose.msra.mxu0 %v850
        %854 = vmatprep.subr.bf16.mxu0 0
        %855 = vmatpush1.bf16.xpose.msra.mxu0 0
        %856 = vmatprep.subr.bf16.mxu0 0
        %857 = vmatpush1.bf16.xpose.msra.mxu0 0
        %858 = vmatprep.subr.bf16.mxu0 0
        %859 = vmatpush1.bf16.xpose.msra.mxu0 0
        %860 = vmatprep.subr.bf16.mxu0 0
        %861 = vmatpush1.bf16.xpose.msra.mxu0 0
        %862 = vmatprep.subr.bf16.mxu0 0
        %863 = vmatpush1.bf16.xpose.msra.mxu0 0
        %864 = vmatprep.subr.bf16.mxu0 0
        %865 = vmatpush1.bf16.xpose.msra.mxu0 0
        %866 = vmatprep.subr.bf16.mxu0 0
        %867 = vmatpush1.bf16.xpose.msra.mxu0 0
        %868 = vmatprep.subr.bf16.mxu0 0
        %869 = vmatpush1.bf16.xpose.msra.mxu0 0
        %870 = vmatprep.subr.bf16.mxu0 0
        %871 = vmatpush1.bf16.xpose.msra.mxu0 0
        %872 = vmatprep.subr.bf16.mxu0 0
        %873 = vmatpush1.bf16.xpose.msra.mxu0 0
        %874 = vmatprep.subr.bf16.mxu0 0
        %875 = vmatpush1.bf16.xpose.msra.mxu0 0
        %876 = vmatprep.subr.bf16.mxu0 0
        %877 = vmatpush1.bf16.xpose.msra.mxu0 0
        %878 = vmatprep.subr.bf16.mxu0 0
        %879 = vmatpush1.bf16.xpose.msra.mxu0 0
        %880 = vmatprep.subr.bf16.mxu0 0
        %881 = vmatpush1.bf16.xpose.msra.mxu0 0
        %882 = vmatprep.subr.bf16.mxu0 0
        %883 = vmatpush1.bf16.xpose.msra.mxu0 0
        %884 = vmatprep.mubr.bf16.mxu0 0
        %885 = vmatmul.mubr.bf16.gmra.mrb[0].mxu0 %v847
        %v886 = vpop.f32.mrb[0].mxu0
        %v887 = vadd.f32 %v798, %v886
        %v888 = vpop.f32.mrb[0].mxu0
        %v889 = vpop.f32.mrb[0].mxu0
        %v890 = vpop.f32.mrb[0].mxu0
        %891 = vdwg.mxu0
        %v892 = vsel %vm799, %v841, -inf
        %893 = vmax.xlane.f32.xlu0 %v892
        %v894 = vpop.xlane.xlu0 %893
        %v895 = vsel %vm799, %v887, -inf
        %896 = vmax.xlane.f32.xlu0 %v895
        %v897 = vpop.xlane.xlu0 %896
        %v898 = vsub.f32 %v841, %v894
        %v899 = vsub.f32 %v887, %v897
        %v900 = vmul.f32 %v898, 1.442695
        %v901 = vpow.pop %v900
        %v902 = vmul.f32 %v899, 1.442695
        %v903 = vpow.pop %v902
        %v904 = vsel %vm799, %v901, 0.0
        %905 = vadd.xlane.f32.xlu0 %v904
        %v906 = vpop.xlane.xlu0 %905
        %v907 = vsel %vm799, %v903, 0.0
        %908 = vadd.xlane.f32.xlu0 %v907
        %v909 = vpop.xlane.xlu0 %908
        %v910 = vrcp.pop %v906
        %v911 = vrcp.pop %v909
        %v912 = vmul.f32 %v901, %v910
        %v913 = vmul.f32 %v903, %v911
        %v914 = vpack.c.bf16 %v912, %v912
        %v915 = vpack.c.bf16 %v913, %v913
        %v917 = vsel %vm799, %v914, 0
        %vm919 = vcmask 1043456
        %v921 = vsel %vm919, %v795, 0
        %923 = vmatprep.subr.bf16.mxu0 0
        %924 = vmatpush1.bf16.msra.mxu0 %v921
        %925 = vmatprep.subr.bf16.mxu0 0
        %926 = vmatpush1.bf16.msra.mxu0 0
        %927 = vmatprep.subr.bf16.mxu0 0
        %928 = vmatpush1.bf16.msra.mxu0 0
        %929 = vmatprep.subr.bf16.mxu0 0
        %930 = vmatpush1.bf16.msra.mxu0 0
        %931 = vmatprep.subr.bf16.mxu0 0
        %932 = vmatpush1.bf16.msra.mxu0 0
        %933 = vmatprep.subr.bf16.mxu0 0
        %934 = vmatpush1.bf16.msra.mxu0 0
        %935 = vmatprep.subr.bf16.mxu0 0
        %936 = vmatpush1.bf16.msra.mxu0 0
        %937 = vmatprep.subr.bf16.mxu0 0
        %938 = vmatpush1.bf16.msra.mxu0 0
        %939 = vmatprep.subr.bf16.mxu0 0
        %940 = vmatpush1.bf16.msra.mxu0 0
        %941 = vmatprep.subr.bf16.mxu0 0
        %942 = vmatpush1.bf16.msra.mxu0 0
        %943 = vmatprep.subr.bf16.mxu0 0
        %944 = vmatpush1.bf16.msra.mxu0 0
        %945 = vmatprep.subr.bf16.mxu0 0
        %946 = vmatpush1.bf16.msra.mxu0 0
        %947 = vmatprep.subr.bf16.mxu0 0
        %948 = vmatpush1.bf16.msra.mxu0 0
        %949 = vmatprep.subr.bf16.mxu0 0
        %950 = vmatpush1.bf16.msra.mxu0 0
        %951 = vmatprep.subr.bf16.mxu0 0
        %952 = vmatpush1.bf16.msra.mxu0 0
        %953 = vmatprep.subr.bf16.mxu0 0
        %954 = vmatpush1.bf16.msra.mxu0 0
        %955 = vmatprep.mubr.bf16.mxu0 0
        %956 = vmatmul.mubr.bf16.gmra.mrb[0].mxu0 %v917
        %v957 = vpop.f32.mrb[0].mxu0
        %v958 = vadd.f32 0.0, %v957
        %v959 = vpop.f32.mrb[0].mxu0
        %v960 = vpop.f32.mrb[0].mxu0
        %v961 = vpop.f32.mrb[0].mxu0
        %962 = vdwg.mxu0
        %v964 = vsel %vm799, %v915, 0
        %v967 = vsel %vm919, %v796, 0
        %969 = vmatprep.subr.bf16.mxu0 0
        %970 = vmatpush1.bf16.msra.mxu0 %v967
        %971 = vmatprep.subr.bf16.mxu0 0
        %972 = vmatpush1.bf16.msra.mxu0 0
        %973 = vmatprep.subr.bf16.mxu0 0
        %974 = vmatpush1.bf16.msra.mxu0 0
        %975 = vmatprep.subr.bf16.mxu0 0
        %976 = vmatpush1.bf16.msra.mxu0 0
        %977 = vmatprep.subr.bf16.mxu0 0
        %978 = vmatpush1.bf16.msra.mxu0 0
        %979 = vmatprep.subr.bf16.mxu0 0
        %980 = vmatpush1.bf16.msra.mxu0 0
        %981 = vmatprep.subr.bf16.mxu0 0
        %982 = vmatpush1.bf16.msra.mxu0 0
        %983 = vmatprep.subr.bf16.mxu0 0
        %984 = vmatpush1.bf16.msra.mxu0 0
        %985 = vmatprep.subr.bf16.mxu0 0
        %986 = vmatpush1.bf16.msra.mxu0 0
        %987 = vmatprep.subr.bf16.mxu0 0
        %988 = vmatpush1.bf16.msra.mxu0 0
        %989 = vmatprep.subr.bf16.mxu0 0
        %990 = vmatpush1.bf16.msra.mxu0 0
        %991 = vmatprep.subr.bf16.mxu0 0
        %992 = vmatpush1.bf16.msra.mxu0 0
        %993 = vmatprep.subr.bf16.mxu0 0
        %994 = vmatpush1.bf16.msra.mxu0 0
        %995 = vmatprep.subr.bf16.mxu0 0
        %996 = vmatpush1.bf16.msra.mxu0 0
        %997 = vmatprep.subr.bf16.mxu0 0
        %998 = vmatpush1.bf16.msra.mxu0 0
        %999 = vmatprep.subr.bf16.mxu0 0
        %1000 = vmatpush1.bf16.msra.mxu0 0
        %1001 = vmatprep.mubr.bf16.mxu0 0
        %1002 = vmatmul.mubr.bf16.gmra.mrb[0].mxu0 %v964
        %v1003 = vpop.f32.mrb[0].mxu0
        %v1004 = vadd.f32 0.0, %v1003
        %v1005 = vpop.f32.mrb[0].mxu0
        %v1006 = vpop.f32.mrb[0].mxu0
        %v1007 = vpop.f32.mrb[0].mxu0
        %1008 = vdwg.mxu0
        %v1009 = vpack.c.bf16 %v1004, %v958
        %s1010 = smul.addr %s38, 8
        %s1011 = scalar_lea.vmem [#allocation5], %s1010
        %1012 = vst.msk [vmem:[%s1011] sm:$0xff] %vm799, %v1009
        %p1013 = scmp.eq.s32.totalorder %s38, 3
        // Predicated region
        $region105: #{tpu_custom_call.1} parent=83 // pred_check
          %p1014 = pneg %p1013
        $region106: #{tpu_custom_call.1} parent=83 // pred_check_branch
          %1016 = sbr.rel (%p1014) target = $region108
        $region107: #{tpu_custom_call.1} parent=83 // pred_region
          %v1017 = vld [vmem:[#allocation5] sm:$0xff]
          %s1018 = scalar_lea.vmem [#allocation5], 8
          %v1019 = vld [vmem:[%s1018] sm:$0xff]
          %s1020 = scalar_lea.vmem [#allocation5], 16
          %v1021 = vld [vmem:[%s1020] sm:$0xff]
          %s1022 = scalar_lea.vmem [#allocation5], 24
          %v1023 = vld [vmem:[%s1022] sm:$0xff]
          %1025 = vrot.lane.b32.xlu0 %v1019, 8
          %v1026 = vpop.permute.xlu0 %1025
          %1028 = vrot.lane.b32.xlu0 %v1021, 16
          %v1029 = vpop.permute.xlu0 %1028
          %1031 = vrot.lane.b32.xlu0 %v1023, 24
          %v1032 = vpop.permute.xlu0 %1031
          %v1035 = vsel %vm799, %v1017, %v1026
          %vm1036 = vcmask 130048
          %v1038 = vsel %vm1036, %v1035, %v1029
          %vm1039 = vcmask 195584
          %v1041 = vsel %vm1039, %v1038, %v1032
          %v1042 = vld [vmem:[#allocation11] sm:$0xf]
          %v1043 = vld [vmem:[#allocation11 + $0x4] sm:$0xf]
          %v1044 = vld [vmem:[#allocation11 + $0x8] sm:$0xf]
          %v1045 = vld [vmem:[#allocation11 + $0xc] sm:$0xf]
          %v1046 = vld [vmem:[%s5] sm:$0x1]
          %v1048 = vlaneseq
          %v1049 = vshrl.u32 %v1048, 7
          %v1050 = vsub.s32 0, %v1049
          %v1051 = vrot.slane %v1046, %v1050
          %v1057 = vunpack.c.l.b16 %v1042
          %v1058 = vunpack.c.l.b16 %v1043
          %v1059 = vunpack.c.l.b16 %v1044
          %v1060 = vunpack.c.l.b16 %v1045
          %v1061 = vpack.c.b16 %v1058, %v1057
          %v1062 = vpack.c.b16 %v1060, %v1059
          %vm1065 = vcmask 261120
          %v1066 = vsel %vm1065, %v1041, 0
          %1068 = vmatprep.subr.bf16.mxu0 0
          %1069 = vmatpush1.bf16.msra.mxu0 %v1061
          %1070 = vmatprep.subr.bf16.mxu0 0
          %1071 = vmatpush1.bf16.msra.mxu0 %v1062
          %1072 = vmatprep.subr.bf16.mxu0 0
          %1073 = vmatpush1.bf16.msra.mxu0 0
          %1074 = vmatprep.subr.bf16.mxu0 0
          %1075 = vmatpush1.bf16.msra.mxu0 0
          %1076 = vmatprep.subr.bf16.mxu0 0
          %1077 = vmatpush1.bf16.msra.mxu0 0
          %1078 = vmatprep.subr.bf16.mxu0 0
          %1079 = vmatpush1.bf16.msra.mxu0 0
          %1080 = vmatprep.subr.bf16.mxu0 0
          %1081 = vmatpush1.bf16.msra.mxu0 0
          %1082 = vmatprep.subr.bf16.mxu0 0
          %1083 = vmatpush1.bf16.msra.mxu0 0
          %1084 = vmatprep.subr.bf16.mxu0 0
          %1085 = vmatpush1.bf16.msra.mxu0 0
          %1086 = vmatprep.subr.bf16.mxu0 0
          %1087 = vmatpush1.bf16.msra.mxu0 0
          %1088 = vmatprep.subr.bf16.mxu0 0
          %1089 = vmatpush1.bf16.msra.mxu0 0
          %1090 = vmatprep.subr.bf16.mxu0 0
          %1091 = vmatpush1.bf16.msra.mxu0 0
          %1092 = vmatprep.subr.bf16.mxu0 0
          %1093 = vmatpush1.bf16.msra.mxu0 0
          %1094 = vmatprep.subr.bf16.mxu0 0
          %1095 = vmatpush1.bf16.msra.mxu0 0
          %1096 = vmatprep.subr.bf16.mxu0 0
          %1097 = vmatpush1.bf16.msra.mxu0 0
          %1098 = vmatprep.subr.bf16.mxu0 0
          %1099 = vmatpush1.bf16.msra.mxu0 0
          %1100 = vmatprep.mubr.bf16.mxu0 0
          %1101 = vmatmul.mubr.bf16.gmra.mrb[0].mxu0 %v1066
          %v1102 = vpop.f32.mrb[0].mxu0
          %v1103 = vadd.f32 %v1051, %v1102
          %v1104 = vpop.f32.mrb[0].mxu0
          %v1105 = vpop.f32.mrb[0].mxu0
          %v1106 = vadd.f32 %v1051, %v1105
          %v1107 = vpop.f32.mrb[0].mxu0
          %1108 = vdwg.mxu0
          %v1109 = vld [vmem:[#allocation6] sm:$0xff]
          %v1110 = vld [vmem:[#allocation6 + $0x8] sm:$0xff]
          %v1111 = vlaneseq
          %v1112 = vand.u32 %v1111, 127
          %vm1113 = vcmp.lt.s32.totalorder %v1112, 32
          %v1114 = vadd.f32 %v1109, %v1103
          %v1115 = vadd.f32 %v1110, %v1106
          %v1116 = vld [vmem:[%s12] sm:$0x1]
          %v1117 = vld [vmem:[%s13] sm:$0x1]
          %1118 = vadd.xlane.f32.xlu0 %v1114
          %v1119 = vpop.xlane.xlu0 %1118
          %1120 = vadd.xlane.f32.xlu0 %v1115
          %v1121 = vpop.xlane.xlu0 %1120
          %v1122 = vmul.f32 %v1119, 0.03125
          %v1123 = vmul.f32 %v1121, 0.03125
          %v1124 = vsub.f32 %v1114, %v1122
          %v1125 = vsub.f32 %v1115, %v1123
          %v1126 = vsel %vm1113, %v1124, 0.0
          %v1127 = vsel %vm1113, %v1125, 0.0
          %v1128 = vmul.f32 %v1126, %v1126
          %v1129 = vmul.f32 %v1127, %v1127
          %1130 = vadd.xlane.f32.xlu0 %v1128
          %v1131 = vpop.xlane.xlu0 %1130
          %1132 = vadd.xlane.f32.xlu0 %v1129
          %v1133 = vpop.xlane.xlu0 %1132
          %v1134 = vmul.f32 %v1131, 0.03125
          %v1135 = vmul.f32 %v1133, 0.03125
          %v1136 = vadd.f32 %v1134, 1e-05
          %v1137 = vadd.f32 %v1135, 1e-05
          %v1138 = vrsqrt.pop %v1136
          %v1139 = vrsqrt.pop %v1137
          %v1140 = vmul.f32 %v1126, %v1138
          %v1141 = vmul.f32 %v1127, %v1139
          %v1143 = vlaneseq
          %v1144 = vshrl.u32 %v1143, 7
          %v1145 = vsub.s32 0, %v1144
          %v1146 = vrot.slane %v1116, %v1145
          %v1148 = vmul.f32 %v1140, %v1146
          %v1149 = vmul.f32 %v1141, %v1146
          %v1151 = vlaneseq
          %v1152 = vshrl.u32 %v1151, 7
          %v1153 = vsub.s32 0, %v1152
          %v1154 = vrot.slane %v1117, %v1153
          %v1156 = vadd.f32 %v1148, %v1154
          %v1157 = vadd.f32 %v1149, %v1154
          %v1158 = vpack.c.bf16 %v1157, %v1156
          %v1159 = vld [vmem:[%s6] sm:$0xf]
          %v1160 = vld [vmem:[%s6 + $0x4] sm:$0xf]
          %v1161 = vld [vmem:[%s6 + $0x8] sm:$0xf]
          %v1162 = vld [vmem:[%s6 + $0xc] sm:$0xf]
          %v1163 = vld [vmem:[%s6 + $0x10] sm:$0xf]
          %v1164 = vld [vmem:[%s6 + $0x14] sm:$0xf]
          %v1165 = vld [vmem:[%s6 + $0x18] sm:$0xf]
          %v1166 = vld [vmem:[%s6 + $0x1c] sm:$0xf]
          %v1167 = vld [vmem:[%s6 + $0x20] sm:$0xf]
          %v1168 = vld [vmem:[%s6 + $0x24] sm:$0xf]
          %v1169 = vld [vmem:[%s6 + $0x28] sm:$0xf]
          %v1170 = vld [vmem:[%s6 + $0x2c] sm:$0xf]
          %v1171 = vld [vmem:[%s6 + $0x30] sm:$0xf]
          %v1172 = vld [vmem:[%s6 + $0x34] sm:$0xf]
          %v1173 = vld [vmem:[%s6 + $0x38] sm:$0xf]
          %v1174 = vld [vmem:[%s6 + $0x3c] sm:$0xf]
          %v1175 = vld [vmem:[%s7] sm:$0x1]
          %v1177 = vlaneseq
          %v1178 = vshrl.u32 %v1177, 7
          %v1179 = vsub.s32 0, %v1178
          %v1180 = vrot.slane %v1175, %v1179
          %v1198 = vunpack.c.l.b16 %v1159
          %v1199 = vunpack.c.l.b16 %v1160
          %v1200 = vunpack.c.l.b16 %v1161
          %v1201 = vunpack.c.l.b16 %v1162
          %v1202 = vunpack.c.l.b16 %v1163
          %v1203 = vunpack.c.l.b16 %v1164
          %v1204 = vunpack.c.l.b16 %v1165
          %v1205 = vunpack.c.l.b16 %v1166
          %v1206 = vunpack.c.l.b16 %v1167
          %v1207 = vunpack.c.l.b16 %v1168
          %v1208 = vunpack.c.l.b16 %v1169
          %v1209 = vunpack.c.l.b16 %v1170
          %v1210 = vunpack.c.l.b16 %v1171
          %v1211 = vunpack.c.l.b16 %v1172
          %v1212 = vunpack.c.l.b16 %v1173
          %v1213 = vunpack.c.l.b16 %v1174
          %v1214 = vpack.c.b16 %v1199, %v1198
          %v1215 = vpack.c.b16 %v1201, %v1200
          %v1216 = vpack.c.b16 %v1203, %v1202
          %v1217 = vpack.c.b16 %v1205, %v1204
          %v1218 = vpack.c.b16 %v1207, %v1206
          %v1219 = vpack.c.b16 %v1209, %v1208
          %v1220 = vpack.c.b16 %v1211, %v1210
          %v1221 = vpack.c.b16 %v1213, %v1212
          %1230 = vmatprep.subr.bf16.mxu0 0
          %1231 = vmatpush1.bf16.msra.mxu0 %v1214
          %1232 = vmatprep.subr.bf16.mxu0 0
          %1233 = vmatpush1.bf16.msra.mxu0 %v1215
          %1234 = vmatprep.subr.bf16.mxu0 0
          %1235 = vmatpush1.bf16.msra.mxu0 %v1216
          %1236 = vmatprep.subr.bf16.mxu0 0
          %1237 = vmatpush1.bf16.msra.mxu0 %v1217
          %1238 = vmatprep.subr.bf16.mxu0 0
          %1239 = vmatpush1.bf16.msra.mxu0 %v1218
          %1240 = vmatprep.subr.bf16.mxu0 0
          %1241 = vmatpush1.bf16.msra.mxu0 %v1219
          %1242 = vmatprep.subr.bf16.mxu0 0
          %1243 = vmatpush1.bf16.msra.mxu0 %v1220
          %1244 = vmatprep.subr.bf16.mxu0 0
          %1245 = vmatpush1.bf16.msra.mxu0 %v1221
          %1246 = vmatprep.subr.bf16.mxu0 0
          %1247 = vmatpush1.bf16.msra.mxu0 0
          %1248 = vmatprep.subr.bf16.mxu0 0
          %1249 = vmatpush1.bf16.msra.mxu0 0
          %1250 = vmatprep.subr.bf16.mxu0 0
          %1251 = vmatpush1.bf16.msra.mxu0 0
          %1252 = vmatprep.subr.bf16.mxu0 0
          %1253 = vmatpush1.bf16.msra.mxu0 0
          %1254 = vmatprep.subr.bf16.mxu0 0
          %1255 = vmatpush1.bf16.msra.mxu0 0
          %1256 = vmatprep.subr.bf16.mxu0 0
          %1257 = vmatpush1.bf16.msra.mxu0 0
          %1258 = vmatprep.subr.bf16.mxu0 0
          %1259 = vmatpush1.bf16.msra.mxu0 0
          %1260 = vmatprep.subr.bf16.mxu0 0
          %1261 = vmatpush1.bf16.msra.mxu0 0
          %1262 = vmatprep.mubr.bf16.mxu0 0
          %1263 = vmatmul.mubr.bf16.gmra.mrb[0].mxu0 %v1158
          %v1264 = vpop.f32.mrb[0].mxu0
          %v1265 = vadd.f32 %v1180, %v1264
          %v1266 = vpop.f32.mrb[0].mxu0
          %v1267 = vpop.f32.mrb[0].mxu0
          %v1268 = vadd.f32 %v1180, %v1267
          %v1269 = vpop.f32.mrb[0].mxu0
          %1270 = vdwg.mxu0
          %v1271 = vxor.u32 %v1265, 2147483648
          %v1272 = vxor.u32 %v1268, 2147483648
          %v1273 = vmul.f32 %v1271, 1.442695
          %v1274 = vpow.pop %v1273
          %v1275 = vmul.f32 %v1272, 1.442695
          %v1276 = vpow.pop %v1275
          %v1277 = vadd.f32 %v1274, 1.0
          %v1278 = vadd.f32 %v1276, 1.0
          %v1279 = vrcp.pop %v1277
          %v1280 = vmul.f32 1.0, %v1279
          %v1281 = vrcp.pop %v1278
          %v1282 = vmul.f32 1.0, %v1281
          %v1283 = vmul.f32 %v1156, %v1280
          %v1284 = vmul.f32 %v1157, %v1282
          %v1285 = vpack.c.bf16 %v1284, %v1283
          %v1286 = vld [vmem:[%s8] sm:$0xf]
          %v1287 = vld [vmem:[%s8 + $0x4] sm:$0xf]
          %v1288 = vld [vmem:[%s8 + $0x8] sm:$0xf]
          %v1289 = vld [vmem:[%s8 + $0xc] sm:$0xf]
          %v1290 = vld [vmem:[%s8 + $0x10] sm:$0xf]
          %v1291 = vld [vmem:[%s8 + $0x14] sm:$0xf]
          %v1292 = vld [vmem:[%s8 + $0x18] sm:$0xf]
          %v1293 = vld [vmem:[%s8 + $0x1c] sm:$0xf]
          %v1294 = vld [vmem:[%s8 + $0x20] sm:$0xf]
          %v1295 = vld [vmem:[%s8 + $0x24] sm:$0xf]
          %v1296 = vld [vmem:[%s8 + $0x28] sm:$0xf]
          %v1297 = vld [vmem:[%s8 + $0x2c] sm:$0xf]
          %v1298 = vld [vmem:[%s8 + $0x30] sm:$0xf]
          %v1299 = vld [vmem:[%s8 + $0x34] sm:$0xf]
          %v1300 = vld [vmem:[%s8 + $0x38] sm:$0xf]
          %v1301 = vld [vmem:[%s8 + $0x3c] sm:$0xf]
          %v1302 = vld [vmem:[%s9] sm:$0x1]
          %v1304 = vlaneseq
          %v1305 = vshrl.u32 %v1304, 7
          %v1306 = vsub.s32 0, %v1305
          %v1307 = vrot.slane %v1302, %v1306
          %v1325 = vunpack.c.l.b16 %v1286
          %v1326 = vunpack.c.l.b16 %v1287
          %v1327 = vunpack.c.l.b16 %v1288
          %v1328 = vunpack.c.l.b16 %v1289
          %v1329 = vunpack.c.l.b16 %v1290
          %v1330 = vunpack.c.l.b16 %v1291
          %v1331 = vunpack.c.l.b16 %v1292
          %v1332 = vunpack.c.l.b16 %v1293
          %v1333 = vunpack.c.l.b16 %v1294
          %v1334 = vunpack.c.l.b16 %v1295
          %v1335 = vunpack.c.l.b16 %v1296
          %v1336 = vunpack.c.l.b16 %v1297
          %v1337 = vunpack.c.l.b16 %v1298
          %v1338 = vunpack.c.l.b16 %v1299
          %v1339 = vunpack.c.l.b16 %v1300
          %v1340 = vunpack.c.l.b16 %v1301
          %v1341 = vpack.c.b16 %v1326, %v1325
          %v1342 = vpack.c.b16 %v1328, %v1327
          %v1343 = vpack.c.b16 %v1330, %v1329
          %v1344 = vpack.c.b16 %v1332, %v1331
          %v1345 = vpack.c.b16 %v1334, %v1333
          %v1346 = vpack.c.b16 %v1336, %v1335
          %v1347 = vpack.c.b16 %v1338, %v1337
          %v1348 = vpack.c.b16 %v1340, %v1339
          %1357 = vmatprep.subr.bf16.mxu0 0
          %1358 = vmatpush1.bf16.msra.mxu0 %v1341
          %1359 = vmatprep.subr.bf16.mxu0 0
          %1360 = vmatpush1.bf16.msra.mxu0 %v1342
          %1361 = vmatprep.subr.bf16.mxu0 0
          %1362 = vmatpush1.bf16.msra.mxu0 %v1343
          %1363 = vmatprep.subr.bf16.mxu0 0
          %1364 = vmatpush1.bf16.msra.mxu0 %v1344
          %1365 = vmatprep.subr.bf16.mxu0 0
          %1366 = vmatpush1.bf16.msra.mxu0 %v1345
          %1367 = vmatprep.subr.bf16.mxu0 0
          %1368 = vmatpush1.bf16.msra.mxu0 %v1346
          %1369 = vmatprep.subr.bf16.mxu0 0
          %1370 = vmatpush1.bf16.msra.mxu0 %v1347
          %1371 = vmatprep.subr.bf16.mxu0 0
          %1372 = vmatpush1.bf16.msra.mxu0 %v1348
          %1373 = vmatprep.subr.bf16.mxu0 0
          %1374 = vmatpush1.bf16.msra.mxu0 0
          %1375 = vmatprep.subr.bf16.mxu0 0
          %1376 = vmatpush1.bf16.msra.mxu0 0
          %1377 = vmatprep.subr.bf16.mxu0 0
          %1378 = vmatpush1.bf16.msra.mxu0 0
          %1379 = vmatprep.subr.bf16.mxu0 0
          %1380 = vmatpush1.bf16.msra.mxu0 0
          %1381 = vmatprep.subr.bf16.mxu0 0
          %1382 = vmatpush1.bf16.msra.mxu0 0
          %1383 = vmatprep.subr.bf16.mxu0 0
          %1384 = vmatpush1.bf16.msra.mxu0 0
          %1385 = vmatprep.subr.bf16.mxu0 0
          %1386 = vmatpush1.bf16.msra.mxu0 0
          %1387 = vmatprep.subr.bf16.mxu0 0
          %1388 = vmatpush1.bf16.msra.mxu0 0
          %1389 = vmatprep.mubr.bf16.mxu0 0
          %1390 = vmatmul.mubr.bf16.gmra.mrb[0].mxu0 %v1285
          %v1391 = vpop.f32.mrb[0].mxu0
          %v1392 = vadd.f32 %v1307, %v1391
          %v1393 = vpop.f32.mrb[0].mxu0
          %v1394 = vpop.f32.mrb[0].mxu0
          %v1395 = vadd.f32 %v1307, %v1394
          %v1396 = vpop.f32.mrb[0].mxu0
          %1397 = vdwg.mxu0
          %v1398 = vmax.f32 %v1392, 0.0
          %v1399 = vmax.f32 %v1395, 0.0
          %v1400 = vpack.c.bf16 %v1399, %v1398
          %v1401 = vld [vmem:[#allocation12] sm:$0xf]
          %v1402 = vld [vmem:[#allocation12 + $0x4] sm:$0xf]
          %v1403 = vld [vmem:[#allocation12 + $0x8] sm:$0xf]
          %v1404 = vld [vmem:[#allocation12 + $0xc] sm:$0xf]
          %v1405 = vld [vmem:[#allocation12 + $0x10] sm:$0xf]
          %v1406 = vld [vmem:[#allocation12 + $0x14] sm:$0xf]
          %v1407 = vld [vmem:[#allocation12 + $0x18] sm:$0xf]
          %v1408 = vld [vmem:[#allocation12 + $0x1c] sm:$0xf]
          %v1409 = vld [vmem:[#allocation12 + $0x20] sm:$0xf]
          %v1410 = vld [vmem:[#allocation12 + $0x24] sm:$0xf]
          %v1411 = vld [vmem:[#allocation12 + $0x28] sm:$0xf]
          %v1412 = vld [vmem:[#allocation12 + $0x2c] sm:$0xf]
          %v1413 = vld [vmem:[#allocation12 + $0x30] sm:$0xf]
          %v1414 = vld [vmem:[#allocation12 + $0x34] sm:$0xf]
          %v1415 = vld [vmem:[#allocation12 + $0x38] sm:$0xf]
          %v1416 = vld [vmem:[#allocation12 + $0x3c] sm:$0xf]
          %v1417 = vld [vmem:[%s11] sm:$0x1]
          %v1419 = vlaneseq
          %v1420 = vshrl.u32 %v1419, 7
          %v1421 = vsub.s32 0, %v1420
          %v1422 = vrot.slane %v1417, %v1421
          %v1440 = vunpack.c.l.b16 %v1401
          %v1441 = vunpack.c.l.b16 %v1402
          %v1442 = vunpack.c.l.b16 %v1403
          %v1443 = vunpack.c.l.b16 %v1404
          %v1444 = vunpack.c.l.b16 %v1405
          %v1445 = vunpack.c.l.b16 %v1406
          %v1446 = vunpack.c.l.b16 %v1407
          %v1447 = vunpack.c.l.b16 %v1408
          %v1448 = vunpack.c.l.b16 %v1409
          %v1449 = vunpack.c.l.b16 %v1410
          %v1450 = vunpack.c.l.b16 %v1411
          %v1451 = vunpack.c.l.b16 %v1412
          %v1452 = vunpack.c.l.b16 %v1413
          %v1453 = vunpack.c.l.b16 %v1414
          %v1454 = vunpack.c.l.b16 %v1415
          %v1455 = vunpack.c.l.b16 %v1416
          %v1456 = vpack.c.b16 %v1441, %v1440
          %v1457 = vpack.c.b16 %v1443, %v1442
          %v1458 = vpack.c.b16 %v1445, %v1444
          %v1459 = vpack.c.b16 %v1447, %v1446
          %v1460 = vpack.c.b16 %v1449, %v1448
          %v1461 = vpack.c.b16 %v1451, %v1450
          %v1462 = vpack.c.b16 %v1453, %v1452
          %v1463 = vpack.c.b16 %v1455, %v1454
          %1472 = vmatprep.subr.bf16.mxu0 0
          %1473 = vmatpush1.bf16.msra.mxu0 %v1456
          %1474 = vmatprep.subr.bf16.mxu0 0
          %1475 = vmatpush1.bf16.msra.mxu0 %v1457
          %1476 = vmatprep.subr.bf16.mxu0 0
          %1477 = vmatpush1.bf16.msra.mxu0 %v1458
          %1478 = vmatprep.subr.bf16.mxu0 0
          %1479 = vmatpush1.bf16.msra.mxu0 %v1459
          %1480 = vmatprep.subr.bf16.mxu0 0
          %1481 = vmatpush1.bf16.msra.mxu0 %v1460
          %1482 = vmatprep.subr.bf16.mxu0 0
          %1483 = vmatpush1.bf16.msra.mxu0 %v1461
          %1484 = vmatprep.subr.bf16.mxu0 0
          %1485 = vmatpush1.bf16.msra.mxu0 %v1462
          %1486 = vmatprep.subr.bf16.mxu0 0
          %1487 = vmatpush1.bf16.msra.mxu0 %v1463
          %1488 = vmatprep.subr.bf16.mxu0 0
          %1489 = vmatpush1.bf16.msra.mxu0 0
          %1490 = vmatprep.subr.bf16.mxu0 0
          %1491 = vmatpush1.bf16.msra.mxu0 0
          %1492 = vmatprep.subr.bf16.mxu0 0
          %1493 = vmatpush1.bf16.msra.mxu0 0
          %1494 = vmatprep.subr.bf16.mxu0 0
          %1495 = vmatpush1.bf16.msra.mxu0 0
          %1496 = vmatprep.subr.bf16.mxu0 0
          %1497 = vmatpush1.bf16.msra.mxu0 0
          %1498 = vmatprep.subr.bf16.mxu0 0
          %1499 = vmatpush1.bf16.msra.mxu0 0
          %1500 = vmatprep.subr.bf16.mxu0 0
          %1501 = vmatpush1.bf16.msra.mxu0 0
          %1502 = vmatprep.subr.bf16.mxu0 0
          %1503 = vmatpush1.bf16.msra.mxu0 0
          %1504 = vmatprep.mubr.bf16.mxu0 0
          %1505 = vmatmul.mubr.bf16.gmra.mrb[0].mxu0 %v1400
          %v1506 = vpop.f32.mrb[0].mxu0
          %v1507 = vadd.f32 %v1422, %v1506
          %v1508 = vpop.f32.mrb[0].mxu0
          %v1509 = vpop.f32.mrb[0].mxu0
          %v1510 = vadd.f32 %v1422, %v1509
          %v1511 = vpop.f32.mrb[0].mxu0
          %1512 = vdwg.mxu0
          %v1513 = vadd.f32 %v1283, %v1507
          %v1514 = vadd.f32 %v1284, %v1510
          %v1515 = vld [vmem:[%s14] sm:$0x1]
          %v1516 = vld [vmem:[%s15] sm:$0x1]
          %1517 = vadd.xlane.f32.xlu0 %v1513
          %v1518 = vpop.xlane.xlu0 %1517
          %1519 = vadd.xlane.f32.xlu0 %v1514
          %v1520 = vpop.xlane.xlu0 %1519
          %v1521 = vmul.f32 %v1518, 0.03125
          %v1522 = vmul.f32 %v1520, 0.03125
          %v1523 = vsub.f32 %v1513, %v1521
          %v1524 = vsub.f32 %v1514, %v1522
          %v1525 = vsel %vm1113, %v1523, 0.0
          %v1526 = vsel %vm1113, %v1524, 0.0
          %v1527 = vmul.f32 %v1525, %v1525
          %v1528 = vmul.f32 %v1526, %v1526
          %1529 = vadd.xlane.f32.xlu0 %v1527
          %v1530 = vpop.xlane.xlu0 %1529
          %1531 = vadd.xlane.f32.xlu0 %v1528
          %v1532 = vpop.xlane.xlu0 %1531
          %v1533 = vmul.f32 %v1530, 0.03125
          %v1534 = vmul.f32 %v1532, 0.03125
          %v1535 = vadd.f32 %v1533, 1e-05
          %v1536 = vadd.f32 %v1534, 1e-05
          %v1537 = vrsqrt.pop %v1535
          %v1538 = vrsqrt.pop %v1536
          %v1539 = vmul.f32 %v1525, %v1537
          %v1540 = vmul.f32 %v1526, %v1538
          %v1542 = vlaneseq
          %v1543 = vshrl.u32 %v1542, 7
          %v1544 = vsub.s32 0, %v1543
          %v1545 = vrot.slane %v1515, %v1544
          %v1547 = vmul.f32 %v1539, %v1545
          %v1548 = vmul.f32 %v1540, %v1545
          %v1550 = vlaneseq
          %v1551 = vshrl.u32 %v1550, 7
          %v1552 = vsub.s32 0, %v1551
          %v1553 = vrot.slane %v1516, %v1552
          %v1555 = vadd.f32 %v1547, %v1553
          %v1556 = vadd.f32 %v1548, %v1553
          %1557 = vst [vmem:[#allocation14] sm:$0xff] %v1555
          %1558 = vst [vmem:[#allocation14 + $0x8] sm:$0xff] %v1556
        $region108: #{tpu_custom_call.1} parent=83 // pred_fallthru
          _
        // Predicated region
        $region109: #{tpu_custom_call.1} parent=83 // pred_check
          %p1559 = pneg %p409
        $region110: #{tpu_custom_call.1} parent=83 // pred_check_branch
          %1561 = sbr.rel (%p1559) target = $region112
        $region111: #{tpu_custom_call.1} parent=83 // pred_region
          %s1562 = smul.u32 2, %s37
          %s1564 = ssub.s32 256, 256
          %1565 = vsyncadd [#allocation8], %s1564
          %s1566 = smul.addr %s1562, 128
          %s1567 = scalar_lea.hbm %s16, %s1566
          %s1568 = sshll.u32 [#allocation14], 4
          %s1569 = int_to_ptr.vmem [resolvable:$true] %s1568
          %1574 = dma.vmem_to_hbm [thread:$0]  %s1569, 256, %s1567, [#allocation8], 128, 128, 8
        $region112: #{tpu_custom_call.1} parent=83 // pred_fallthru
          _
        // Predicated region
        $region113: #{tpu_custom_call.1} parent=83 // pred_check
          %p1575 = pneg %p409
        $region114: #{tpu_custom_call.1} parent=83 // pred_check_branch
          %1577 = sbr.rel (%p1575) target = $region116
        $region115: #{tpu_custom_call.1} parent=83 // pred_region
          %1578 = dma.done [#allocation8], 256
        $region116: #{tpu_custom_call.1} parent=83 // pred_fallthru
          _
      $region84: #{tpu_custom_call.1} parent=5 // pred_fallthru
        _
      %p1579 = scmp.le.s32.totalorder 2, %s28
      // Predicated region
      $region117: #{tpu_custom_call.1} parent=5 // pred_check
        %p1580 = pneg %p1579
      $region118: #{tpu_custom_call.1} parent=5 // pred_check_branch
        %1582 = sbr.rel (%p1580) target = $region120
      $region119: #{tpu_custom_call.1} parent=5 // pred_region
        %s1583 = ssub.s32 %s28, 2
      $region120: #{tpu_custom_call.1} parent=5 // pred_fallthru
        _
    $region6: #{tpu_custom_call.1} parent=1 // loop_footer
      %s32 = sadd.s32 1, %s28
    $region7: #{tpu_custom_call.1} parent=1 // loop_footer_branch
      %27 = sbr.rel target = $region3
    $region8: #{tpu_custom_call.1} parent=1 // loop_exit
      _
    %1584 = vsyncpa [#allocation7], 1
    %s1585 = scalar_lea.sflag [#allocation7], 1
    %1586 = vsyncpa %s1585, 1
    %1587 = vsyncpa [#allocation10], 1
    %s1588 = scalar_lea.sflag [#allocation10], 1
    %1589 = vsyncpa %s1588, 1
    %1590 = vsyncpa [#allocation13], 1
    %1591 = vsyncpa [#allocation8], 1
    %s1592 = scalar_lea.sflag [#allocation8], 1
    %1593 = vsyncpa %s1592, 1

// kernel: tpu_custom_call.1
$region0: #{tpu_custom_call.1}
  #allocation0 [shape = 'u32[]', space=smem, size = 0x4, offset = 0x4, fixed_abs, tag = 'smem constant byte address 0x4 - core index']
  #allocation1 [shape = 'u32[144,128]{1,0:T(1,128)}', space=vmem, size = 0x12000, scoped, tag = 'internal scratch']
  #allocation2 [shape = 'bf16[4,16,8]{2,1,0:T(16,128)(2,1)}', space=vmem, size = 0x4000, scoped, tag = 'scratch operand']
  #allocation3 [shape = 'bf16[4,16,8]{2,1,0:T(16,128)(2,1)}', space=vmem, size = 0x4000, scoped, tag = 'scratch operand']
  #allocation4 [shape = 'bf16[4,16,8]{2,1,0:T(16,128)(2,1)}', space=vmem, size = 0x4000, scoped, tag = 'scratch operand']
  #allocation5 [shape = 'bf16[4,16,8]{2,1,0:T(16,128)(2,1)}', space=vmem, size = 0x4000, scoped, tag = 'scratch operand']
  %s0 = inlined_call_operand.hbm [shape: f32[2,8,128], index: 0, kind: input, shape index: {}]
  %s1 = inlined_call_operand.hbm [shape: bf16[4,8,8], index: 1, kind: input, shape index: {}]
  %s2 = inlined_call_operand.vmem [shape: bf16[128,96], index: 2, kind: input, shape index: {}]
  %s3 = inlined_call_operand.vmem [shape: f32[1,96], index: 3, kind: input, shape index: {}]
  %s4 = inlined_call_operand.hbm [shape: bf16[32,128], index: 4, kind: input, shape index: {}]
  %s5 = inlined_call_operand.vmem [shape: f32[1,128], index: 5, kind: input, shape index: {}]
  %s6 = inlined_call_operand.vmem [shape: bf16[128,128], index: 6, kind: input, shape index: {}]
  %s7 = inlined_call_operand.vmem [shape: f32[1,128], index: 7, kind: input, shape index: {}]
  %s8 = inlined_call_operand.vmem [shape: bf16[128,128], index: 8, kind: input, shape index: {}]
  %s9 = inlined_call_operand.vmem [shape: f32[1,128], index: 9, kind: input, shape index: {}]
  %s10 = inlined_call_operand.hbm [shape: bf16[128,128], index: 10, kind: input, shape index: {}]
  %s11 = inlined_call_operand.vmem [shape: f32[1,128], index: 11, kind: input, shape index: {}]
  %s12 = inlined_call_operand.vmem [shape: f32[1,128], index: 12, kind: input, shape index: {}]
  %s13 = inlined_call_operand.vmem [shape: f32[1,128], index: 13, kind: input, shape index: {}]
  %s14 = inlined_call_operand.vmem [shape: f32[1,128], index: 14, kind: input, shape index: {}]
  %s15 = inlined_call_operand.vmem [shape: f32[1,128], index: 15, kind: input, shape index: {}]
  %s16 = inlined_call_operand.hbm [shape: f32[2,8,128], index: 16, kind: output, shape index: {}]
  %s17 = sld [smem:[#allocation0]]
  $region121: #{tpu_custom_call.1} parent=0
    _
  %s19 = ssub.s32 1, %s17
  %s20 = scalar_select 0, %s19, %s17
  $region1: #{tpu_custom_call.1} parent=0
    #allocation6 [shape = 'u8[8192]{0}', space=vmem, size = 0x2000, scoped, tag = 'input window, operand 0, single buffered']
    #allocation7 [shape = 's32[2]{0}', space=sflag, size = 0x8, scoped, tag = 'scoped memory for tpu_custom_call.1']
    #allocation8 [shape = 's32[2]{0}', space=sflag, size = 0x8, scoped, tag = 'scoped memory for tpu_custom_call.1']
    #allocation9 [shape = 'u8[4096]{0}', space=vmem, size = 0x1000, scoped, tag = 'input window, operand 1']
    #allocation10 [shape = 's32[2]{0}', space=sflag, size = 0x8, scoped, tag = 'scoped memory for tpu_custom_call.1']
    #allocation11 [shape = 'u8[8192]{0}', space=vmem, size = 0x2000, scoped, tag = 'input window, operand 4, single buffered']
    #allocation12 [shape = 'u8[32768]{0}', space=vmem, size = 0x8000, scoped, tag = 'input window, operand 10, single buffered']
    #allocation13 [shape = 's32[1]{0}', space=sflag, size = 0x4, scoped, tag = 'scoped memory for tpu_custom_call.1']
    #allocation14 [shape = 'u8[8192]{0}', space=vmem, size = 0x2000, scoped, tag = 'output window, operand 0, single buffered']
    %21 = vsyncpa [#allocation7], 0
    %22 = vsyncpa [#allocation10], 0
    %s23 = scalar_lea.sflag [#allocation10], 1
    %24 = vsyncpa %s23, 0
    %25 = vsyncpa [#allocation13], 0
    %26 = vsyncpa [#allocation8], 0
    loop: start=0, step=1, limit=6
    $region2: #{tpu_custom_call.1} parent=1 // loop_pre_header
      _
    $region3: #{tpu_custom_call.1} parent=1 // loop_header
      %s28 = sphi 0, %s32
      %p29 = scmp.ge.s32.totalorder %s28, 6
      %s35 = sphi 0, %s47
      %s36 = sphi 0, %s43
      %s37 = sphi 0, %s35
      %s38 = sphi 0, %s36
      %s39 = sphi 0, %s37
      %s40 = sphi 0, %s38
      %s50 = sphi 0, %s52
      %s53 = sphi 0, %s50
      %s54 = sphi 0, %s53
      %s70 = sphi 0, %s54
      %s76 = sphi 0, %s78
      %s79 = sphi 0, %s76
      %s80 = sphi 0, %s79
      %s96 = sphi 0, %s80
      %s100 = sphi 0, %s100
      %s102 = sphi 0, %s100
      %s103 = sphi 0, %s102
      %s117 = sphi 0, %s103
      %s121 = sphi 0, %s121
      %s123 = sphi 0, %s121
      %s124 = sphi 0, %s123
      %s138 = sphi 0, %s124
      %s142 = sphi 0, %s142
      %s144 = sphi 0, %s142
      %s145 = sphi 0, %s144
      %s159 = sphi 0, %s145
      %s163 = sphi 0, %s163
      %s165 = sphi 0, %s163
      %s166 = sphi 0, %s165
      %s180 = sphi 0, %s166
      %s184 = sphi 0, %s184
      %s186 = sphi 0, %s184
      %s187 = sphi 0, %s186
      %s201 = sphi 0, %s187
      %s205 = sphi 0, %s205
      %s207 = sphi 0, %s205
      %s208 = sphi 0, %s207
      %s222 = sphi 0, %s208
      %s226 = sphi 0, %s226
      %s228 = sphi 0, %s226
      %s229 = sphi 0, %s228
      %s243 = sphi 0, %s229
      %s247 = sphi 0, %s247
      %s249 = sphi 0, %s247
      %s250 = sphi 0, %s249
      %s264 = sphi 0, %s250
      %s268 = sphi 0, %s268
      %s270 = sphi 0, %s268
      %s271 = sphi 0, %s270
      %s285 = sphi 0, %s271
      %s289 = sphi 0, %s289
      %s291 = sphi 0, %s289
      %s292 = sphi 0, %s291
      %s306 = sphi 0, %s292
      %s310 = sphi 0, %s310
      %s312 = sphi 0, %s310
      %s313 = sphi 0, %s312
      %s327 = sphi 0, %s313
      %s331 = sphi 0, %s331
      %s333 = sphi 0, %s331
      %s334 = sphi 0, %s333
      %s348 = sphi 0, %s334
      %s352 = sphi 0, %s352
      %s354 = sphi 0, %s352
      %s355 = sphi 0, %s354
      %s369 = sphi 0, %s355
      %s373 = sphi 0, %s373
      %s375 = sphi 0, %s373
      %s376 = sphi 0, %s375
      %s390 = sphi 0, %s376
      %s396 = sphi 0, %s398
      %s399 = sphi 0, %s396
      %s400 = sphi 0, %s399
      %s416 = sphi 0, %s400
    $region4: #{tpu_custom_call.1} parent=1 // loop_header_branch
      %31 = sbr.rel (%p29) target = $region8
    $region5: #{tpu_custom_call.1} parent=1 // loop_body
      %s33 = ssub.s32 %s28, 1
      %s34 = ssub.s32 %s28, 2
      %s41 = sadd.s32 1, %s36
      %p42 = scmp.ge.s32.totalorder %s41, 4
      %s43 = scalar_select %p42, 0, %s41
      %s44 = sadd.s32 1, %s35
      %s45 = scalar_select %p42, %s44, %s35
      %p46 = scmp.ge.s32.totalorder %s45, 1
      %s47 = scalar_select %p46, 0, %s45
      %s48 = ssub.s32 %s35, %s47
      %p49 = scmp.eq.s32.totalorder %s48, 0
      %s51 = sadd.s32 %s50, 1
      %s52 = scalar_select %p49, %s50, %s51
      %p55 = pneg %p49
      %p56 = scmp.eq.s32.totalorder %s28, 3
      %p57 = por %p55, %p56
      %p58 = scmp.ne.s32.totalorder %s50, %s53
      %p59 = scmp.eq.s32.totalorder %s28, 0
      %p60 = por %p58, %p59
      %p61 = scmp.ne.s32.totalorder %s50, %s53
      %p62 = scmp.eq.s32.totalorder %s33, 3
      %p63 = por %p61, %p62
      %p64 = scmp.ne.s32.totalorder %s53, %s54
      %p65 = scmp.eq.s32.totalorder %s33, 0
      %p66 = por %p64, %p65
      %p67 = scmp.ne.s32.totalorder %s53, %s54
      %p68 = scmp.eq.s32.totalorder %s34, 3
      %p69 = por %p67, %p68
      %p71 = scmp.ne.s32.totalorder %s54, %s70
      %p72 = scmp.eq.s32.totalorder %s34, 0
      %p73 = por %p71, %p72
      %s74 = ssub.s32 %s36, %s43
      %p75 = scmp.eq.s32.totalorder %s74, 0
      %s77 = sadd.s32 %s76, 1
      %s78 = scalar_select %p75, %s76, %s77
      %p81 = pneg %p75
      %p82 = scmp.eq.s32.totalorder %s28, 3
      %p83 = por %p81, %p82
      %p84 = scmp.ne.s32.totalorder %s76, %s79
      %p85 = scmp.eq.s32.totalorder %s28, 0
      %p86 = por %p84, %p85
      %p87 = scmp.ne.s32.totalorder %s76, %s79
      %p88 = scmp.eq.s32.totalorder %s33, 3
      %p89 = por %p87, %p88
      %p90 = scmp.ne.s32.totalorder %s79, %s80
      %p91 = scmp.eq.s32.totalorder %s33, 0
      %p92 = por %p90, %p91
      %p93 = scmp.ne.s32.totalorder %s79, %s80
      %p94 = scmp.eq.s32.totalorder %s34, 3
      %p95 = por %p93, %p94
      %p97 = scmp.ne.s32.totalorder %s80, %s96
      %p98 = scmp.eq.s32.totalorder %s34, 0
      %p99 = por %p97, %p98
      %s101 = sadd.s32 %s100, 1
      %p104 = scmp.eq.s32.totalorder %s28, 3
      %p105 = scmp.ne.s32.totalorder %s100, %s102
      %p106 = scmp.eq.s32.totalorder %s28, 0
      %p107 = por %p105, %p106
      %p108 = scmp.ne.s32.totalorder %s100, %s102
      %p109 = scmp.eq.s32.totalorder %s33, 3
      %p110 = por %p108, %p109
      %p111 = scmp.ne.s32.totalorder %s102, %s103
      %p112 = scmp.eq.s32.totalorder %s33, 0
      %p113 = por %p111, %p112
      %p114 = scmp.ne.s32.totalorder %s102, %s103
      %p115 = scmp.eq.s32.totalorder %s34, 3
      %p116 = por %p114, %p115
      %p118 = scmp.ne.s32.totalorder %s103, %s117
      %p119 = scmp.eq.s32.totalorder %s34, 0
      %p120 = por %p118, %p119
      %s122 = sadd.s32 %s121, 1
      %p125 = scmp.eq.s32.totalorder %s28, 3
      %p126 = scmp.ne.s32.totalorder %s121, %s123
      %p127 = scmp.eq.s32.totalorder %s28, 0
      %p128 = por %p126, %p127
      %p129 = scmp.ne.s32.totalorder %s121, %s123
      %p130 = scmp.eq.s32.totalorder %s33, 3
      %p131 = por %p129, %p130
      %p132 = scmp.ne.s32.totalorder %s123, %s124
      %p133 = scmp.eq.s32.totalorder %s33, 0
      %p134 = por %p132, %p133
      %p135 = scmp.ne.s32.totalorder %s123, %s124
      %p136 = scmp.eq.s32.totalorder %s34, 3
      %p137 = por %p135, %p136
      %p139 = scmp.ne.s32.totalorder %s124, %s138
      %p140 = scmp.eq.s32.totalorder %s34, 0
      %p141 = por %p139, %p140
      %s143 = sadd.s32 %s142, 1
      %p146 = scmp.eq.s32.totalorder %s28, 3
      %p147 = scmp.ne.s32.totalorder %s142, %s144
      %p148 = scmp.eq.s32.totalorder %s28, 0
      %p149 = por %p147, %p148
      %p150 = scmp.ne.s32.totalorder %s142, %s144
      %p151 = scmp.eq.s32.totalorder %s33, 3
      %p152 = por %p150, %p151
      %p153 = scmp.ne.s32.totalorder %s144, %s145
      %p154 = scmp.eq.s32.totalorder %s33, 0
      %p155 = por %p153, %p154
      %p156 = scmp.ne.s32.totalorder %s144, %s145
      %p157 = scmp.eq.s32.totalorder %s34, 3
      %p158 = por %p156, %p157
      %p160 = scmp.ne.s32.totalorder %s145, %s159
      %p161 = scmp.eq.s32.totalorder %s34, 0
      %p162 = por %p160, %p161
      %s164 = sadd.s32 %s163, 1
      %p167 = scmp.eq.s32.totalorder %s28, 3
      %p168 = scmp.ne.s32.totalorder %s163, %s165
      %p169 = scmp.eq.s32.totalorder %s28, 0
      %p170 = por %p168, %p169
      %p171 = scmp.ne.s32.totalorder %s163, %s165
      %p172 = scmp.eq.s32.totalorder %s33, 3
      %p173 = por %p171, %p172
      %p174 = scmp.ne.s32.totalorder %s165, %s166
      %p175 = scmp.eq.s32.totalorder %s33, 0
      %p176 = por %p174, %p175
      %p177 = scmp.ne.s32.totalorder %s165, %s166
      %p178 = scmp.eq.s32.totalorder %s34, 3
      %p179 = por %p177, %p178
      %p181 = scmp.ne.s32.totalorder %s166, %s180
      %p182 = scmp.eq.s32.totalorder %s34, 0
      %p183 = por %p181, %p182
      %s185 = sadd.s32 %s184, 1
      %p188 = scmp.eq.s32.totalorder %s28, 3
      %p189 = scmp.ne.s32.totalorder %s184, %s186
      %p190 = scmp.eq.s32.totalorder %s28, 0
      %p191 = por %p189, %p190
      %p192 = scmp.ne.s32.totalorder %s184, %s186
      %p193 = scmp.eq.s32.totalorder %s33, 3
      %p194 = por %p192, %p193
      %p195 = scmp.ne.s32.totalorder %s186, %s187
      %p196 = scmp.eq.s32.totalorder %s33, 0
      %p197 = por %p195, %p196
      %p198 = scmp.ne.s32.totalorder %s186, %s187
      %p199 = scmp.eq.s32.totalorder %s34, 3
      %p200 = por %p198, %p199
      %p202 = scmp.ne.s32.totalorder %s187, %s201
      %p203 = scmp.eq.s32.totalorder %s34, 0
      %p204 = por %p202, %p203
      %s206 = sadd.s32 %s205, 1
      %p209 = scmp.eq.s32.totalorder %s28, 3
      %p210 = scmp.ne.s32.totalorder %s205, %s207
      %p211 = scmp.eq.s32.totalorder %s28, 0
      %p212 = por %p210, %p211
      %p213 = scmp.ne.s32.totalorder %s205, %s207
      %p214 = scmp.eq.s32.totalorder %s33, 3
      %p215 = por %p213, %p214
      %p216 = scmp.ne.s32.totalorder %s207, %s208
      %p217 = scmp.eq.s32.totalorder %s33, 0
      %p218 = por %p216, %p217
      %p219 = scmp.ne.s32.totalorder %s207, %s208
      %p220 = scmp.eq.s32.totalorder %s34, 3
      %p221 = por %p219, %p220
      %p223 = scmp.ne.s32.totalorder %s208, %s222
      %p224 = scmp.eq.s32.totalorder %s34, 0
      %p225 = por %p223, %p224
      %s227 = sadd.s32 %s226, 1
      %p230 = scmp.eq.s32.totalorder %s28, 3
      %p231 = scmp.ne.s32.totalorder %s226, %s228
      %p232 = scmp.eq.s32.totalorder %s28, 0
      %p233 = por %p231, %p232
      %p234 = scmp.ne.s32.totalorder %s226, %s228
      %p235 = scmp.eq.s32.totalorder %s33, 3
      %p236 = por %p234, %p235
      %p237 = scmp.ne.s32.totalorder %s228, %s229
      %p238 = scmp.eq.s32.totalorder %s33, 0
      %p239 = por %p237, %p238
      %p240 = scmp.ne.s32.totalorder %s228, %s229
      %p241 = scmp.eq.s32.totalorder %s34, 3
      %p242 = por %p240, %p241
      %p244 = scmp.ne.s32.totalorder %s229, %s243
      %p245 = scmp.eq.s32.totalorder %s34, 0
      %p246 = por %p244, %p245
      %s248 = sadd.s32 %s247, 1
      %p251 = scmp.eq.s32.totalorder %s28, 3
      %p252 = scmp.ne.s32.totalorder %s247, %s249
      %p253 = scmp.eq.s32.totalorder %s28, 0
      %p254 = por %p252, %p253
      %p255 = scmp.ne.s32.totalorder %s247, %s249
      %p256 = scmp.eq.s32.totalorder %s33, 3
      %p257 = por %p255, %p256
      %p258 = scmp.ne.s32.totalorder %s249, %s250
      %p259 = scmp.eq.s32.totalorder %s33, 0
      %p260 = por %p258, %p259
      %p261 = scmp.ne.s32.totalorder %s249, %s250
      %p262 = scmp.eq.s32.totalorder %s34, 3
      %p263 = por %p261, %p262
      %p265 = scmp.ne.s32.totalorder %s250, %s264
      %p266 = scmp.eq.s32.totalorder %s34, 0
      %p267 = por %p265, %p266
      %s269 = sadd.s32 %s268, 1
      %p272 = scmp.eq.s32.totalorder %s28, 3
      %p273 = scmp.ne.s32.totalorder %s268, %s270
      %p274 = scmp.eq.s32.totalorder %s28, 0
      %p275 = por %p273, %p274
      %p276 = scmp.ne.s32.totalorder %s268, %s270
      %p277 = scmp.eq.s32.totalorder %s33, 3
      %p278 = por %p276, %p277
      %p279 = scmp.ne.s32.totalorder %s270, %s271
      %p280 = scmp.eq.s32.totalorder %s33, 0
      %p281 = por %p279, %p280
      %p282 = scmp.ne.s32.totalorder %s270, %s271
      %p283 = scmp.eq.s32.totalorder %s34, 3
      %p284 = por %p282, %p283
      %p286 = scmp.ne.s32.totalorder %s271, %s285
      %p287 = scmp.eq.s32.totalorder %s34, 0
      %p288 = por %p286, %p287
      %s290 = sadd.s32 %s289, 1
      %p293 = scmp.eq.s32.totalorder %s28, 3
      %p294 = scmp.ne.s32.totalorder %s289, %s291
      %p295 = scmp.eq.s32.totalorder %s28, 0
      %p296 = por %p294, %p295
      %p297 = scmp.ne.s32.totalorder %s289, %s291
      %p298 = scmp.eq.s32.totalorder %s33, 3
      %p299 = por %p297, %p298
      %p300 = scmp.ne.s32.totalorder %s291, %s292
      %p301 = scmp.eq.s32.totalorder %s33, 0
      %p302 = por %p300, %p301
      %p303 = scmp.ne.s32.totalorder %s291, %s292
      %p304 = scmp.eq.s32.totalorder %s34, 3
      %p305 = por %p303, %p304
      %p307 = scmp.ne.s32.totalorder %s292, %s306
      %p308 = scmp.eq.s32.totalorder %s34, 0
      %p309 = por %p307, %p308
      %s311 = sadd.s32 %s310, 1
      %p314 = scmp.eq.s32.totalorder %s28, 3
      %p315 = scmp.ne.s32.totalorder %s310, %s312
      %p316 = scmp.eq.s32.totalorder %s28, 0
      %p317 = por %p315, %p316
      %p318 = scmp.ne.s32.totalorder %s310, %s312
      %p319 = scmp.eq.s32.totalorder %s33, 3
      %p320 = por %p318, %p319
      %p321 = scmp.ne.s32.totalorder %s312, %s313
      %p322 = scmp.eq.s32.totalorder %s33, 0
      %p323 = por %p321, %p322
      %p324 = scmp.ne.s32.totalorder %s312, %s313
      %p325 = scmp.eq.s32.totalorder %s34, 3
      %p326 = por %p324, %p325
      %p328 = scmp.ne.s32.totalorder %s313, %s327
      %p329 = scmp.eq.s32.totalorder %s34, 0
      %p330 = por %p328, %p329
      %s332 = sadd.s32 %s331, 1
      %p335 = scmp.eq.s32.totalorder %s28, 3
      %p336 = scmp.ne.s32.totalorder %s331, %s333
      %p337 = scmp.eq.s32.totalorder %s28, 0
      %p338 = por %p336, %p337
      %p339 = scmp.ne.s32.totalorder %s331, %s333
      %p340 = scmp.eq.s32.totalorder %s33, 3
      %p341 = por %p339, %p340
      %p342 = scmp.ne.s32.totalorder %s333, %s334
      %p343 = scmp.eq.s32.totalorder %s33, 0
      %p344 = por %p342, %p343
      %p345 = scmp.ne.s32.totalorder %s333, %s334
      %p346 = scmp.eq.s32.totalorder %s34, 3
      %p347 = por %p345, %p346
      %p349 = scmp.ne.s32.totalorder %s334, %s348
      %p350 = scmp.eq.s32.totalorder %s34, 0
      %p351 = por %p349, %p350
      %s353 = sadd.s32 %s352, 1
      %p356 = scmp.eq.s32.totalorder %s28, 3
      %p357 = scmp.ne.s32.totalorder %s352, %s354
      %p358 = scmp.eq.s32.totalorder %s28, 0
      %p359 = por %p357, %p358
      %p360 = scmp.ne.s32.totalorder %s352, %s354
      %p361 = scmp.eq.s32.totalorder %s33, 3
      %p362 = por %p360, %p361
      %p363 = scmp.ne.s32.totalorder %s354, %s355
      %p364 = scmp.eq.s32.totalorder %s33, 0
      %p365 = por %p363, %p364
      %p366 = scmp.ne.s32.totalorder %s354, %s355
      %p367 = scmp.eq.s32.totalorder %s34, 3
      %p368 = por %p366, %p367
      %p370 = scmp.ne.s32.totalorder %s355, %s369
      %p371 = scmp.eq.s32.totalorder %s34, 0
      %p372 = por %p370, %p371
      %s374 = sadd.s32 %s373, 1
      %p377 = scmp.eq.s32.totalorder %s28, 3
      %p378 = scmp.ne.s32.totalorder %s373, %s375
      %p379 = scmp.eq.s32.totalorder %s28, 0
      %p380 = por %p378, %p379
      %p381 = scmp.ne.s32.totalorder %s373, %s375
      %p382 = scmp.eq.s32.totalorder %s33, 3
      %p383 = por %p381, %p382
      %p384 = scmp.ne.s32.totalorder %s375, %s376
      %p385 = scmp.eq.s32.totalorder %s33, 0
      %p386 = por %p384, %p385
      %p387 = scmp.ne.s32.totalorder %s375, %s376
      %p388 = scmp.eq.s32.totalorder %s34, 3
      %p389 = por %p387, %p388
      %p391 = scmp.ne.s32.totalorder %s376, %s390
      %p392 = scmp.eq.s32.totalorder %s34, 0
      %p393 = por %p391, %p392
      %s394 = ssub.s32 %s35, %s47
      %p395 = scmp.eq.s32.totalorder %s394, 0
      %s397 = sadd.s32 %s396, 1
      %s398 = scalar_select %p395, %s396, %s397
      %p401 = pneg %p395
      %p402 = scmp.eq.s32.totalorder %s28, 3
      %p403 = por %p401, %p402
      %p404 = scmp.ne.s32.totalorder %s396, %s399
      %p405 = scmp.eq.s32.totalorder %s28, 0
      %p406 = por %p404, %p405
      %p407 = scmp.ne.s32.totalorder %s396, %s399
      %p408 = scmp.eq.s32.totalorder %s33, 3
      %p409 = por %p407, %p408
      %p410 = scmp.ne.s32.totalorder %s399, %s400
      %p411 = scmp.eq.s32.totalorder %s33, 0
      %p412 = por %p410, %p411
      %p413 = scmp.ne.s32.totalorder %s399, %s400
      %p414 = scmp.eq.s32.totalorder %s34, 3
      %p415 = por %p413, %p414
      %p417 = scmp.ne.s32.totalorder %s400, %s416
      %p418 = scmp.eq.s32.totalorder %s34, 0
      %p419 = por %p417, %p418
      %p420 = scmp.le.s32.totalorder 1, %s28
      %p421 = scmp.lt.s32.totalorder %s28, 5
      %p422 = pnand %p420, %p421
      %p423 = pneg %p422
      // Predicated region
      $region9: #{tpu_custom_call.1} parent=5 // pred_check
        _
      $region10: #{tpu_custom_call.1} parent=5 // pred_check_branch
        %425 = sbr.rel (%p422) target = $region12
      $region11: #{tpu_custom_call.1} parent=5 // pred_region
        %s426 = ssub.s32 %s28, 1
        // Predicated region
        $region13: #{tpu_custom_call.1} parent=11 // pred_check
          %p427 = pneg %p66
        $region14: #{tpu_custom_call.1} parent=11 // pred_check_branch
          %429 = sbr.rel (%p427) target = $region16
        $region15: #{tpu_custom_call.1} parent=11 // pred_region
          %s430 = smul.u32 2, %s37
          %s432 = ssub.s32 256, 256
          %433 = vsyncadd [#allocation7], %s432
          %s434 = smul.addr %s430, 128
          %s435 = scalar_lea.hbm %s0, %s434
          %s436 = sshll.u32 [#allocation6], 4
          %s437 = int_to_ptr.vmem [resolvable:$true] %s436
          %442 = dma.hbm_to_vmem [thread:$0]  %s435, 256, %s437, [#allocation7], 128, 128, 8
        $region16: #{tpu_custom_call.1} parent=11 // pred_fallthru
          _
        // Predicated region
        $region17: #{tpu_custom_call.1} parent=11 // pred_check
          %p443 = pneg %p113
        $region18: #{tpu_custom_call.1} parent=11 // pred_check_branch
          %445 = sbr.rel (%p443) target = $region20
        $region19: #{tpu_custom_call.1} parent=11 // pred_region
          _
        $region20: #{tpu_custom_call.1} parent=11 // pred_fallthru
          _
        // Predicated region
        $region21: #{tpu_custom_call.1} parent=11 // pred_check
          %p446 = pneg %p134
        $region22: #{tpu_custom_call.1} parent=11 // pred_check_branch
          %448 = sbr.rel (%p446) target = $region24
        $region23: #{tpu_custom_call.1} parent=11 // pred_region
          _
        $region24: #{tpu_custom_call.1} parent=11 // pred_fallthru
          _
        // Predicated region
        $region25: #{tpu_custom_call.1} parent=11 // pred_check
          %p449 = pneg %p155
        $region26: #{tpu_custom_call.1} parent=11 // pred_check_branch
          %451 = sbr.rel (%p449) target = $region28
        $region27: #{tpu_custom_call.1} parent=11 // pred_region
          %s453 = ssub.s32 256, 256
          %454 = vsyncadd [#allocation10], %s453
          %s455 = sshll.u32 [#allocation11], 4
          %s456 = int_to_ptr.vmem [resolvable:$true] %s455
          %461 = dma.hbm_to_vmem [thread:$0]  %s4, 256, %s456, [#allocation10], 64, 64, 4
        $region28: #{tpu_custom_call.1} parent=11 // pred_fallthru
          _
        // Predicated region
        $region29: #{tpu_custom_call.1} parent=11 // pred_check
          %p462 = pneg %p176
        $region30: #{tpu_custom_call.1} parent=11 // pred_check_branch
          %464 = sbr.rel (%p462) target = $region32
        $region31: #{tpu_custom_call.1} parent=11 // pred_region
          _
        $region32: #{tpu_custom_call.1} parent=11 // pred_fallthru
          _
        // Predicated region
        $region33: #{tpu_custom_call.1} parent=11 // pred_check
          %p465 = pneg %p197
        $region34: #{tpu_custom_call.1} parent=11 // pred_check_branch
          %467 = sbr.rel (%p465) target = $region36
        $region35: #{tpu_custom_call.1} parent=11 // pred_region
          _
        $region36: #{tpu_custom_call.1} parent=11 // pred_fallthru
          _
        // Predicated region
        $region37: #{tpu_custom_call.1} parent=11 // pred_check
          %p468 = pneg %p218
        $region38: #{tpu_custom_call.1} parent=11 // pred_check_branch
          %470 = sbr.rel (%p468) target = $region40
        $region39: #{tpu_custom_call.1} parent=11 // pred_region
          _
        $region40: #{tpu_custom_call.1} parent=11 // pred_fallthru
          _
        // Predicated region
        $region41: #{tpu_custom_call.1} parent=11 // pred_check
          %p471 = pneg %p239
        $region42: #{tpu_custom_call.1} parent=11 // pred_check_branch
          %473 = sbr.rel (%p471) target = $region44
        $region43: #{tpu_custom_call.1} parent=11 // pred_region
          _
        $region44: #{tpu_custom_call.1} parent=11 // pred_fallthru
          _
        // Predicated region
        $region45: #{tpu_custom_call.1} parent=11 // pred_check
          %p474 = pneg %p260
        $region46: #{tpu_custom_call.1} parent=11 // pred_check_branch
          %476 = sbr.rel (%p474) target = $region48
        $region47: #{tpu_custom_call.1} parent=11 // pred_region
          _
        $region48: #{tpu_custom_call.1} parent=11 // pred_fallthru
          _
        // Predicated region
        $region49: #{tpu_custom_call.1} parent=11 // pred_check
          %p477 = pneg %p281
        $region50: #{tpu_custom_call.1} parent=11 // pred_check_branch
          %479 = sbr.rel (%p477) target = $region52
        $region51: #{tpu_custom_call.1} parent=11 // pred_region
          %s481 = ssub.s32 1024, 1024
          %482 = vsyncadd [#allocation13], %s481
          %s483 = sshll.u32 [#allocation12], 4
          %s484 = int_to_ptr.vmem [resolvable:$true] %s483
          %489 = dma.hbm_to_vmem [thread:$0]  %s10, 1024, %s484, [#allocation13], 64, 64, 4
        $region52: #{tpu_custom_call.1} parent=11 // pred_fallthru
          _
        // Predicated region
        $region53: #{tpu_custom_call.1} parent=11 // pred_check
          %p490 = pneg %p302
        $region54: #{tpu_custom_call.1} parent=11 // pred_check_branch
          %492 = sbr.rel (%p490) target = $region56
        $region55: #{tpu_custom_call.1} parent=11 // pred_region
          _
        $region56: #{tpu_custom_call.1} parent=11 // pred_fallthru
          _
        // Predicated region
        $region57: #{tpu_custom_call.1} parent=11 // pred_check
          %p493 = pneg %p323
        $region58: #{tpu_custom_call.1} parent=11 // pred_check_branch
          %495 = sbr.rel (%p493) target = $region60
        $region59: #{tpu_custom_call.1} parent=11 // pred_region
          _
        $region60: #{tpu_custom_call.1} parent=11 // pred_fallthru
          _
        // Predicated region
        $region61: #{tpu_custom_call.1} parent=11 // pred_check
          %p496 = pneg %p344
        $region62: #{tpu_custom_call.1} parent=11 // pred_check_branch
          %498 = sbr.rel (%p496) target = $region64
        $region63: #{tpu_custom_call.1} parent=11 // pred_region
          _
        $region64: #{tpu_custom_call.1} parent=11 // pred_fallthru
          _
        // Predicated region
        $region65: #{tpu_custom_call.1} parent=11 // pred_check
          %p499 = pneg %p365
        $region66: #{tpu_custom_call.1} parent=11 // pred_check_branch
          %501 = sbr.rel (%p499) target = $region68
        $region67: #{tpu_custom_call.1} parent=11 // pred_region
          _
        $region68: #{tpu_custom_call.1} parent=11 // pred_fallthru
          _
        // Predicated region
        $region69: #{tpu_custom_call.1} parent=11 // pred_check
          %p502 = pneg %p386
        $region70: #{tpu_custom_call.1} parent=11 // pred_check_branch
          %504 = sbr.rel (%p502) target = $region72
        $region71: #{tpu_custom_call.1} parent=11 // pred_region
          _
        $region72: #{tpu_custom_call.1} parent=11 // pred_fallthru
          _
      $region12: #{tpu_custom_call.1} parent=5 // pred_fallthru
        _
      %p505 = scmp.lt.s32.totalorder %s28, 4
      // Predicated region
      $region73: #{tpu_custom_call.1} parent=5 // pred_check
        %p506 = pneg %p505
      $region74: #{tpu_custom_call.1} parent=5 // pred_check_branch
        %508 = sbr.rel (%p506) target = $region76
      $region75: #{tpu_custom_call.1} parent=5 // pred_region
        // Predicated region
        $region77: #{tpu_custom_call.1} parent=75 // pred_check
          %p509 = pneg %p86
        $region78: #{tpu_custom_call.1} parent=75 // pred_check_branch
          %511 = sbr.rel (%p509) target = $region80
        $region79: #{tpu_custom_call.1} parent=75 // pred_region
          %s512 = sand.u32 %s28, 1
          %s513 = scalar_lea.sflag [#allocation10], %s512
          %s514 = sand.u32 %s76, 1
          %s515 = smul.addr %s514, 4
          %s516 = scalar_lea.vmem [#allocation9], %s515
          %s518 = ssub.s32 64, 64
          %519 = vsyncadd %s513, %s518
          %s520 = smul.addr %s36, 64
          %s521 = scalar_lea.hbm %s1, %s520
          %s523 = sshll.u32 %s516, 4
          %s524 = int_to_ptr.vmem [resolvable:$true] %s523
          %526 = dma.hbm_to_vmem [thread:$0]  %s521, 64, %s524, %s513
        $region80: #{tpu_custom_call.1} parent=75 // pred_fallthru
          _
      $region76: #{tpu_custom_call.1} parent=5 // pred_fallthru
        _
      %p527 = scmp.le.s32.totalorder 1, %s28
      %p528 = scmp.lt.s32.totalorder %s28, 5
      %p529 = pnand %p527, %p528
      %p530 = pneg %p529
      // Predicated region
      $region81: #{tpu_custom_call.1} parent=5 // pred_check
        _
      $region82: #{tpu_custom_call.1} parent=5 // pred_check_branch
        %532 = sbr.rel (%p529) target = $region84
      $region83: #{tpu_custom_call.1} parent=5 // pred_region
        %s533 = ssub.s32 %s28, 1
        // Predicated region
        $region85: #{tpu_custom_call.1} parent=83 // pred_check
          %p534 = pneg %p66
        $region86: #{tpu_custom_call.1} parent=83 // pred_check_branch
          %536 = sbr.rel (%p534) target = $region88
        $region87: #{tpu_custom_call.1} parent=83 // pred_region
          %537 = dma.done [#allocation7], 256
        $region88: #{tpu_custom_call.1} parent=83 // pred_fallthru
          _
        %s538 = sand.u32 %s33, 1
        %s539 = scalar_lea.sflag [#allocation10], %s538
        %s540 = sand.u32 %s79, 1
        %s541 = smul.addr %s540, 4
        %s542 = scalar_lea.vmem [#allocation9], %s541
        // Predicated region
        $region89: #{tpu_custom_call.1} parent=83 // pred_check
          %p543 = pneg %p92
        $region90: #{tpu_custom_call.1} parent=83 // pred_check_branch
          %545 = sbr.rel (%p543) target = $region92
        $region91: #{tpu_custom_call.1} parent=83 // pred_region
          %546 = dma.done %s539, 64
        $region92: #{tpu_custom_call.1} parent=83 // pred_fallthru
          _
        // Predicated region
        $region93: #{tpu_custom_call.1} parent=83 // pred_check
          %p547 = pneg %p155
        $region94: #{tpu_custom_call.1} parent=83 // pred_check_branch
          %549 = sbr.rel (%p547) target = $region96
        $region95: #{tpu_custom_call.1} parent=83 // pred_region
          %550 = dma.done [#allocation10], 256
        $region96: #{tpu_custom_call.1} parent=83 // pred_fallthru
          _
        // Predicated region
        $region97: #{tpu_custom_call.1} parent=83 // pred_check
          %p551 = pneg %p281
        $region98: #{tpu_custom_call.1} parent=83 // pred_check_branch
          %553 = sbr.rel (%p551) target = $region100
        $region99: #{tpu_custom_call.1} parent=83 // pred_region
          %554 = dma.done [#allocation13], 1024
        $region100: #{tpu_custom_call.1} parent=83 // pred_fallthru
          _
        %p555 = pneg %p66
        %p556 = pneg %p63
        %s557 = sand.u32 %s33, 1
        %s558 = scalar_lea.sflag [#allocation10], %s557
        %s559 = sand.u32 %s79, 1
        %s560 = smul.addr %s559, 4
        %s561 = scalar_lea.vmem [#allocation9], %s560
        %p562 = pneg %p92
        %p563 = pneg %p89
        %p564 = pneg %p113
        %p565 = pneg %p110
        %p566 = pneg %p134
        %p567 = pneg %p131
        %p568 = pneg %p155
        %p569 = pneg %p152
        %p570 = pneg %p176
        %p571 = pneg %p173
        %p572 = pneg %p197
        %p573 = pneg %p194
        %p574 = pneg %p218
        %p575 = pneg %p215
        %p576 = pneg %p239
        %p577 = pneg %p236
        %p578 = pneg %p260
        %p579 = pneg %p257
        %p580 = pneg %p281
        %p581 = pneg %p278
        %p582 = pneg %p302
        %p583 = pneg %p299
        %p584 = pneg %p323
        %p585 = pneg %p320
        %p586 = pneg %p344
        %p587 = pneg %p341
        %p588 = pneg %p365
        %p589 = pneg %p362
        %p590 = pneg %p386
        %p591 = pneg %p383
        %p592 = pneg %p412
        %p593 = pneg %p409
        %s594 = smul.u32 2, %s37
        %s595 = smul.u32 2, %s37
        %p597 = scmp.eq.s32.totalorder %s38, 0
        // Predicated region
        $region101: #{tpu_custom_call.1} parent=83 // pred_check
          %p598 = pneg %p597
        $region102: #{tpu_custom_call.1} parent=83 // pred_check_branch
          %600 = sbr.rel (%p598) target = $region104
        $region103: #{tpu_custom_call.1} parent=83 // pred_region
          %v601 = vld [vmem:[#allocation6] sm:$0xff]
          %v602 = vld [vmem:[#allocation6 + $0x8] sm:$0xff]
          %v603 = vpack.c.bf16 %v602, %v601
          %v604 = vld [vmem:[%s2] sm:$0xf]
          %v605 = vld [vmem:[%s2 + $0x4] sm:$0xf]
          %v606 = vld [vmem:[%s2 + $0x8] sm:$0xf]
          %v607 = vld [vmem:[%s2 + $0xc] sm:$0xf]
          %v608 = vld [vmem:[%s2 + $0x10] sm:$0xf]
          %v609 = vld [vmem:[%s2 + $0x14] sm:$0xf]
          %v610 = vld [vmem:[%s2 + $0x18] sm:$0xf]
          %v611 = vld [vmem:[%s2 + $0x1c] sm:$0xf]
          %v612 = vld [vmem:[%s2 + $0x20] sm:$0xf]
          %v613 = vld [vmem:[%s2 + $0x24] sm:$0xf]
          %v614 = vld [vmem:[%s2 + $0x28] sm:$0xf]
          %v615 = vld [vmem:[%s2 + $0x2c] sm:$0xf]
          %v616 = vld [vmem:[%s2 + $0x30] sm:$0xf]
          %v617 = vld [vmem:[%s2 + $0x34] sm:$0xf]
          %v618 = vld [vmem:[%s2 + $0x38] sm:$0xf]
          %v619 = vld [vmem:[%s2 + $0x3c] sm:$0xf]
          %v620 = vld [vmem:[%s3] sm:$0x1]
          %v622 = vlaneseq
          %v623 = vshrl.u32 %v622, 7
          %v624 = vsub.s32 0, %v623
          %v625 = vrot.slane %v620, %v624
          %v643 = vunpack.c.l.b16 %v604
          %v644 = vunpack.c.l.b16 %v605
          %v645 = vunpack.c.l.b16 %v606
          %v646 = vunpack.c.l.b16 %v607
          %v647 = vunpack.c.l.b16 %v608
          %v648 = vunpack.c.l.b16 %v609
          %v649 = vunpack.c.l.b16 %v610
          %v650 = vunpack.c.l.b16 %v611
          %v651 = vunpack.c.l.b16 %v612
          %v652 = vunpack.c.l.b16 %v613
          %v653 = vunpack.c.l.b16 %v614
          %v654 = vunpack.c.l.b16 %v615
          %v655 = vunpack.c.l.b16 %v616
          %v656 = vunpack.c.l.b16 %v617
          %v657 = vunpack.c.l.b16 %v618
          %v658 = vunpack.c.l.b16 %v619
          %v659 = vpack.c.b16 %v644, %v643
          %v660 = vpack.c.b16 %v646, %v645
          %v661 = vpack.c.b16 %v648, %v647
          %v662 = vpack.c.b16 %v650, %v649
          %v663 = vpack.c.b16 %v652, %v651
          %v664 = vpack.c.b16 %v654, %v653
          %v665 = vpack.c.b16 %v656, %v655
          %v666 = vpack.c.b16 %v658, %v657
          %675 = vmatprep.subr.bf16.mxu0 0
          %676 = vmatpush1.bf16.msra.mxu0 %v659
          %677 = vmatprep.subr.bf16.mxu0 0
          %678 = vmatpush1.bf16.msra.mxu0 %v660
          %679 = vmatprep.subr.bf16.mxu0 0
          %680 = vmatpush1.bf16.msra.mxu0 %v661
          %681 = vmatprep.subr.bf16.mxu0 0
          %682 = vmatpush1.bf16.msra.mxu0 %v662
          %683 = vmatprep.subr.bf16.mxu0 0
          %684 = vmatpush1.bf16.msra.mxu0 %v663
          %685 = vmatprep.subr.bf16.mxu0 0
          %686 = vmatpush1.bf16.msra.mxu0 %v664
          %687 = vmatprep.subr.bf16.mxu0 0
          %688 = vmatpush1.bf16.msra.mxu0 %v665
          %689 = vmatprep.subr.bf16.mxu0 0
          %690 = vmatpush1.bf16.msra.mxu0 %v666
          %691 = vmatprep.subr.bf16.mxu0 0
          %692 = vmatpush1.bf16.msra.mxu0 0
          %693 = vmatprep.subr.bf16.mxu0 0
          %694 = vmatpush1.bf16.msra.mxu0 0
          %695 = vmatprep.subr.bf16.mxu0 0
          %696 = vmatpush1.bf16.msra.mxu0 0
          %697 = vmatprep.subr.bf16.mxu0 0
          %698 = vmatpush1.bf16.msra.mxu0 0
          %699 = vmatprep.subr.bf16.mxu0 0
          %700 = vmatpush1.bf16.msra.mxu0 0
          %701 = vmatprep.subr.bf16.mxu0 0
          %702 = vmatpush1.bf16.msra.mxu0 0
          %703 = vmatprep.subr.bf16.mxu0 0
          %704 = vmatpush1.bf16.msra.mxu0 0
          %705 = vmatprep.subr.bf16.mxu0 0
          %706 = vmatpush1.bf16.msra.mxu0 0
          %707 = vmatprep.mubr.bf16.mxu0 0
          %708 = vmatmul.mubr.bf16.gmra.mrb[0].mxu0 %v603
          %v709 = vpop.f32.mrb[0].mxu0
          %v710 = vadd.f32 %v625, %v709
          %v711 = vpop.f32.mrb[0].mxu0
          %v712 = vpop.f32.mrb[0].mxu0
          %v713 = vadd.f32 %v625, %v712
          %v714 = vpop.f32.mrb[0].mxu0
          %715 = vdwg.mxu0
          %v716 = vpack.c.bf16 %v713, %v710
          %vm717 = vcmask 64512
          %718 = vst.msk [vmem:[#allocation2] sm:$0xff] %vm717, %v716
          %720 = vrot.lane.b32.xlu0 %v716, 96
          %v721 = vpop.permute.xlu0 %720
          %723 = vst.msk [vmem:[#allocation3] sm:$0xff] %vm717, %v721
          %724 = vrot.lane.b32.xlu0 %v716, 64
          %v725 = vpop.permute.xlu0 %724
          %727 = vst.msk [vmem:[#allocation4] sm:$0xff] %vm717, %v725
          %728 = vrot.lane.b32.xlu0 %v716, 120
          %v729 = vpop.permute.xlu0 %728
          %s731 = scalar_lea.vmem [#allocation2], 8
          %732 = vst.msk [vmem:[%s731] sm:$0xff] %vm717, %v729
          %733 = vrot.lane.b32.xlu0 %v716, 88
          %v734 = vpop.permute.xlu0 %733
          %s736 = scalar_lea.vmem [#allocation3], 8
          %737 = vst.msk [vmem:[%s736] sm:$0xff] %vm717, %v734
          %738 = vrot.lane.b32.xlu0 %v716, 56
          %v739 = vpop.permute.xlu0 %738
          %s741 = scalar_lea.vmem [#allocation4], 8
          %742 = vst.msk [vmem:[%s741] sm:$0xff] %vm717, %v739
          %743 = vrot.lane.b32.xlu0 %v716, 112
          %v744 = vpop.permute.xlu0 %743
          %s746 = scalar_lea.vmem [#allocation2], 16
          %747 = vst.msk [vmem:[%s746] sm:$0xff] %vm717, %v744
          %748 = vrot.lane.b32.xlu0 %v716, 80
          %v749 = vpop.permute.xlu0 %748
          %s751 = scalar_lea.vmem [#allocation3], 16
          %752 = vst.msk [vmem:[%s751] sm:$0xff] %vm717, %v749
          %753 = vrot.lane.b32.xlu0 %v716, 48
          %v754 = vpop.permute.xlu0 %753
          %s756 = scalar_lea.vmem [#allocation4], 16
          %757 = vst.msk [vmem:[%s756] sm:$0xff] %vm717, %v754
          %758 = vrot.lane.b32.xlu0 %v716, 104
          %v759 = vpop.permute.xlu0 %758
          %s761 = scalar_lea.vmem [#allocation2], 24
          %762 = vst.msk [vmem:[%s761] sm:$0xff] %vm717, %v759
          %763 = vrot.lane.b32.xlu0 %v716, 72
          %v764 = vpop.permute.xlu0 %763
          %s766 = scalar_lea.vmem [#allocation3], 24
          %767 = vst.msk [vmem:[%s766] sm:$0xff] %vm717, %v764
          %768 = vrot.lane.b32.xlu0 %v716, 40
          %v769 = vpop.permute.xlu0 %768
          %s771 = scalar_lea.vmem [#allocation4], 24
          %772 = vst.msk [vmem:[%s771] sm:$0xff] %vm717, %v769
        $region104: #{tpu_custom_call.1} parent=83 // pred_fallthru
          _
        %s773 = smul.addr %s38, 8
        %s774 = scalar_lea.vmem [#allocation2], %s773
        %v775 = vld [vmem:[%s774] sm:$0xff]
        %v777 = vunpack.c.l.b16 %v775
        %v778 = vunpack.c.h.b16 %v775
        %v779 = vpack.c.b16 %v777, %v777
        %v780 = vpack.c.b16 %v778, %v778
        %s781 = smul.addr %s38, 8
        %s782 = scalar_lea.vmem [#allocation3], %s781
        %v783 = vld [vmem:[%s782] sm:$0xff]
        %v785 = vunpack.c.l.b16 %v783
        %v786 = vunpack.c.h.b16 %v783
        %v787 = vpack.c.b16 %v785, %v785
        %v788 = vpack.c.b16 %v786, %v786
        %s789 = smul.addr %s38, 8
        %s790 = scalar_lea.vmem [#allocation4], %s789
        %v791 = vld [vmem:[%s790] sm:$0xff]
        %v793 = vunpack.c.l.b16 %v791
        %v794 = vunpack.c.h.b16 %v791
        %v795 = vpack.c.b16 %v793, %v793
        %v796 = vpack.c.b16 %v794, %v794
        %v797 = vld [vmem:[%s542] sm:$0xf]
        %v798 = vunpack.c.l.bf16 %v797
        %vm799 = vcmask 64512
        %v801 = vsel %vm799, %v779, 0
        %v804 = vsel %vm799, %v787, 0
        %806 = vmatprep.subr.bf16.mxu0 0
        %807 = vmatpush1.bf16.xpose.msra.mxu0 %v804
        %808 = vmatprep.subr.bf16.mxu0 0
        %809 = vmatpush1.bf16.xpose.msra.mxu0 0
        %810 = vmatprep.subr.bf16.mxu0 0
        %811 = vmatpush1.bf16.xpose.msra.mxu0 0
        %812 = vmatprep.subr.bf16.mxu0 0
        %813 = vmatpush1.bf16.xpose.msra.mxu0 0
        %814 = vmatprep.subr.bf16.mxu0 0
        %815 = vmatpush1.bf16.xpose.msra.mxu0 0
        %816 = vmatprep.subr.bf16.mxu0 0
        %817 = vmatpush1.bf16.xpose.msra.mxu0 0
        %818 = vmatprep.subr.bf16.mxu0 0
        %819 = vmatpush1.bf16.xpose.msra.mxu0 0
        %820 = vmatprep.subr.bf16.mxu0 0
        %821 = vmatpush1.bf16.xpose.msra.mxu0 0
        %822 = vmatprep.subr.bf16.mxu0 0
        %823 = vmatpush1.bf16.xpose.msra.mxu0 0
        %824 = vmatprep.subr.bf16.mxu0 0
        %825 = vmatpush1.bf16.xpose.msra.mxu0 0
        %826 = vmatprep.subr.bf16.mxu0 0
        %827 = vmatpush1.bf16.xpose.msra.mxu0 0
        %828 = vmatprep.subr.bf16.mxu0 0
        %829 = vmatpush1.bf16.xpose.msra.mxu0 0
        %830 = vmatprep.subr.bf16.mxu0 0
        %831 = vmatpush1.bf16.xpose.msra.mxu0 0
        %832 = vmatprep.subr.bf16.mxu0 0
        %833 = vmatpush1.bf16.xpose.msra.mxu0 0
        %834 = vmatprep.subr.bf16.mxu0 0
        %835 = vmatpush1.bf16.xpose.msra.mxu0 0
        %836 = vmatprep.subr.bf16.mxu0 0
        %837 = vmatpush1.bf16.xpose.msra.mxu0 0
        %838 = vmatprep.mubr.bf16.mxu0 0
        %839 = vmatmul.mubr.bf16.gmra.mrb[0].mxu0 %v801
        %v840 = vpop.f32.mrb[0].mxu0
        %v841 = vadd.f32 %v798, %v840
        %v842 = vpop.f32.mrb[0].mxu0
        %v843 = vpop.f32.mrb[0].mxu0
        %v844 = vpop.f32.mrb[0].mxu0
        %845 = vdwg.mxu0
        %v847 = vsel %vm799, %v780, 0
        %v850 = vsel %vm799, %v788, 0
        %852 = vmatprep.subr.bf16.mxu0 0
        %853 = vmatpush1.bf16.xpose.msra.mxu0 %v850
        %854 = vmatprep.subr.bf16.mxu0 0
        %855 = vmatpush1.bf16.xpose.msra.mxu0 0
        %856 = vmatprep.subr.bf16.mxu0 0
        %857 = vmatpush1.bf16.xpose.msra.mxu0 0
        %858 = vmatprep.subr.bf16.mxu0 0
        %859 = vmatpush1.bf16.xpose.msra.mxu0 0
        %860 = vmatprep.subr.bf16.mxu0 0
        %861 = vmatpush1.bf16.xpose.msra.mxu0 0
        %862 = vmatprep.subr.bf16.mxu0 0
        %863 = vmatpush1.bf16.xpose.msra.mxu0 0
        %864 = vmatprep.subr.bf16.mxu0 0
        %865 = vmatpush1.bf16.xpose.msra.mxu0 0
        %866 = vmatprep.subr.bf16.mxu0 0
        %867 = vmatpush1.bf16.xpose.msra.mxu0 0
        %868 = vmatprep.subr.bf16.mxu0 0
        %869 = vmatpush1.bf16.xpose.msra.mxu0 0
        %870 = vmatprep.subr.bf16.mxu0 0
        %871 = vmatpush1.bf16.xpose.msra.mxu0 0
        %872 = vmatprep.subr.bf16.mxu0 0
        %873 = vmatpush1.bf16.xpose.msra.mxu0 0
        %874 = vmatprep.subr.bf16.mxu0 0
        %875 = vmatpush1.bf16.xpose.msra.mxu0 0
        %876 = vmatprep.subr.bf16.mxu0 0
        %877 = vmatpush1.bf16.xpose.msra.mxu0 0
        %878 = vmatprep.subr.bf16.mxu0 0
        %879 = vmatpush1.bf16.xpose.msra.mxu0 0
        %880 = vmatprep.subr.bf16.mxu0 0
        %881 = vmatpush1.bf16.xpose.msra.mxu0 0
        %882 = vmatprep.subr.bf16.mxu0 0
        %883 = vmatpush1.bf16.xpose.msra.mxu0 0
        %884 = vmatprep.mubr.bf16.mxu0 0
        %885 = vmatmul.mubr.bf16.gmra.mrb[0].mxu0 %v847
        %v886 = vpop.f32.mrb[0].mxu0
        %v887 = vadd.f32 %v798, %v886
        %v888 = vpop.f32.mrb[0].mxu0
        %v889 = vpop.f32.mrb[0].mxu0
        %v890 = vpop.f32.mrb[0].mxu0
        %891 = vdwg.mxu0
        %v892 = vsel %vm799, %v841, -inf
        %893 = vmax.xlane.f32.xlu0 %v892
        %v894 = vpop.xlane.xlu0 %893
        %v895 = vsel %vm799, %v887, -inf
        %896 = vmax.xlane.f32.xlu0 %v895
        %v897 = vpop.xlane.xlu0 %896
        %v898 = vsub.f32 %v841, %v894
        %v899 = vsub.f32 %v887, %v897
        %v900 = vmul.f32 %v898, 1.442695
        %v901 = vpow.pop %v900
        %v902 = vmul.f32 %v899, 1.442695
        %v903 = vpow.pop %v902
        %v904 = vsel %vm799, %v901, 0.0
        %905 = vadd.xlane.f32.xlu0 %v904
        %v906 = vpop.xlane.xlu0 %905
        %v907 = vsel %vm799, %v903, 0.0
        %908 = vadd.xlane.f32.xlu0 %v907
        %v909 = vpop.xlane.xlu0 %908
        %v910 = vrcp.pop %v906
        %v911 = vrcp.pop %v909
        %v912 = vmul.f32 %v901, %v910
        %v913 = vmul.f32 %v903, %v911
        %v914 = vpack.c.bf16 %v912, %v912
        %v915 = vpack.c.bf16 %v913, %v913
        %v917 = vsel %vm799, %v914, 0
        %vm919 = vcmask 1043456
        %v921 = vsel %vm919, %v795, 0
        %923 = vmatprep.subr.bf16.mxu0 0
        %924 = vmatpush1.bf16.msra.mxu0 %v921
        %925 = vmatprep.subr.bf16.mxu0 0
        %926 = vmatpush1.bf16.msra.mxu0 0
        %927 = vmatprep.subr.bf16.mxu0 0
        %928 = vmatpush1.bf16.msra.mxu0 0
        %929 = vmatprep.subr.bf16.mxu0 0
        %930 = vmatpush1.bf16.msra.mxu0 0
        %931 = vmatprep.subr.bf16.mxu0 0
        %932 = vmatpush1.bf16.msra.mxu0 0
        %933 = vmatprep.subr.bf16.mxu0 0
        %934 = vmatpush1.bf16.msra.mxu0 0
        %935 = vmatprep.subr.bf16.mxu0 0
        %936 = vmatpush1.bf16.msra.mxu0 0
        %937 = vmatprep.subr.bf16.mxu0 0
        %938 = vmatpush1.bf16.msra.mxu0 0
        %939 = vmatprep.subr.bf16.mxu0 0
        %940 = vmatpush1.bf16.msra.mxu0 0
        %941 = vmatprep.subr.bf16.mxu0 0
        %942 = vmatpush1.bf16.msra.mxu0 0
        %943 = vmatprep.subr.bf16.mxu0 0
        %944 = vmatpush1.bf16.msra.mxu0 0
        %945 = vmatprep.subr.bf16.mxu0 0
        %946 = vmatpush1.bf16.msra.mxu0 0
        %947 = vmatprep.subr.bf16.mxu0 0
        %948 = vmatpush1.bf16.msra.mxu0 0
        %949 = vmatprep.subr.bf16.mxu0 0
        %950 = vmatpush1.bf16.msra.mxu0 0
        %951 = vmatprep.subr.bf16.mxu0 0
        %952 = vmatpush1.bf16.msra.mxu0 0
        %953 = vmatprep.subr.bf16.mxu0 0
        %954 = vmatpush1.bf16.msra.mxu0 0
        %955 = vmatprep.mubr.bf16.mxu0 0
        %956 = vmatmul.mubr.bf16.gmra.mrb[0].mxu0 %v917
        %v957 = vpop.f32.mrb[0].mxu0
        %v958 = vadd.f32 0.0, %v957
        %v959 = vpop.f32.mrb[0].mxu0
        %v960 = vpop.f32.mrb[0].mxu0
        %v961 = vpop.f32.mrb[0].mxu0
        %962 = vdwg.mxu0
        %v964 = vsel %vm799, %v915, 0
        %v967 = vsel %vm919, %v796, 0
        %969 = vmatprep.subr.bf16.mxu0 0
        %970 = vmatpush1.bf16.msra.mxu0 %v967
        %971 = vmatprep.subr.bf16.mxu0 0
        %972 = vmatpush1.bf16.msra.mxu0 0
        %973 = vmatprep.subr.bf16.mxu0 0
        %974 = vmatpush1.bf16.msra.mxu0 0
        %975 = vmatprep.subr.bf16.mxu0 0
        %976 = vmatpush1.bf16.msra.mxu0 0
        %977 = vmatprep.subr.bf16.mxu0 0
        %978 = vmatpush1.bf16.msra.mxu0 0
        %979 = vmatprep.subr.bf16.mxu0 0
        %980 = vmatpush1.bf16.msra.mxu0 0
        %981 = vmatprep.subr.bf16.mxu0 0
        %982 = vmatpush1.bf16.msra.mxu0 0
        %983 = vmatprep.subr.bf16.mxu0 0
        %984 = vmatpush1.bf16.msra.mxu0 0
        %985 = vmatprep.subr.bf16.mxu0 0
        %986 = vmatpush1.bf16.msra.mxu0 0
        %987 = vmatprep.subr.bf16.mxu0 0
        %988 = vmatpush1.bf16.msra.mxu0 0
        %989 = vmatprep.subr.bf16.mxu0 0
        %990 = vmatpush1.bf16.msra.mxu0 0
        %991 = vmatprep.subr.bf16.mxu0 0
        %992 = vmatpush1.bf16.msra.mxu0 0
        %993 = vmatprep.subr.bf16.mxu0 0
        %994 = vmatpush1.bf16.msra.mxu0 0
        %995 = vmatprep.subr.bf16.mxu0 0
        %996 = vmatpush1.bf16.msra.mxu0 0
        %997 = vmatprep.subr.bf16.mxu0 0
        %998 = vmatpush1.bf16.msra.mxu0 0
        %999 = vmatprep.subr.bf16.mxu0 0
        %1000 = vmatpush1.bf16.msra.mxu0 0
        %1001 = vmatprep.mubr.bf16.mxu0 0
        %1002 = vmatmul.mubr.bf16.gmra.mrb[0].mxu0 %v964
        %v1003 = vpop.f32.mrb[0].mxu0
        %v1004 = vadd.f32 0.0, %v1003
        %v1005 = vpop.f32.mrb[0].mxu0
        %v1006 = vpop.f32.mrb[0].mxu0
        %v1007 = vpop.f32.mrb[0].mxu0
        %1008 = vdwg.mxu0
        %v1009 = vpack.c.bf16 %v1004, %v958
        %s1010 = smul.addr %s38, 8
        %s1011 = scalar_lea.vmem [#allocation5], %s1010
        %1012 = vst.msk [vmem:[%s1011] sm:$0xff] %vm799, %v1009
        %p1013 = scmp.eq.s32.totalorder %s38, 3
        // Predicated region
        $region105: #{tpu_custom_call.1} parent=83 // pred_check
          %p1014 = pneg %p1013
        $region106: #{tpu_custom_call.1} parent=83 // pred_check_branch
          %1016 = sbr.rel (%p1014) target = $region108
        $region107: #{tpu_custom_call.1} parent=83 // pred_region
          %v1017 = vld [vmem:[#allocation5] sm:$0xff]
          %s1018 = scalar_lea.vmem [#allocation5], 8
          %v1019 = vld [vmem:[%s1018] sm:$0xff]
          %s1020 = scalar_lea.vmem [#allocation5], 16
          %v1021 = vld [vmem:[%s1020] sm:$0xff]
          %s1022 = scalar_lea.vmem [#allocation5], 24
          %v1023 = vld [vmem:[%s1022] sm:$0xff]
          %1025 = vrot.lane.b32.xlu0 %v1019, 8
          %v1026 = vpop.permute.xlu0 %1025
          %1028 = vrot.lane.b32.xlu0 %v1021, 16
          %v1029 = vpop.permute.xlu0 %1028
          %1031 = vrot.lane.b32.xlu0 %v1023, 24
          %v1032 = vpop.permute.xlu0 %1031
          %v1035 = vsel %vm799, %v1017, %v1026
          %vm1036 = vcmask 130048
          %v1038 = vsel %vm1036, %v1035, %v1029
          %vm1039 = vcmask 195584
          %v1041 = vsel %vm1039, %v1038, %v1032
          %v1042 = vld [vmem:[#allocation11] sm:$0xf]
          %v1043 = vld [vmem:[#allocation11 + $0x4] sm:$0xf]
          %v1044 = vld [vmem:[#allocation11 + $0x8] sm:$0xf]
          %v1045 = vld [vmem:[#allocation11 + $0xc] sm:$0xf]
          %v1046 = vld [vmem:[%s5] sm:$0x1]
          %v1048 = vlaneseq
          %v1049 = vshrl.u32 %v1048, 7
          %v1050 = vsub.s32 0, %v1049
          %v1051 = vrot.slane %v1046, %v1050
          %v1057 = vunpack.c.l.b16 %v1042
          %v1058 = vunpack.c.l.b16 %v1043
          %v1059 = vunpack.c.l.b16 %v1044
          %v1060 = vunpack.c.l.b16 %v1045
          %v1061 = vpack.c.b16 %v1058, %v1057
          %v1062 = vpack.c.b16 %v1060, %v1059
          %vm1065 = vcmask 261120
          %v1066 = vsel %vm1065, %v1041, 0
          %1068 = vmatprep.subr.bf16.mxu0 0
          %1069 = vmatpush1.bf16.msra.mxu0 %v1061
          %1070 = vmatprep.subr.bf16.mxu0 0
          %1071 = vmatpush1.bf16.msra.mxu0 %v1062
          %1072 = vmatprep.subr.bf16.mxu0 0
          %1073 = vmatpush1.bf16.msra.mxu0 0
          %1074 = vmatprep.subr.bf16.mxu0 0
          %1075 = vmatpush1.bf16.msra.mxu0 0
          %1076 = vmatprep.subr.bf16.mxu0 0
          %1077 = vmatpush1.bf16.msra.mxu0 0
          %1078 = vmatprep.subr.bf16.mxu0 0
          %1079 = vmatpush1.bf16.msra.mxu0 0
          %1080 = vmatprep.subr.bf16.mxu0 0
          %1081 = vmatpush1.bf16.msra.mxu0 0
          %1082 = vmatprep.subr.bf16.mxu0 0
          %1083 = vmatpush1.bf16.msra.mxu0 0
          %1084 = vmatprep.subr.bf16.mxu0 0
          %1085 = vmatpush1.bf16.msra.mxu0 0
          %1086 = vmatprep.subr.bf16.mxu0 0
          %1087 = vmatpush1.bf16.msra.mxu0 0
          %1088 = vmatprep.subr.bf16.mxu0 0
          %1089 = vmatpush1.bf16.msra.mxu0 0
          %1090 = vmatprep.subr.bf16.mxu0 0
          %1091 = vmatpush1.bf16.msra.mxu0 0
          %1092 = vmatprep.subr.bf16.mxu0 0
          %1093 = vmatpush1.bf16.msra.mxu0 0
          %1094 = vmatprep.subr.bf16.mxu0 0
          %1095 = vmatpush1.bf16.msra.mxu0 0
          %1096 = vmatprep.subr.bf16.mxu0 0
          %1097 = vmatpush1.bf16.msra.mxu0 0
          %1098 = vmatprep.subr.bf16.mxu0 0
          %1099 = vmatpush1.bf16.msra.mxu0 0
          %1100 = vmatprep.mubr.bf16.mxu0 0
          %1101 = vmatmul.mubr.bf16.gmra.mrb[0].mxu0 %v1066
          %v1102 = vpop.f32.mrb[0].mxu0
          %v1103 = vadd.f32 %v1051, %v1102
          %v1104 = vpop.f32.mrb[0].mxu0
          %v1105 = vpop.f32.mrb[0].mxu0
          %v1106 = vadd.f32 %v1051, %v1105
          %v1107 = vpop.f32.mrb[0].mxu0
          %1108 = vdwg.mxu0
          %v1109 = vld [vmem:[#allocation6] sm:$0xff]
          %v1110 = vld [vmem:[#allocation6 + $0x8] sm:$0xff]
          %v1111 = vlaneseq
          %v1112 = vand.u32 %v1111, 127
          %vm1113 = vcmp.lt.s32.totalorder %v1112, 32
          %v1114 = vadd.f32 %v1109, %v1103
          %v1115 = vadd.f32 %v1110, %v1106
          %v1116 = vld [vmem:[%s12] sm:$0x1]
          %v1117 = vld [vmem:[%s13] sm:$0x1]
          %1118 = vadd.xlane.f32.xlu0 %v1114
          %v1119 = vpop.xlane.xlu0 %1118
          %1120 = vadd.xlane.f32.xlu0 %v1115
          %v1121 = vpop.xlane.xlu0 %1120
          %v1122 = vmul.f32 %v1119, 0.03125
          %v1123 = vmul.f32 %v1121, 0.03125
          %v1124 = vsub.f32 %v1114, %v1122
          %v1125 = vsub.f32 %v1115, %v1123
          %v1126 = vsel %vm1113, %v1124, 0.0
          %v1127 = vsel %vm1113, %v1125, 0.0
          %v1128 = vmul.f32 %v1126, %v1126
          %v1129 = vmul.f32 %v1127, %v1127
          %1130 = vadd.xlane.f32.xlu0 %v1128
          %v1131 = vpop.xlane.xlu0 %1130
          %1132 = vadd.xlane.f32.xlu0 %v1129
          %v1133 = vpop.xlane.xlu0 %1132
          %v1134 = vmul.f32 %v1131, 0.03125
          %v1135 = vmul.f32 %v1133, 0.03125
          %v1136 = vadd.f32 %v1134, 1e-05
          %v1137 = vadd.f32 %v1135, 1e-05
          %v1138 = vrsqrt.pop %v1136
          %v1139 = vrsqrt.pop %v1137
          %v1140 = vmul.f32 %v1126, %v1138
          %v1141 = vmul.f32 %v1127, %v1139
          %v1143 = vlaneseq
          %v1144 = vshrl.u32 %v1143, 7
          %v1145 = vsub.s32 0, %v1144
          %v1146 = vrot.slane %v1116, %v1145
          %v1148 = vmul.f32 %v1140, %v1146
          %v1149 = vmul.f32 %v1141, %v1146
          %v1151 = vlaneseq
          %v1152 = vshrl.u32 %v1151, 7
          %v1153 = vsub.s32 0, %v1152
          %v1154 = vrot.slane %v1117, %v1153
          %v1156 = vadd.f32 %v1148, %v1154
          %v1157 = vadd.f32 %v1149, %v1154
          %v1158 = vpack.c.bf16 %v1157, %v1156
          %v1159 = vld [vmem:[%s6] sm:$0xf]
          %v1160 = vld [vmem:[%s6 + $0x4] sm:$0xf]
          %v1161 = vld [vmem:[%s6 + $0x8] sm:$0xf]
          %v1162 = vld [vmem:[%s6 + $0xc] sm:$0xf]
          %v1163 = vld [vmem:[%s6 + $0x10] sm:$0xf]
          %v1164 = vld [vmem:[%s6 + $0x14] sm:$0xf]
          %v1165 = vld [vmem:[%s6 + $0x18] sm:$0xf]
          %v1166 = vld [vmem:[%s6 + $0x1c] sm:$0xf]
          %v1167 = vld [vmem:[%s6 + $0x20] sm:$0xf]
          %v1168 = vld [vmem:[%s6 + $0x24] sm:$0xf]
          %v1169 = vld [vmem:[%s6 + $0x28] sm:$0xf]
          %v1170 = vld [vmem:[%s6 + $0x2c] sm:$0xf]
          %v1171 = vld [vmem:[%s6 + $0x30] sm:$0xf]
          %v1172 = vld [vmem:[%s6 + $0x34] sm:$0xf]
          %v1173 = vld [vmem:[%s6 + $0x38] sm:$0xf]
          %v1174 = vld [vmem:[%s6 + $0x3c] sm:$0xf]
          %v1175 = vld [vmem:[%s7] sm:$0x1]
          %v1177 = vlaneseq
          %v1178 = vshrl.u32 %v1177, 7
          %v1179 = vsub.s32 0, %v1178
          %v1180 = vrot.slane %v1175, %v1179
          %v1198 = vunpack.c.l.b16 %v1159
          %v1199 = vunpack.c.l.b16 %v1160
          %v1200 = vunpack.c.l.b16 %v1161
          %v1201 = vunpack.c.l.b16 %v1162
          %v1202 = vunpack.c.l.b16 %v1163
          %v1203 = vunpack.c.l.b16 %v1164
          %v1204 = vunpack.c.l.b16 %v1165
          %v1205 = vunpack.c.l.b16 %v1166
          %v1206 = vunpack.c.l.b16 %v1167
          %v1207 = vunpack.c.l.b16 %v1168
          %v1208 = vunpack.c.l.b16 %v1169
          %v1209 = vunpack.c.l.b16 %v1170
          %v1210 = vunpack.c.l.b16 %v1171
          %v1211 = vunpack.c.l.b16 %v1172
          %v1212 = vunpack.c.l.b16 %v1173
          %v1213 = vunpack.c.l.b16 %v1174
          %v1214 = vpack.c.b16 %v1199, %v1198
          %v1215 = vpack.c.b16 %v1201, %v1200
          %v1216 = vpack.c.b16 %v1203, %v1202
          %v1217 = vpack.c.b16 %v1205, %v1204
          %v1218 = vpack.c.b16 %v1207, %v1206
          %v1219 = vpack.c.b16 %v1209, %v1208
          %v1220 = vpack.c.b16 %v1211, %v1210
          %v1221 = vpack.c.b16 %v1213, %v1212
          %1230 = vmatprep.subr.bf16.mxu0 0
          %1231 = vmatpush1.bf16.msra.mxu0 %v1214
          %1232 = vmatprep.subr.bf16.mxu0 0
          %1233 = vmatpush1.bf16.msra.mxu0 %v1215
          %1234 = vmatprep.subr.bf16.mxu0 0
          %1235 = vmatpush1.bf16.msra.mxu0 %v1216
          %1236 = vmatprep.subr.bf16.mxu0 0
          %1237 = vmatpush1.bf16.msra.mxu0 %v1217
          %1238 = vmatprep.subr.bf16.mxu0 0
          %1239 = vmatpush1.bf16.msra.mxu0 %v1218
          %1240 = vmatprep.subr.bf16.mxu0 0
          %1241 = vmatpush1.bf16.msra.mxu0 %v1219
          %1242 = vmatprep.subr.bf16.mxu0 0
          %1243 = vmatpush1.bf16.msra.mxu0 %v1220
          %1244 = vmatprep.subr.bf16.mxu0 0
          %1245 = vmatpush1.bf16.msra.mxu0 %v1221
          %1246 = vmatprep.subr.bf16.mxu0 0
          %1247 = vmatpush1.bf16.msra.mxu0 0
          %1248 = vmatprep.subr.bf16.mxu0 0
          %1249 = vmatpush1.bf16.msra.mxu0 0
          %1250 = vmatprep.subr.bf16.mxu0 0
          %1251 = vmatpush1.bf16.msra.mxu0 0
          %1252 = vmatprep.subr.bf16.mxu0 0
          %1253 = vmatpush1.bf16.msra.mxu0 0
          %1254 = vmatprep.subr.bf16.mxu0 0
          %1255 = vmatpush1.bf16.msra.mxu0 0
          %1256 = vmatprep.subr.bf16.mxu0 0
          %1257 = vmatpush1.bf16.msra.mxu0 0
          %1258 = vmatprep.subr.bf16.mxu0 0
          %1259 = vmatpush1.bf16.msra.mxu0 0
          %1260 = vmatprep.subr.bf16.mxu0 0
          %1261 = vmatpush1.bf16.msra.mxu0 0
          %1262 = vmatprep.mubr.bf16.mxu0 0
          %1263 = vmatmul.mubr.bf16.gmra.mrb[0].mxu0 %v1158
          %v1264 = vpop.f32.mrb[0].mxu0
          %v1265 = vadd.f32 %v1180, %v1264
          %v1266 = vpop.f32.mrb[0].mxu0
          %v1267 = vpop.f32.mrb[0].mxu0
          %v1268 = vadd.f32 %v1180, %v1267
          %v1269 = vpop.f32.mrb[0].mxu0
          %1270 = vdwg.mxu0
          %v1271 = vxor.u32 %v1265, 2147483648
          %v1272 = vxor.u32 %v1268, 2147483648
          %v1273 = vmul.f32 %v1271, 1.442695
          %v1274 = vpow.pop %v1273
          %v1275 = vmul.f32 %v1272, 1.442695
          %v1276 = vpow.pop %v1275
          %v1277 = vadd.f32 %v1274, 1.0
          %v1278 = vadd.f32 %v1276, 1.0
          %v1279 = vrcp.pop %v1277
          %v1280 = vmul.f32 1.0, %v1279
          %v1281 = vrcp.pop %v1278
          %v1282 = vmul.f32 1.0, %v1281
          %v1283 = vmul.f32 %v1156, %v1280
          %v1284 = vmul.f32 %v1157, %v1282
          %v1285 = vpack.c.bf16 %v1284, %v1283
          %v1286 = vld [vmem:[%s8] sm:$0xf]
          %v1287 = vld [vmem:[%s8 + $0x4] sm:$0xf]
          %v1288 = vld [vmem:[%s8 + $0x8] sm:$0xf]
          %v1289 = vld [vmem:[%s8 + $0xc] sm:$0xf]
          %v1290 = vld [vmem:[%s8 + $0x10] sm:$0xf]
          %v1291 = vld [vmem:[%s8 + $0x14] sm:$0xf]
          %v1292 = vld [vmem:[%s8 + $0x18] sm:$0xf]
          %v1293 = vld [vmem:[%s8 + $0x1c] sm:$0xf]
          %v1294 = vld [vmem:[%s8 + $0x20] sm:$0xf]
          %v1295 = vld [vmem:[%s8 + $0x24] sm:$0xf]
          %v1296 = vld [vmem:[%s8 + $0x28] sm:$0xf]
          %v1297 = vld [vmem:[%s8 + $0x2c] sm:$0xf]
          %v1298 = vld [vmem:[%s8 + $0x30] sm:$0xf]
          %v1299 = vld [vmem:[%s8 + $0x34] sm:$0xf]
          %v1300 = vld [vmem:[%s8 + $0x38] sm:$0xf]
          %v1301 = vld [vmem:[%s8 + $0x3c] sm:$0xf]
          %v1302 = vld [vmem:[%s9] sm:$0x1]
          %v1304 = vlaneseq
          %v1305 = vshrl.u32 %v1304, 7
          %v1306 = vsub.s32 0, %v1305
          %v1307 = vrot.slane %v1302, %v1306
          %v1325 = vunpack.c.l.b16 %v1286
          %v1326 = vunpack.c.l.b16 %v1287
          %v1327 = vunpack.c.l.b16 %v1288
          %v1328 = vunpack.c.l.b16 %v1289
          %v1329 = vunpack.c.l.b16 %v1290
          %v1330 = vunpack.c.l.b16 %v1291
          %v1331 = vunpack.c.l.b16 %v1292
          %v1332 = vunpack.c.l.b16 %v1293
          %v1333 = vunpack.c.l.b16 %v1294
          %v1334 = vunpack.c.l.b16 %v1295
          %v1335 = vunpack.c.l.b16 %v1296
          %v1336 = vunpack.c.l.b16 %v1297
          %v1337 = vunpack.c.l.b16 %v1298
          %v1338 = vunpack.c.l.b16 %v1299
          %v1339 = vunpack.c.l.b16 %v1300
          %v1340 = vunpack.c.l.b16 %v1301
          %v1341 = vpack.c.b16 %v1326, %v1325
          %v1342 = vpack.c.b16 %v1328, %v1327
          %v1343 = vpack.c.b16 %v1330, %v1329
          %v1344 = vpack.c.b16 %v1332, %v1331
          %v1345 = vpack.c.b16 %v1334, %v1333
          %v1346 = vpack.c.b16 %v1336, %v1335
          %v1347 = vpack.c.b16 %v1338, %v1337
          %v1348 = vpack.c.b16 %v1340, %v1339
          %1357 = vmatprep.subr.bf16.mxu0 0
          %1358 = vmatpush1.bf16.msra.mxu0 %v1341
          %1359 = vmatprep.subr.bf16.mxu0 0
          %1360 = vmatpush1.bf16.msra.mxu0 %v1342
          %1361 = vmatprep.subr.bf16.mxu0 0
          %1362 = vmatpush1.bf16.msra.mxu0 %v1343
          %1363 = vmatprep.subr.bf16.mxu0 0
          %1364 = vmatpush1.bf16.msra.mxu0 %v1344
          %1365 = vmatprep.subr.bf16.mxu0 0
          %1366 = vmatpush1.bf16.msra.mxu0 %v1345
          %1367 = vmatprep.subr.bf16.mxu0 0
          %1368 = vmatpush1.bf16.msra.mxu0 %v1346
          %1369 = vmatprep.subr.bf16.mxu0 0
          %1370 = vmatpush1.bf16.msra.mxu0 %v1347
          %1371 = vmatprep.subr.bf16.mxu0 0
          %1372 = vmatpush1.bf16.msra.mxu0 %v1348
          %1373 = vmatprep.subr.bf16.mxu0 0
          %1374 = vmatpush1.bf16.msra.mxu0 0
          %1375 = vmatprep.subr.bf16.mxu0 0
          %1376 = vmatpush1.bf16.msra.mxu0 0
          %1377 = vmatprep.subr.bf16.mxu0 0
          %1378 = vmatpush1.bf16.msra.mxu0 0
          %1379 = vmatprep.subr.bf16.mxu0 0
          %1380 = vmatpush1.bf16.msra.mxu0 0
          %1381 = vmatprep.subr.bf16.mxu0 0
          %1382 = vmatpush1.bf16.msra.mxu0 0
          %1383 = vmatprep.subr.bf16.mxu0 0
          %1384 = vmatpush1.bf16.msra.mxu0 0
          %1385 = vmatprep.subr.bf16.mxu0 0
          %1386 = vmatpush1.bf16.msra.mxu0 0
          %1387 = vmatprep.subr.bf16.mxu0 0
          %1388 = vmatpush1.bf16.msra.mxu0 0
          %1389 = vmatprep.mubr.bf16.mxu0 0
          %1390 = vmatmul.mubr.bf16.gmra.mrb[0].mxu0 %v1285
          %v1391 = vpop.f32.mrb[0].mxu0
          %v1392 = vadd.f32 %v1307, %v1391
          %v1393 = vpop.f32.mrb[0].mxu0
          %v1394 = vpop.f32.mrb[0].mxu0
          %v1395 = vadd.f32 %v1307, %v1394
          %v1396 = vpop.f32.mrb[0].mxu0
          %1397 = vdwg.mxu0
          %v1398 = vmax.f32 %v1392, 0.0
          %v1399 = vmax.f32 %v1395, 0.0
          %v1400 = vpack.c.bf16 %v1399, %v1398
          %v1401 = vld [vmem:[#allocation12] sm:$0xf]
          %v1402 = vld [vmem:[#allocation12 + $0x4] sm:$0xf]
          %v1403 = vld [vmem:[#allocation12 + $0x8] sm:$0xf]
          %v1404 = vld [vmem:[#allocation12 + $0xc] sm:$0xf]
          %v1405 = vld [vmem:[#allocation12 + $0x10] sm:$0xf]
          %v1406 = vld [vmem:[#allocation12 + $0x14] sm:$0xf]
          %v1407 = vld [vmem:[#allocation12 + $0x18] sm:$0xf]
          %v1408 = vld [vmem:[#allocation12 + $0x1c] sm:$0xf]
          %v1409 = vld [vmem:[#allocation12 + $0x20] sm:$0xf]
          %v1410 = vld [vmem:[#allocation12 + $0x24] sm:$0xf]
          %v1411 = vld [vmem:[#allocation12 + $0x28] sm:$0xf]
          %v1412 = vld [vmem:[#allocation12 + $0x2c] sm:$0xf]
          %v1413 = vld [vmem:[#allocation12 + $0x30] sm:$0xf]
          %v1414 = vld [vmem:[#allocation12 + $0x34] sm:$0xf]
          %v1415 = vld [vmem:[#allocation12 + $0x38] sm:$0xf]
          %v1416 = vld [vmem:[#allocation12 + $0x3c] sm:$0xf]
          %v1417 = vld [vmem:[%s11] sm:$0x1]
          %v1419 = vlaneseq
          %v1420 = vshrl.u32 %v1419, 7
          %v1421 = vsub.s32 0, %v1420
          %v1422 = vrot.slane %v1417, %v1421
          %v1440 = vunpack.c.l.b16 %v1401
          %v1441 = vunpack.c.l.b16 %v1402
          %v1442 = vunpack.c.l.b16 %v1403
          %v1443 = vunpack.c.l.b16 %v1404
          %v1444 = vunpack.c.l.b16 %v1405
          %v1445 = vunpack.c.l.b16 %v1406
          %v1446 = vunpack.c.l.b16 %v1407
          %v1447 = vunpack.c.l.b16 %v1408
          %v1448 = vunpack.c.l.b16 %v1409
          %v1449 = vunpack.c.l.b16 %v1410
          %v1450 = vunpack.c.l.b16 %v1411
          %v1451 = vunpack.c.l.b16 %v1412
          %v1452 = vunpack.c.l.b16 %v1413
          %v1453 = vunpack.c.l.b16 %v1414
          %v1454 = vunpack.c.l.b16 %v1415
          %v1455 = vunpack.c.l.b16 %v1416
          %v1456 = vpack.c.b16 %v1441, %v1440
          %v1457 = vpack.c.b16 %v1443, %v1442
          %v1458 = vpack.c.b16 %v1445, %v1444
          %v1459 = vpack.c.b16 %v1447, %v1446
          %v1460 = vpack.c.b16 %v1449, %v1448
          %v1461 = vpack.c.b16 %v1451, %v1450
          %v1462 = vpack.c.b16 %v1453, %v1452
          %v1463 = vpack.c.b16 %v1455, %v1454
          %1472 = vmatprep.subr.bf16.mxu0 0
          %1473 = vmatpush1.bf16.msra.mxu0 %v1456
          %1474 = vmatprep.subr.bf16.mxu0 0
          %1475 = vmatpush1.bf16.msra.mxu0 %v1457
          %1476 = vmatprep.subr.bf16.mxu0 0
          %1477 = vmatpush1.bf16.msra.mxu0 %v1458
          %1478 = vmatprep.subr.bf16.mxu0 0
          %1479 = vmatpush1.bf16.msra.mxu0 %v1459
          %1480 = vmatprep.subr.bf16.mxu0 0
          %1481 = vmatpush1.bf16.msra.mxu0 %v1460
          %1482 = vmatprep.subr.bf16.mxu0 0
          %1483 = vmatpush1.bf16.msra.mxu0 %v1461
          %1484 = vmatprep.subr.bf16.mxu0 0
          %1485 = vmatpush1.bf16.msra.mxu0 %v1462
          %1486 = vmatprep.subr.bf16.mxu0 0
          %1487 = vmatpush1.bf16.msra.mxu0 %v1463
          %1488 = vmatprep.subr.bf16.mxu0 0
          %1489 = vmatpush1.bf16.msra.mxu0 0
          %1490 = vmatprep.subr.bf16.mxu0 0
          %1491 = vmatpush1.bf16.msra.mxu0 0
          %1492 = vmatprep.subr.bf16.mxu0 0
          %1493 = vmatpush1.bf16.msra.mxu0 0
          %1494 = vmatprep.subr.bf16.mxu0 0
          %1495 = vmatpush1.bf16.msra.mxu0 0
          %1496 = vmatprep.subr.bf16.mxu0 0
          %1497 = vmatpush1.bf16.msra.mxu0 0
          %1498 = vmatprep.subr.bf16.mxu0 0
          %1499 = vmatpush1.bf16.msra.mxu0 0
          %1500 = vmatprep.subr.bf16.mxu0 0
          %1501 = vmatpush1.bf16.msra.mxu0 0
          %1502 = vmatprep.subr.bf16.mxu0 0
          %1503 = vmatpush1.bf16.msra.mxu0 0
          %1504 = vmatprep.mubr.bf16.mxu0 0
          %1505 = vmatmul.mubr.bf16.gmra.mrb[0].mxu0 %v1400
          %v1506 = vpop.f32.mrb[0].mxu0
          %v1507 = vadd.f32 %v1422, %v1506
          %v1508 = vpop.f32.mrb[0].mxu0
          %v1509 = vpop.f32.mrb[0].mxu0
          %v1510 = vadd.f32 %v1422, %v1509
          %v1511 = vpop.f32.mrb[0].mxu0
          %1512 = vdwg.mxu0
          %v1513 = vadd.f32 %v1283, %v1507
          %v1514 = vadd.f32 %v1284, %v1510
          %v1515 = vld [vmem:[%s14] sm:$0x1]
          %v1516 = vld [vmem:[%s15] sm:$0x1]
          %1517 = vadd.xlane.f32.xlu0 %v1513
          %v1518 = vpop.xlane.xlu0 %1517
          %1519 = vadd.xlane.f32.xlu0 %v1514
          %v1520 = vpop.xlane.xlu0 %1519
          %v1521 = vmul.f32 %v1518, 0.03125
          %v1522 = vmul.f32 %v1520, 0.03125
          %v1523 = vsub.f32 %v1513, %v1521
          %v1524 = vsub.f32 %v1514, %v1522
          %v1525 = vsel %vm1113, %v1523, 0.0
          %v1526 = vsel %vm1113, %v1524, 0.0
          %v1527 = vmul.f32 %v1525, %v1525
          %v1528 = vmul.f32 %v1526, %v1526
          %1529 = vadd.xlane.f32.xlu0 %v1527
          %v1530 = vpop.xlane.xlu0 %1529
          %1531 = vadd.xlane.f32.xlu0 %v1528
          %v1532 = vpop.xlane.xlu0 %1531
          %v1533 = vmul.f32 %v1530, 0.03125
          %v1534 = vmul.f32 %v1532, 0.03125
          %v1535 = vadd.f32 %v1533, 1e-05
          %v1536 = vadd.f32 %v1534, 1e-05
          %v1537 = vrsqrt.pop %v1535
          %v1538 = vrsqrt.pop %v1536
          %v1539 = vmul.f32 %v1525, %v1537
          %v1540 = vmul.f32 %v1526, %v1538
          %v1542 = vlaneseq
          %v1543 = vshrl.u32 %v1542, 7
          %v1544 = vsub.s32 0, %v1543
          %v1545 = vrot.slane %v1515, %v1544
          %v1547 = vmul.f32 %v1539, %v1545
          %v1548 = vmul.f32 %v1540, %v1545
          %v1550 = vlaneseq
          %v1551 = vshrl.u32 %v1550, 7
          %v1552 = vsub.s32 0, %v1551
          %v1553 = vrot.slane %v1516, %v1552
          %v1555 = vadd.f32 %v1547, %v1553
          %v1556 = vadd.f32 %v1548, %v1553
          %1557 = vst [vmem:[#allocation14] sm:$0xff] %v1555
          %1558 = vst [vmem:[#allocation14 + $0x8] sm:$0xff] %v1556
        $region108: #{tpu_custom_call.1} parent=83 // pred_fallthru
          _
        // Predicated region
        $region109: #{tpu_custom_call.1} parent=83 // pred_check
          %p1559 = pneg %p409
        $region110: #{tpu_custom_call.1} parent=83 // pred_check_branch
          %1561 = sbr.rel (%p1559) target = $region112
        $region111: #{tpu_custom_call.1} parent=83 // pred_region
          %s1562 = smul.u32 2, %s37
          %s1564 = ssub.s32 256, 256
          %1565 = vsyncadd [#allocation8], %s1564
          %s1566 = smul.addr %s1562, 128
          %s1567 = scalar_lea.hbm %s16, %s1566
          %s1568 = sshll.u32 [#allocation14], 4
          %s1569 = int_to_ptr.vmem [resolvable:$true] %s1568
          %1574 = dma.vmem_to_hbm [thread:$0]  %s1569, 256, %s1567, [#allocation8], 128, 128, 8
        $region112: #{tpu_custom_call.1} parent=83 // pred_fallthru
          _
        // Predicated region
        $region113: #{tpu_custom_call.1} parent=83 // pred_check
          %p1575 = pneg %p409
        $region114: #{tpu_custom_call.1} parent=83 // pred_check_branch
          %1577 = sbr.rel (%p1575) target = $region116
        $region115: #{tpu_custom_call.1} parent=83 // pred_region
          %1578 = dma.done [#allocation8], 256
        $region116: #{tpu_custom_call.1} parent=83 // pred_fallthru
          _
      $region84: #{tpu_custom_call.1} parent=5 // pred_fallthru
        _
      %p1579 = scmp.le.s32.totalorder 2, %s28
      // Predicated region
      $region117: #{tpu_custom_call.1} parent=5 // pred_check
        %p1580 = pneg %p1579
      $region118: #{tpu_custom_call.1} parent=5 // pred_check_branch
        %1582 = sbr.rel (%p1580) target = $region120
      $region119: #{tpu_custom_call.1} parent=5 // pred_region
        %s1583 = ssub.s32 %s28, 2
      $region120: #{tpu_custom_call.1} parent=5 // pred_fallthru
        _
    $region6: #{tpu_custom_call.1} parent=1 // loop_footer
      %s32 = sadd.s32 1, %s28
    $region7: #{tpu_custom_call.1} parent=1 // loop_footer_branch
      %27 = sbr.rel target = $region3
    $region8: #{tpu_custom_call.1} parent=1 // loop_exit
      _
    %1584 = vsyncpa [#allocation7], 1
    %s1585 = scalar_lea.sflag [#allocation7], 1
    %1586 = vsyncpa %s1585, 1
    %1587 = vsyncpa [#allocation10], 1
    %s1588 = scalar_lea.sflag [#allocation10], 1
    %1589 = vsyncpa %s1588, 1
    %1590 = vsyncpa [#allocation13], 1
    %1591 = vsyncpa [#allocation8], 1
    %s1592 = scalar_lea.sflag [#allocation8], 1
    %1593 = vsyncpa %s1592, 1

</llo_original>
